<compile_context>
chip_gen: v7x
topology: tpu7x:2x2x1
jax: 0.10.0
libtpu: 0.0.40
codegen_flags: <defaults>
</compile_context>

<pallas_src>
import functools
import math

import jax
import jax.numpy as jnp
from jax.experimental import pallas as pl
from jax.experimental.pallas import tpu as pltpu

NEG_INF = -1e30  # additive mask; exp() underflows to exactly 0.0 in f32


def _round_up(x, m):
    return ((x + m - 1) // m) * m


# --------------------------- in-kernel helpers -------------------------------

def _layernorm(x, w):
    """LayerNorm(bias=False) over last axis, f32 statistics."""
    mu = jnp.mean(x, axis=-1, keepdims=True)
    var = jnp.mean(jnp.square(x - mu), axis=-1, keepdims=True)
    return (x - mu) * jax.lax.rsqrt(var + 1e-5) * w


def _mm(x, w):
    """y = x @ w.T (PyTorch nn.Linear layout, w = (out, in)).
    bf16 MXU operands, f32 accumulation."""
    return jax.lax.dot_general(
        x.astype(jnp.bfloat16), w.astype(jnp.bfloat16),
        dimension_numbers=(((1,), (1,)), ((), ())),
        preferred_element_type=jnp.float32)


# --------------------- fused decoder stack (all layers) ----------------------

def fused_decoder_stack(x, features, input_lengths, cos_t, sin_t, p,
                        heads, head_dim, mlp_chunk=256):
    """All transformer Blocks in one pallas_call, grid=(batch, layer).
    x: (N, T, C) f32, features: (N, S, C) bf16, input_lengths: (N,) int32."""
    N, T, C = x.shape
    S = features.shape[1]
    L = p['ln_time_w'].shape[0]
    H, D = heads, head_dim

    def kernel(lens_ref, x_ref, f_ref, cos_ref, sin_ref,
               lnt_ref, mwq_ref, mwkv_ref, mwp_ref,
               twqkv_ref, twp_ref, lnc_ref, w1_ref, w2_ref,
               o_ref, y_ref):
        n = pl.program_id(0)
        l = pl.program_id(1)

        @pl.when(l == 0)
        def _():
            y_ref[...] = x_ref[...]            # start of the residual stream

        xb = y_ref[...]                        # (T, C) f32
        xn = _layernorm(xb, lnt_ref[...])      # shared pre-LN (as in reference)
        xn_bf = xn.astype(jnp.bfloat16)        # cast once, reused by both attns
        cos = cos_ref[...]                     # (T, D) f32
        sin = sin_ref[...]                     # (T, D) f32, sign folded in

        def split_heads(x2d, rope):
            # (rows, C) -> (H, rows, D); optional rotate-half RoPE per head.
            cols = []
            for h in range(H):
                u = x2d[:, h * D:(h + 1) * D]
                if rope:
                    ur = jnp.concatenate([u[:, D // 2:], u[:, :D // 2]], axis=-1)
                    u = u * cos + ur * sin     # VPU/XLU only, no MXU
                cols.append(u)
            return jnp.stack(cols, axis=0)

        def merge_heads(x3d):
            return jnp.concatenate([x3d[h] for h in range(H)], axis=-1)

        def attend(q3, k3, v3, bias):
            # q3 (H,Tq,D), k3/v3 (H,Sk,D) f32, bias (Tq,Sk); scale pre-folded.
            s = jnp.einsum('htd,hsd->hts',
                           q3.astype(jnp.bfloat16), k3.astype(jnp.bfloat16),
                           preferred_element_type=jnp.float32) + bias
            m = jnp.max(s, axis=-1, keepdims=True)
            e = jnp.exp(s - m)                 # masked entries -> exactly 0.0
            a = e * pl.reciprocal(jnp.sum(e, axis=-1, keepdims=True),
                                  approx=True)
            o3 = jnp.einsum('hts,hsd->htd',
                            a.astype(jnp.bfloat16), v3.astype(jnp.bfloat16),
                            preferred_element_type=jnp.float32)
            return merge_heads(o3)             # (Tq, C) f32

        # ---- cross attention over encoder memory, masked by input length ----
        q_m = _mm(xn_bf, mwq_ref[...])         # (T, C), 1/sqrt(D) folded in
        kv_m = _mm(f_ref[...], mwkv_ref[...])  # (S, 2C) -> [k | v]
        length = lens_ref[n]
        mem_bias = jnp.where(
            jax.lax.broadcasted_iota(jnp.int32, (T, S), 1) < length,
            0.0, NEG_INF)
        m_out = attend(split_heads(q_m, False),
                       split_heads(kv_m[:, :C], False),
                       split_heads(kv_m[:, C:], False),
                       mem_bias)
        xb = xb + _mm(m_out.astype(jnp.bfloat16), mwp_ref[...])

        # ---- causal self-attention with rotate-half RoPE ----
        qkv = _mm(xn_bf, twqkv_ref[...])       # (T, 3C) -> [q | k | v]
        row = jax.lax.broadcasted_iota(jnp.int32, (T, T), 0)
        col = jax.lax.broadcasted_iota(jnp.int32, (T, T), 1)
        causal_bias = jnp.where(col <= row, 0.0, NEG_INF)
        t_out = attend(split_heads(qkv[:, :C], True),
                       split_heads(qkv[:, C:2 * C], True),
                       split_heads(qkv[:, 2 * C:], False),
                       causal_bias)
        xb = xb + _mm(t_out.astype(jnp.bfloat16), twp_ref[...])

        # ---- GELU MLP, row-chunked to bound the (rows, 4C) f32 hidden ----
        xc = _layernorm(xb, lnc_ref[...]).astype(jnp.bfloat16)
        step = min(mlp_chunk, T)
        chunks = []
        for r0 in range(0, T, step):
            r1 = min(T, r0 + step)
            hdn = _mm(xc[r0:r1, :], w1_ref[...])
            hdn = 0.5 * hdn * (1.0 + jax.lax.erf(hdn * (1.0 / math.sqrt(2.0))))
            chunks.append(_mm(hdn.astype(jnp.bfloat16), w2_ref[...]))
        mlp = chunks[0] if len(chunks) == 1 else jnp.concatenate(chunks, axis=0)
        xb = xb + mlp

        y_ref[...] = xb                        # residual carry for next layer

        @pl.when(l == pl.num_programs(1) - 1)
        def _():
            o_ref[...] = xb

    batch_map = lambda n, l, lens: (n, 0, 0)
    tab_map = lambda n, l, lens: (0, 0)
    layer_map = lambda n, l, lens: (l, 0, 0)

    # Explicit VMEM budget: double-buffered inputs/outputs + scratch + temps.
    weight_bytes = 2 * 16 * C * C + 2 * 4 * C
    act_in_bytes = 4 * T * C + 2 * S * C + 2 * 4 * T * D
    temps = 12 * T * C + 8 * H * T * max(S, T) + 20 * min(mlp_chunk, T) * C
    est = 2 * (weight_bytes + act_in_bytes) + 2 * 4 * T * C + 4 * T * C + temps
    vmem_limit = int(min(max(est * 1.25, 32 * 1024 * 1024), 128 * 1024 * 1024))

    return pl.pallas_call(
        kernel,
        out_shape=jax.ShapeDtypeStruct((N, T, C), jnp.float32),
        grid_spec=pltpu.PrefetchScalarGridSpec(
            num_scalar_prefetch=1,
            grid=(N, L),
            in_specs=[
                pl.BlockSpec((None, T, C), batch_map),        # x (embeddings)
                pl.BlockSpec((None, S, C), batch_map),        # features (bf16)
                pl.BlockSpec((T, D), tab_map),                # cos
                pl.BlockSpec((T, D), tab_map),                # sin (signed)
                pl.BlockSpec((None, 1, C), layer_map),        # ln_time_w
                pl.BlockSpec((None, C, C), layer_map),        # mem_wq (scaled)
                pl.BlockSpec((None, 2 * C, C), layer_map),    # mem_wkv
                pl.BlockSpec((None, C, C), layer_map),        # mem_wproj
                pl.BlockSpec((None, 3 * C, C), layer_map),    # time_wqkv
                pl.BlockSpec((None, C, C), layer_map),        # time_wproj
                pl.BlockSpec((None, 1, C), layer_map),        # ln_chan_w
                pl.BlockSpec((None, 4 * C, C), layer_map),    # mlp_w1
                pl.BlockSpec((None, C, 4 * C), layer_map),    # mlp_w2
            ],
            out_specs=pl.BlockSpec((None, T, C), batch_map),
            scratch_shapes=[pltpu.VMEM((T, C), jnp.float32)],
        ),
        compiler_params=pltpu.CompilerParams(
            dimension_semantics=("parallel", "arbitrary"),
            vmem_limit_bytes=vmem_limit),
    )(input_lengths, x, features, cos_t, sin_t,
      p['ln_time_w'], p['mem_wq'], p['mem_wkv'], p['mem_wproj'],
      p['time_wqkv'], p['time_wproj'], p['ln_chan_w'],
      p['mlp_w1'], p['mlp_w2'])


# --------- fused final LN + lm_head + cross-entropy (vocab-tiled) ------------

def lm_head_loss(x_tokens, targets, lnf_w, lm_head_w):
    """mean CE(ignore_index=0) of lm_head(ln_f(x)); tiled over token rows AND
    vocab columns with online logsumexp, SMEM accumulators, SMEM scalar out."""
    M, C = x_tokens.shape
    V = lm_head_w.shape[0]

    TM = 256 if M >= 256 else _round_up(M, 8)
    M_pad = _round_up(M, TM)
    if M_pad != M:
        x_tokens = jnp.pad(x_tokens, ((0, M_pad - M), (0, 0)))
        targets = jnp.pad(targets, ((0, M_pad - M),))        # pad id 0 == ignore
    tgt = targets.reshape(M_pad, 1).astype(jnp.int32)

    TV = 512 if V >= 512 else _round_up(V, 8)
    V_pad = _round_up(V, TV)
    if V_pad != V:
        lm_head_w = jnp.pad(lm_head_w, ((0, V_pad - V), (0, 0)))
    nm, nv = M_pad // TM, V_pad // TV

    def kernel(x_ref, lnf_ref, w_ref, t_ref, loss_ref,
               xn_ref, m_ref, s_ref, tg_ref, acc_ref):
        i = pl.program_id(0)
        vj = pl.program_id(1)

        @pl.when(jnp.logical_and(i == 0, vj == 0))
        def _():
            acc_ref[0] = jnp.float32(0.0)
            acc_ref[1] = jnp.float32(0.0)

        @pl.when(vj == 0)
        def _():
            xn_ref[...] = _layernorm(x_ref[...], lnf_ref[...]).astype(jnp.bfloat16)
            m_ref[...] = jnp.full(m_ref.shape, NEG_INF, jnp.float32)
            s_ref[...] = jnp.zeros(s_ref.shape, jnp.float32)
            tg_ref[...] = jnp.zeros(tg_ref.shape, jnp.float32)

        logits = _mm(xn_ref[...], w_ref[...])                 # (TM, TV) f32
        col = jax.lax.broadcasted_iota(jnp.int32, (TM, TV), 1) + vj * TV
        if V_pad != V:
            logits = jnp.where(col < V, logits, NEG_INF)      # mask pad vocab
        t = t_ref[...]                                        # (TM, 1) int32

        m_new = jnp.maximum(m_ref[...], jnp.max(logits, axis=-1, keepdims=True))
        s_ref[...] = (s_ref[...] * jnp.exp(m_ref[...] - m_new)
                      + jnp.sum(jnp.exp(logits - m_new), axis=-1, keepdims=True))
        m_ref[...] = m_new
        tg_ref[...] = tg_ref[...] + jnp.sum(jnp.where(col == t, logits, 0.0),
                                            axis=-1, keepdims=True)

        @pl.when(vj == pl.num_programs(1) - 1)
        def _():
            lse = jnp.log(s_ref[...]) + m_ref[...]
            valid = (t != 0).astype(jnp.float32)              # ignore_index = 0
            acc_ref[0] += jnp.sum((lse - tg_ref[...]) * valid)
            acc_ref[1] += jnp.sum(valid)

        @pl.when(jnp.logical_and(i == pl.num_programs(0) - 1,
                                 vj == pl.num_programs(1) - 1))
        def _():
            loss_ref[0] = acc_ref[0] / jnp.maximum(acc_ref[1], 1.0)

    est = (2 * (4 * TM * C + 4 * C + 2 * TV * C + 4 * TM)
           + 2 * TM * C + 8 * TM * TV + 16 * TM)
    vmem_limit = int(min(max(est * 1.5, 32 * 1024 * 1024), 128 * 1024 * 1024))

    loss = pl.pallas_call(
        kernel,
        out_shape=jax.ShapeDtypeStruct((1,), jnp.float32),
        grid=(nm, nv),
        in_specs=[
            pl.BlockSpec((TM, C), lambda i, j: (i, 0)),       # x rows
            pl.BlockSpec((1, C), lambda i, j: (0, 0)),        # ln_f weight
            pl.BlockSpec((TV, C), lambda i, j: (j, 0)),       # lm_head tile
            pl.BlockSpec((TM, 1), lambda i, j: (i, 0)),       # targets
        ],
        out_specs=pl.BlockSpec(memory_space=pltpu.MemorySpace.SMEM),
        scratch_shapes=[
            pltpu.VMEM((TM, C), jnp.bfloat16),                # ln_f(x) cache
            pltpu.VMEM((TM, 1), jnp.float32),                 # running max
            pltpu.VMEM((TM, 1), jnp.float32),                 # running sum
            pltpu.VMEM((TM, 1), jnp.float32),                 # target logit
            pltpu.SMEM((2,), jnp.float32),                    # (sum_nll, n_valid)
        ],
        compiler_params=pltpu.CompilerParams(
            dimension_semantics=("arbitrary", "arbitrary"),
            vmem_limit_bytes=vmem_limit),
    )(x_tokens, lnf_w, lm_head_w, tgt)
    return loss[0]


# ------------------------------- JAX glue ------------------------------------

def rope_tables(T, head_dim):
    """cos / sign-folded sin tables (T, D) for rotate-half RoPE (per head)."""
    t = jnp.arange(T, dtype=jnp.float32)[:, None]
    inv_freq = 10000.0 ** (-2.0 * jnp.arange(head_dim // 2, dtype=jnp.float32)
                           / head_dim)
    ang = t * inv_freq[None, :]                               # (T, D/2)
    cos = jnp.concatenate([jnp.cos(ang), jnp.cos(ang)], axis=-1)
    sin = jnp.concatenate([-jnp.sin(ang), jnp.sin(ang)], axis=-1)
    return cos, sin


def prepare_params(params, heads, head_dim):
    """One-time: stack per-layer weights along L, fold 1/sqrt(D) into q
    projections, permute q/k rows to rotate-half layout, cast to bf16."""
    assert head_dim % 2 == 0
    C = heads * head_dim
    inv_scale = 1.0 / math.sqrt(head_dim)
    bf = lambda w: w.astype(jnp.bfloat16)

    # per-head de-interleave permutation (evens then odds within each head)
    half = jnp.concatenate([jnp.arange(0, head_dim, 2),
                            jnp.arange(1, head_dim, 2)])
    perm = (jnp.arange(heads)[:, None] * head_dim + half[None, :]).reshape(-1)

    blocks = params['blocks']
    prepared = {
        'wte': params['wte'],
        'ln_f_w': params['ln_f_w'].reshape(1, C),
        'lm_head_w': bf(params['lm_head_w']),
        'ln_time_w': jnp.stack([b['ln_time_w'].reshape(1, C) for b in blocks]),
        'ln_chan_w': jnp.stack([b['ln_chan_w'].reshape(1, C) for b in blocks]),
        'mem_wq': jnp.stack([bf(b['mem_wq'] * inv_scale) for b in blocks]),
        'mem_wkv': jnp.stack(
            [bf(jnp.concatenate([b['mem_wk'], b['mem_wv']], axis=0))
             for b in blocks]),
        'mem_wproj': jnp.stack([bf(b['mem_wproj']) for b in blocks]),
        'time_wqkv': jnp.stack(
            [bf(jnp.concatenate([(b['time_wq'] * inv_scale)[perm, :],
                                 b['time_wk'][perm, :],
                                 b['time_wv']], axis=0))
             for b in blocks]),
        'time_wproj': jnp.stack([bf(b['time_wproj']) for b in blocks]),
        'mlp_w1': jnp.stack([bf(b['mlp_w1']) for b in blocks]),
        'mlp_w2': jnp.stack([bf(b['mlp_w2']) for b in blocks]),
    }
    return prepared


def ctc_attention_decoder_forward(params, features, condtargets, input_lengths,
                                  condtarget_lengths, heads, head_dim):
    """Eval-mode forward of CTCAttentionDecoder.forward (prepared params)."""
    N, Tc = condtargets.shape
    stx, etx = 2, 3
    C = heads * head_dim
    T = Tc + 1
    T_pad = _round_up(T, 8)
    L = params['ln_time_w'].shape[0]

    prompt = jnp.pad(condtargets, ((0, 0), (1, 0)), constant_values=stx)
    targets = jnp.pad(condtargets, ((0, 0), (0, 1)), constant_values=0)
    targets = targets.at[jnp.arange(N), condtarget_lengths].set(etx)
    if T_pad != T:  # pad time dim; pad tokens never attend into real rows
        prompt = jnp.pad(prompt, ((0, 0), (0, T_pad - T)))
        targets = jnp.pad(targets, ((0, 0), (0, T_pad - T)))  # 0 == ignore

    y0 = params['wte'][prompt].astype(jnp.float32)            # (N, T_pad, C)
    cos_t, sin_t = rope_tables(T_pad, head_dim)
    lens = input_lengths.astype(jnp.int32)
    feats_bf = features.astype(jnp.bfloat16)

    y = fused_decoder_stack(y0, feats_bf, lens, cos_t, sin_t, params,
                            heads, head_dim)

    decoder_loss = lm_head_loss(y.reshape(N * T_pad, C), targets.reshape(-1),
                                params['ln_f_w'], params['lm_head_w'])

    # measure_entropy=False -> reference reports -inf entropies per layer
    stats = {
        'meme_entropy': [jnp.array(-jnp.inf, jnp.float32) for _ in range(L)],
        'self_entropy': [jnp.array(-jnp.inf, jnp.float32) for _ in range(L)],
    }

    # TODO(synk): TemporalClassifier / CTC loss definition not provided; omitted.
    recognizer_loss = jnp.array(0.0, jnp.float32)
    return decoder_loss + 0.3 * recognizer_loss, stats


def init_params(key, vocab, heads, head_dim, layers):
    C = heads * head_dim

    def dense(k, shape, scale=0.02):
        return scale * jax.random.normal(k, shape, dtype=jnp.float32)

    keys = jax.random.split(key, 2 + layers)
    params = {
        'wte': jax.random.normal(keys[0], (vocab, C), dtype=jnp.float32),
        'lm_head_w': dense(keys[1], (vocab, C)),
        'ln_f_w': jnp.ones((C,), jnp.float32),
        'blocks': [],
    }
    for l in range(layers):
        bk = jax.random.split(keys[2 + l], 10)
        params['blocks'].append({
            'ln_time_w': jnp.ones((C,), jnp.float32),
            'ln_chan_w': jnp.ones((C,), jnp.float32),
            'mem_wq': dense(bk[0], (C, C)),
            'mem_wk': dense(bk[1], (C, C)),
            'mem_wv': dense(bk[2], (C, C)),
            'mem_wproj': dense(bk[3], (C, C)),
            'time_wq': dense(bk[4], (C, C)),
            'time_wk': dense(bk[5], (C, C)),
            'time_wv': dense(bk[6], (C, C)),
            'time_wproj': dense(bk[7], (C, C)),
            'mlp_w1': dense(bk[8], (4 * C, C)),
            'mlp_w2': dense(bk[9], (C, 4 * C)),
        })
    return params


if __name__ == "__main__":
    vocab, head_dim, heads, layers = 16, 16, 2, 2
    N, S, Tc = 2, 8, 6
    C = head_dim * heads

    key = jax.random.PRNGKey(0)
    kp, kf, kt = jax.random.split(key, 3)
    params = prepare_params(init_params(kp, vocab, heads, head_dim, layers),
                            heads, head_dim)

    features = jax.random.normal(kf, (N, S, C), dtype=jnp.float32)
    condtargets = jax.random.randint(kt, (N, Tc), 4, vocab, dtype=jnp.int32)
    condtarget_lengths = jnp.array([6, 4], dtype=jnp.int32)
    # zero-pad past each sequence's length (padding id 0 == CE ignore_index)
    condtargets = jnp.where(jnp.arange(Tc)[None, :] < condtarget_lengths[:, None],
                            condtargets, 0)
    input_lengths = jnp.array([8, 5], dtype=jnp.int32)

    fwd = jax.jit(functools.partial(ctc_attention_decoder_forward,
                                    heads=heads, head_dim=head_dim))
    loss, stats = fwd(params, features, condtargets, input_lengths,
                      condtarget_lengths)
    loss = jax.block_until_ready(loss)
    assert bool(jnp.isfinite(loss))
    print("KERNEL_OK")
</pallas_src>

<mosaic_0001>
module attributes {stable_mosaic.version = 11 : i64} {
  func.func @kernel(%arg0: i32, %arg1: i32, %arg2: memref<16x32xf32, #tpu.memory_space<vmem>>, %arg3: memref<1x32xf32, #tpu.memory_space<vmem>>, %arg4: memref<16x32xbf16, #tpu.memory_space<vmem>>, %arg5: memref<16x1xi32, #tpu.memory_space<vmem>>, %arg6: memref<1xf32, #tpu.memory_space<smem>>, %arg7: memref<16x32xbf16, #tpu.memory_space<vmem>>, %arg8: memref<16x1xf32, #tpu.memory_space<vmem>>, %arg9: memref<16x1xf32, #tpu.memory_space<vmem>>, %arg10: memref<16x1xf32, #tpu.memory_space<vmem>>, %arg11: memref<2xf32, #tpu.memory_space<smem>>) attributes {dimension_semantics = [#tpu.dimension_semantics<arbitrary>, #tpu.dimension_semantics<arbitrary>], iteration_bounds = array<i64: 1, 1>, scalar_prefetch = 0 : i64, scratch_operands = 5 : i64, tpu.core_type = #tpu.core_type<tc>, window_params = [{transform_indices = @transform_0, window_bounds = array<i64: 16, 32>}, {pipeline_mode = #tpu.pipeline_mode<synchronous>, transform_indices = @transform_1, window_bounds = array<i64: 1, 32>}, {transform_indices = @transform_2, window_bounds = array<i64: 16, 32>}, {transform_indices = @transform_3, window_bounds = array<i64: 16, 1>}, {transform_indices = @transform_4, window_bounds = array<i64: 1>}]} {
    %c0_i32 = arith.constant 0 : i32
    %0 = arith.cmpi eq, %arg0, %c0_i32 : i32
    %c0_i32_0 = arith.constant 0 : i32
    %1 = arith.cmpi eq, %arg1, %c0_i32_0 : i32
    %2 = arith.andi %0, %1 : i1
    %3 = arith.extui %2 : i1 to i32
    %c0_i32_1 = arith.constant 0 : i32
    %4 = arith.cmpi ne, %3, %c0_i32_1 : i32
    scf.if %4 {
      %cst_32 = arith.constant 0.000000e+00 : f32
      %c0_33 = arith.constant 0 : index
      %50 = memref.load %arg11[%c0_33] : memref<2xf32, #tpu.memory_space<smem>>
      memref.store %cst_32, %arg11[%c0_33] : memref<2xf32, #tpu.memory_space<smem>>
      %cst_34 = arith.constant 0.000000e+00 : f32
      %c1 = arith.constant 1 : index
      %51 = memref.load %arg11[%c1] : memref<2xf32, #tpu.memory_space<smem>>
      memref.store %cst_34, %arg11[%c1] : memref<2xf32, #tpu.memory_space<smem>>
    } else {
    }
    %c0_i32_2 = arith.constant 0 : i32
    %5 = arith.cmpi eq, %arg1, %c0_i32_2 : i32
    %6 = arith.extui %5 : i1 to i32
    %c0_i32_3 = arith.constant 0 : i32
    %7 = arith.cmpi ne, %6, %c0_i32_3 : i32
    scf.if %7 {
      %c0_32 = arith.constant 0 : index
      %c0_33 = arith.constant 0 : index
      %50 = vector.load %arg2[%c0_32, %c0_33] : memref<16x32xf32, #tpu.memory_space<vmem>>, vector<16x32xf32>
      %c0_34 = arith.constant 0 : index
      %c0_35 = arith.constant 0 : index
      %51 = vector.load %arg3[%c0_34, %c0_35] : memref<1x32xf32, #tpu.memory_space<vmem>>, vector<1x32xf32>
      %cst_36 = arith.constant dense<0.000000e+00> : vector<16xf32>
      %52 = vector.multi_reduction <add>, %50, %cst_36 [1] : vector<16x32xf32> to vector<16xf32>
      %53 = vector.shape_cast %52 : vector<16xf32> to vector<16x1xf32>
      %cst_37 = arith.constant 3.200000e+01 : f32
      %54 = vector.broadcast %cst_37 : f32 to vector<16x1xf32>
      %55 = arith.divf %53, %54 : vector<16x1xf32>
      %56 = vector.broadcast %55 : vector<16x1xf32> to vector<16x32xf32>
      %57 = arith.subf %50, %56 : vector<16x32xf32>
      %58 = arith.mulf %57, %57 : vector<16x32xf32>
      %cst_38 = arith.constant dense<0.000000e+00> : vector<16xf32>
      %59 = vector.multi_reduction <add>, %58, %cst_38 [1] : vector<16x32xf32> to vector<16xf32>
      %60 = vector.shape_cast %59 : vector<16xf32> to vector<16x1xf32>
      %cst_39 = arith.constant 3.200000e+01 : f32
      %61 = vector.broadcast %cst_39 : f32 to vector<16x1xf32>
      %62 = arith.divf %60, %61 : vector<16x1xf32>
      %63 = vector.broadcast %55 : vector<16x1xf32> to vector<16x32xf32>
      %64 = arith.subf %50, %63 : vector<16x32xf32>
      %cst_40 = arith.constant 9.99999974E-6 : f32
      %65 = vector.broadcast %cst_40 : f32 to vector<16x1xf32>
      %66 = arith.addf %62, %65 : vector<16x1xf32>
      %67 = math.rsqrt %66 : vector<16x1xf32>
      %68 = vector.broadcast %67 : vector<16x1xf32> to vector<16x32xf32>
      %69 = arith.mulf %64, %68 : vector<16x32xf32>
      %70 = vector.broadcast %51 : vector<1x32xf32> to vector<16x32xf32>
      %71 = arith.mulf %69, %70 : vector<16x32xf32>
      %72 = arith.truncf %71 : vector<16x32xf32> to vector<16x32xbf16>
      %c0_41 = arith.constant 0 : index
      %c0_42 = arith.constant 0 : index
      %73 = vector.load %arg7[%c0_41, %c0_42] : memref<16x32xbf16, #tpu.memory_space<vmem>>, vector<16x32xbf16>
      tpu.vector_store %arg7[%c0_41, %c0_42], %72 {strides = array<i32>} : memref<16x32xbf16, #tpu.memory_space<vmem>>, vector<16x32xbf16>,
      %cst_43 = arith.constant -1.000000e+30 : f32
      %74 = vector.broadcast %cst_43 : f32 to vector<16x1xf32>
      %c0_44 = arith.constant 0 : index
      %c0_45 = arith.constant 0 : index
      %75 = vector.load %arg8[%c0_44, %c0_45] : memref<16x1xf32, #tpu.memory_space<vmem>>, vector<16x1xf32>
      tpu.vector_store %arg8[%c0_44, %c0_45], %74 {strides = array<i32>} : memref<16x1xf32, #tpu.memory_space<vmem>>, vector<16x1xf32>,
      %cst_46 = arith.constant 0.000000e+00 : f32
      %76 = vector.broadcast %cst_46 : f32 to vector<16x1xf32>
      %c0_47 = arith.constant 0 : index
      %c0_48 = arith.constant 0 : index
      %77 = vector.load %arg9[%c0_47, %c0_48] : memref<16x1xf32, #tpu.memory_space<vmem>>, vector<16x1xf32>
      tpu.vector_store %arg9[%c0_47, %c0_48], %76 {strides = array<i32>} : memref<16x1xf32, #tpu.memory_space<vmem>>, vector<16x1xf32>,
      %cst_49 = arith.constant 0.000000e+00 : f32
      %78 = vector.broadcast %cst_49 : f32 to vector<16x1xf32>
      %c0_50 = arith.constant 0 : index
      %c0_51 = arith.constant 0 : index
      %79 = vector.load %arg10[%c0_50, %c0_51] : memref<16x1xf32, #tpu.memory_space<vmem>>, vector<16x1xf32>
      tpu.vector_store %arg10[%c0_50, %c0_51], %78 {strides = array<i32>} : memref<16x1xf32, #tpu.memory_space<vmem>>, vector<16x1xf32>,
    } else {
    }
    %c0 = arith.constant 0 : index
    %c0_4 = arith.constant 0 : index
    %8 = vector.load %arg7[%c0, %c0_4] : memref<16x32xbf16, #tpu.memory_space<vmem>>, vector<16x32xbf16>
    %c0_5 = arith.constant 0 : index
    %c0_6 = arith.constant 0 : index
    %9 = vector.load %arg4[%c0_5, %c0_6] : memref<16x32xbf16, #tpu.memory_space<vmem>>, vector<16x32xbf16>
    %cst = arith.constant dense<0.000000e+00> : vector<16x16xf32>
    %10 = tpu.matmul %8, %9, %cst {dimension_numbers = #tpu.dot_dimension_numbers<[1], [1], [0], [0], [0, 0, 1, 0], [], []>} : vector<16x32xbf16>, vector<16x32xbf16>, vector<16x16xf32> -> vector<16x16xf32>
    %11 = tpu.iota {dimensions = array<i32: 1>} : vector<16x16xi32>
    %c16_i32 = arith.constant 16 : i32
    %12 = arith.muli %arg1, %c16_i32 : i32
    %13 = vector.broadcast %12 : i32 to vector<16x16xi32>
    %14 = arith.addi %11, %13 : vector<16x16xi32>
    %c0_7 = arith.constant 0 : index
    %c0_8 = arith.constant 0 : index
    %15 = vector.load %arg5[%c0_7, %c0_8] : memref<16x1xi32, #tpu.memory_space<vmem>>, vector<16x1xi32>
    %c0_9 = arith.constant 0 : index
    %c0_10 = arith.constant 0 : index
    %16 = vector.load %arg8[%c0_9, %c0_10] : memref<16x1xf32, #tpu.memory_space<vmem>>, vector<16x1xf32>
    %cst_11 = arith.constant dense<0xFF800000> : vector<16xf32>
    %17 = vector.multi_reduction <maximumf>, %10, %cst_11 [1] : vector<16x16xf32> to vector<16xf32>
    %18 = vector.shape_cast %17 : vector<16xf32> to vector<16x1xf32>
    %19 = arith.maximumf %16, %18 : vector<16x1xf32>
    %c0_12 = arith.constant 0 : index
    %c0_13 = arith.constant 0 : index
    %20 = vector.load %arg9[%c0_12, %c0_13] : memref<16x1xf32, #tpu.memory_space<vmem>>, vector<16x1xf32>
    %c0_14 = arith.constant 0 : index
    %c0_15 = arith.constant 0 : index
    %21 = vector.load %arg8[%c0_14, %c0_15] : memref<16x1xf32, #tpu.memory_space<vmem>>, vector<16x1xf32>
    %22 = arith.subf %21, %19 : vector<16x1xf32>
    %23 = math.exp %22 : vector<16x1xf32>
    %24 = arith.mulf %20, %23 : vector<16x1xf32>
    %25 = vector.broadcast %19 : vector<16x1xf32> to vector<16x16xf32>
    %26 = arith.subf %10, %25 : vector<16x16xf32>
    %27 = math.exp %26 : vector<16x16xf32>
    %cst_16 = arith.constant dense<0.000000e+00> : vector<16xf32>
    %28 = vector.multi_reduction <add>, %27, %cst_16 [1] : vector<16x16xf32> to vector<16xf32>
    %29 = vector.shape_cast %28 : vector<16xf32> to vector<16x1xf32>
    %30 = arith.addf %24, %29 : vector<16x1xf32>
    %c0_17 = arith.constant 0 : index
    %c0_18 = arith.constant 0 : index
    %31 = vector.load %arg9[%c0_17, %c0_18] : memref<16x1xf32, #tpu.memory_space<vmem>>, vector<16x1xf32>
    tpu.vector_store %arg9[%c0_17, %c0_18], %30 {strides = array<i32>} : memref<16x1xf32, #tpu.memory_space<vmem>>, vector<16x1xf32>,
    %c0_19 = arith.constant 0 : index
    %c0_20 = arith.constant 0 : index
    %32 = vector.load %arg8[%c0_19, %c0_20] : memref<16x1xf32, #tpu.memory_space<vmem>>, vector<16x1xf32>
    tpu.vector_store %arg8[%c0_19, %c0_20], %19 {strides = array<i32>} : memref<16x1xf32, #tpu.memory_space<vmem>>, vector<16x1xf32>,
    %c0_21 = arith.constant 0 : index
    %c0_22 = arith.constant 0 : index
    %33 = vector.load %arg10[%c0_21, %c0_22] : memref<16x1xf32, #tpu.memory_space<vmem>>, vector<16x1xf32>
    %34 = vector.broadcast %15 : vector<16x1xi32> to vector<16x16xi32>
    %35 = arith.cmpi eq, %14, %34 : vector<16x16xi32>
    %cst_23 = arith.constant 0.000000e+00 : f32
    %36 = vector.broadcast %cst_23 : f32 to vector<16x16xf32>
    %37 = arith.select %35, %10, %36 : vector<16x16xi1>, vector<16x16xf32>
    %cst_24 = arith.constant dense<0.000000e+00> : vector<16xf32>
    %38 = vector.multi_reduction <add>, %37, %cst_24 [1] : vector<16x16xf32> to vector<16xf32>
    %39 = vector.shape_cast %38 : vector<16xf32> to vector<16x1xf32>
    %40 = arith.addf %33, %39 : vector<16x1xf32>
    %c0_25 = arith.constant 0 : index
    %c0_26 = arith.constant 0 : index
    %41 = vector.load %arg10[%c0_25, %c0_26] : memref<16x1xf32, #tpu.memory_space<vmem>>, vector<16x1xf32>
    tpu.vector_store %arg10[%c0_25, %c0_26], %40 {strides = array<i32>} : memref<16x1xf32, #tpu.memory_space<vmem>>, vector<16x1xf32>,
    %c0_i32_27 = arith.constant 0 : i32
    %42 = arith.cmpi eq, %arg1, %c0_i32_27 : i32
    %43 = arith.extui %42 : i1 to i32
    %c0_i32_28 = arith.constant 0 : i32
    %44 = arith.cmpi ne, %43, %c0_i32_28 : i32
    scf.if %44 {
      %c0_32 = arith.constant 0 : index
      %c0_33 = arith.constant 0 : index
      %50 = vector.load %arg9[%c0_32, %c0_33] : memref<16x1xf32, #tpu.memory_space<vmem>>, vector<16x1xf32>
      %51 = math.log %50 : vector<16x1xf32>
      %c0_34 = arith.constant 0 : index
      %c0_35 = arith.constant 0 : index
      %52 = vector.load %arg8[%c0_34, %c0_35] : memref<16x1xf32, #tpu.memory_space<vmem>>, vector<16x1xf32>
      %53 = arith.addf %51, %52 : vector<16x1xf32>
      %c0_i32_36 = arith.constant 0 : i32
      %54 = vector.broadcast %c0_i32_36 : i32 to vector<16x1xi32>
      %55 = arith.cmpi ne, %15, %54 : vector<16x1xi32>
      %56 = arith.extui %55 : vector<16x1xi1> to vector<16x1xi32>
      %57 = arith.sitofp %56 : vector<16x1xi32> to vector<16x1xf32>
      %c0_37 = arith.constant 0 : index
      %58 = memref.load %arg11[%c0_37] : memref<2xf32, #tpu.memory_space<smem>>
      %c0_38 = arith.constant 0 : index
      %c0_39 = arith.constant 0 : index
      %59 = vector.load %arg10[%c0_38, %c0_39] : memref<16x1xf32, #tpu.memory_space<vmem>>, vector<16x1xf32>
      %60 = arith.subf %53, %59 : vector<16x1xf32>
      %61 = arith.mulf %60, %57 : vector<16x1xf32>
      %62 = vector.shape_cast %61 : vector<16x1xf32> to vector<1x16x1xf32>
      %cst_40 = arith.constant dense<0.000000e+00> : vector<1xf32>
      %63 = vector.multi_reduction <add>, %62, %cst_40 [1, 2] : vector<1x16x1xf32> to vector<1xf32>
      %64 = vector.shape_cast %63 : vector<1xf32> to vector<1x1x1xf32>
      %65 = vector.extract %64[0, 0, 0] : f32 from vector<1x1x1xf32>
      %66 = arith.addf %58, %65 : f32
      %c0_41 = arith.constant 0 : index
      %67 = memref.load %arg11[%c0_41] : memref<2xf32, #tpu.memory_space<smem>>
      memref.store %66, %arg11[%c0_41] : memref<2xf32, #tpu.memory_space<smem>>
      %c1 = arith.constant 1 : index
      %68 = memref.load %arg11[%c1] : memref<2xf32, #tpu.memory_space<smem>>
      %69 = vector.shape_cast %57 : vector<16x1xf32> to vector<1x16x1xf32>
      %cst_42 = arith.constant dense<0.000000e+00> : vector<1xf32>
      %70 = vector.multi_reduction <add>, %69, %cst_42 [1, 2] : vector<1x16x1xf32> to vector<1xf32>
      %71 = vector.shape_cast %70 : vector<1xf32> to vector<1x1x1xf32>
      %72 = vector.extract %71[0, 0, 0] : f32 from vector<1x1x1xf32>
      %73 = arith.addf %68, %72 : f32
      %c1_43 = arith.constant 1 : index
      %74 = memref.load %arg11[%c1_43] : memref<2xf32, #tpu.memory_space<smem>>
      memref.store %73, %arg11[%c1_43] : memref<2xf32, #tpu.memory_space<smem>>
    } else {
    }
    %c0_i32_29 = arith.constant 0 : i32
    %45 = arith.cmpi eq, %arg0, %c0_i32_29 : i32
    %c0_i32_30 = arith.constant 0 : i32
    %46 = arith.cmpi eq, %arg1, %c0_i32_30 : i32
    %47 = arith.andi %45, %46 : i1
    %48 = arith.extui %47 : i1 to i32
    %c0_i32_31 = arith.constant 0 : i32
    %49 = arith.cmpi ne, %48, %c0_i32_31 : i32
    scf.if %49 {
      %c0_32 = arith.constant 0 : index
      %50 = memref.load %arg11[%c0_32] : memref<2xf32, #tpu.memory_space<smem>>
      %c1 = arith.constant 1 : index
      %51 = memref.load %arg11[%c1] : memref<2xf32, #tpu.memory_space<smem>>
      %cst_33 = arith.constant 1.000000e+00 : f32
      %52 = arith.maximumf %51, %cst_33 : f32
      %53 = arith.divf %50, %52 : f32
      %c0_34 = arith.constant 0 : index
      %54 = memref.load %arg6[%c0_34] : memref<1xf32, #tpu.memory_space<smem>>
      memref.store %53, %arg6[%c0_34] : memref<1xf32, #tpu.memory_space<smem>>
    } else {
    }
    return
  }
  func.func @transform_0(%arg0: i32, %arg1: i32) -> (i32, i32) {
    %c0_i32 = arith.constant 0 : i32
    %c0_i32_0 = arith.constant 0 : i32
    return %arg0, %c0_i32 : i32, i32
  }
  func.func @transform_1(%arg0: i32, %arg1: i32) -> (i32, i32) {
    %c0_i32 = arith.constant 0 : i32
    %c0_i32_0 = arith.constant 0 : i32
    %c0_i32_1 = arith.constant 0 : i32
    return %c0_i32, %c0_i32_0 : i32, i32
  }
  func.func @transform_2(%arg0: i32, %arg1: i32) -> (i32, i32) {
    %c0_i32 = arith.constant 0 : i32
    %c0_i32_0 = arith.constant 0 : i32
    return %arg1, %c0_i32 : i32, i32
  }
  func.func @transform_3(%arg0: i32, %arg1: i32) -> (i32, i32) {
    %c0_i32 = arith.constant 0 : i32
    %c0_i32_0 = arith.constant 0 : i32
    return %arg0, %c0_i32 : i32, i32
  }
  func.func @transform_4(%arg0: i32, %arg1: i32) -> i32 {
    %c0_i32 = arith.constant 0 : i32
    %c0_i32_0 = arith.constant 0 : i32
    return %c0_i32 : i32
  }
}

module attributes {stable_mosaic.version = 11 : i64} {
  func.func @kernel(%arg0: i32, %arg1: i32, %arg2: memref<2xi32, #tpu.memory_space<smem>>, %arg3: memref<1x8x32xf32, #tpu.memory_space<vmem>>, %arg4: memref<1x8x32xbf16, #tpu.memory_space<vmem>>, %arg5: memref<8x16xf32, #tpu.memory_space<vmem>>, %arg6: memref<8x16xf32, #tpu.memory_space<vmem>>, %arg7: memref<1x1x32xf32, #tpu.memory_space<vmem>>, %arg8: memref<1x32x32xbf16, #tpu.memory_space<vmem>>, %arg9: memref<1x64x32xbf16, #tpu.memory_space<vmem>>, %arg10: memref<1x32x32xbf16, #tpu.memory_space<vmem>>, %arg11: memref<1x96x32xbf16, #tpu.memory_space<vmem>>, %arg12: memref<1x32x32xbf16, #tpu.memory_space<vmem>>, %arg13: memref<1x1x32xf32, #tpu.memory_space<vmem>>, %arg14: memref<1x128x32xbf16, #tpu.memory_space<vmem>>, %arg15: memref<1x32x128xbf16, #tpu.memory_space<vmem>>, %arg16: memref<1x8x32xf32, #tpu.memory_space<vmem>>, %arg17: memref<8x32xf32, #tpu.memory_space<vmem>>) attributes {dimension_semantics = [#tpu.dimension_semantics<parallel>, #tpu.dimension_semantics<arbitrary>], iteration_bounds = array<i64: 2, 2>, scalar_prefetch = 1 : i64, scratch_operands = 1 : i64, tpu.core_type = #tpu.core_type<tc>, window_params = [{transform_indices = @transform_0, window_bounds = array<i64: 1, 8, 32>}, {transform_indices = @transform_1, window_bounds = array<i64: 1, 8, 32>}, {pipeline_mode = #tpu.pipeline_mode<synchronous>, transform_indices = @transform_2, window_bounds = array<i64: 8, 16>}, {pipeline_mode = #tpu.pipeline_mode<synchronous>, transform_indices = @transform_3, window_bounds = array<i64: 8, 16>}, {transform_indices = @transform_4, window_bounds = array<i64: 1, 1, 32>}, {transform_indices = @transform_5, window_bounds = array<i64: 1, 32, 32>}, {transform_indices = @transform_6, window_bounds = array<i64: 1, 64, 32>}, {transform_indices = @transform_7, window_bounds = array<i64: 1, 32, 32>}, {transform_indices = @transform_8, window_bounds = array<i64: 1, 96, 32>}, {transform_indices = @transform_9, window_bounds = array<i64: 1, 32, 32>}, {transform_indices = @transform_10, window_bounds = array<i64: 1, 1, 32>}, {transform_indices = @transform_11, window_bounds = array<i64: 1, 128, 32>}, {transform_indices = @transform_12, window_bounds = array<i64: 1, 32, 128>}, {transform_indices = @transform_13, window_bounds = array<i64: 1, 8, 32>}]} {
    %c0_i32 = arith.constant 0 : i32
    %0 = arith.cmpi eq, %arg1, %c0_i32 : i32
    %1 = arith.extui %0 : i1 to i32
    %c0_i32_0 = arith.constant 0 : i32
    %2 = arith.cmpi ne, %1, %c0_i32_0 : i32
    scf.if %2 {
      %c0_70 = arith.constant 0 : index
      %c0_71 = arith.constant 0 : index
      %c0_72 = arith.constant 0 : index
      %214 = vector.load %arg3[%c0_70, %c0_71, %c0_72] : memref<1x8x32xf32, #tpu.memory_space<vmem>>, vector<1x8x32xf32>
      %215 = vector.shape_cast %214 : vector<1x8x32xf32> to vector<8x32xf32>
      %c0_73 = arith.constant 0 : index
      %c0_74 = arith.constant 0 : index
      %216 = vector.load %arg17[%c0_73, %c0_74] : memref<8x32xf32, #tpu.memory_space<vmem>>, vector<8x32xf32>
      tpu.vector_store %arg17[%c0_73, %c0_74], %215 {strides = array<i32>} : memref<8x32xf32, #tpu.memory_space<vmem>>, vector<8x32xf32>,
    } else {
    }
    %c0 = arith.constant 0 : index
    %c0_1 = arith.constant 0 : index
    %3 = vector.load %arg17[%c0, %c0_1] : memref<8x32xf32, #tpu.memory_space<vmem>>, vector<8x32xf32>
    %c0_2 = arith.constant 0 : index
    %c0_3 = arith.constant 0 : index
    %c0_4 = arith.constant 0 : index
    %4 = vector.load %arg7[%c0_2, %c0_3, %c0_4] : memref<1x1x32xf32, #tpu.memory_space<vmem>>, vector<1x1x32xf32>
    %5 = vector.shape_cast %4 : vector<1x1x32xf32> to vector<1x32xf32>
    %cst = arith.constant dense<0.000000e+00> : vector<8xf32>
    %6 = vector.multi_reduction <add>, %3, %cst [1] : vector<8x32xf32> to vector<8xf32>
    %7 = vector.shape_cast %6 : vector<8xf32> to vector<8x1xf32>
    %cst_5 = arith.constant 3.200000e+01 : f32
    %8 = vector.broadcast %cst_5 : f32 to vector<8x1xf32>
    %9 = arith.divf %7, %8 : vector<8x1xf32>
    %10 = vector.broadcast %9 : vector<8x1xf32> to vector<8x32xf32>
    %11 = arith.subf %3, %10 : vector<8x32xf32>
    %12 = arith.mulf %11, %11 : vector<8x32xf32>
    %cst_6 = arith.constant dense<0.000000e+00> : vector<8xf32>
    %13 = vector.multi_reduction <add>, %12, %cst_6 [1] : vector<8x32xf32> to vector<8xf32>
    %14 = vector.shape_cast %13 : vector<8xf32> to vector<8x1xf32>
    %cst_7 = arith.constant 3.200000e+01 : f32
    %15 = vector.broadcast %cst_7 : f32 to vector<8x1xf32>
    %16 = arith.divf %14, %15 : vector<8x1xf32>
    %17 = vector.broadcast %9 : vector<8x1xf32> to vector<8x32xf32>
    %18 = arith.subf %3, %17 : vector<8x32xf32>
    %cst_8 = arith.constant 9.99999974E-6 : f32
    %19 = vector.broadcast %cst_8 : f32 to vector<8x1xf32>
    %20 = arith.addf %16, %19 : vector<8x1xf32>
    %21 = math.rsqrt %20 : vector<8x1xf32>
    %22 = vector.broadcast %21 : vector<8x1xf32> to vector<8x32xf32>
    %23 = arith.mulf %18, %22 : vector<8x32xf32>
    %24 = vector.broadcast %5 : vector<1x32xf32> to vector<8x32xf32>
    %25 = arith.mulf %23, %24 : vector<8x32xf32>
    %26 = arith.truncf %25 : vector<8x32xf32> to vector<8x32xbf16>
    %c0_9 = arith.constant 0 : index
    %c0_10 = arith.constant 0 : index
    %27 = vector.load %arg5[%c0_9, %c0_10] : memref<8x16xf32, #tpu.memory_space<vmem>>, vector<8x16xf32>
    %c0_11 = arith.constant 0 : index
    %c0_12 = arith.constant 0 : index
    %28 = vector.load %arg6[%c0_11, %c0_12] : memref<8x16xf32, #tpu.memory_space<vmem>>, vector<8x16xf32>
    %c0_13 = arith.constant 0 : index
    %c0_14 = arith.constant 0 : index
    %c0_15 = arith.constant 0 : index
    %29 = vector.load %arg8[%c0_13, %c0_14, %c0_15] : memref<1x32x32xbf16, #tpu.memory_space<vmem>>, vector<1x32x32xbf16>
    %30 = vector.shape_cast %29 : vector<1x32x32xbf16> to vector<32x32xbf16>
    %cst_16 = arith.constant dense<0.000000e+00> : vector<8x32xf32>
    %31 = tpu.matmul %26, %30, %cst_16 {dimension_numbers = #tpu.dot_dimension_numbers<[1], [1], [0], [0], [0, 0, 1, 0], [], []>} : vector<8x32xbf16>, vector<32x32xbf16>, vector<8x32xf32> -> vector<8x32xf32>
    %c0_17 = arith.constant 0 : index
    %c0_18 = arith.constant 0 : index
    %c0_19 = arith.constant 0 : index
    %32 = vector.load %arg4[%c0_17, %c0_18, %c0_19] : memref<1x8x32xbf16, #tpu.memory_space<vmem>>, vector<1x8x32xbf16>
    %33 = vector.shape_cast %32 : vector<1x8x32xbf16> to vector<8x32xbf16>
    %c0_20 = arith.constant 0 : index
    %c0_21 = arith.constant 0 : index
    %c0_22 = arith.constant 0 : index
    %34 = vector.load %arg9[%c0_20, %c0_21, %c0_22] : memref<1x64x32xbf16, #tpu.memory_space<vmem>>, vector<1x64x32xbf16>
    %35 = vector.shape_cast %34 : vector<1x64x32xbf16> to vector<64x32xbf16>
    %cst_23 = arith.constant dense<0.000000e+00> : vector<8x64xf32>
    %36 = tpu.matmul %33, %35, %cst_23 {dimension_numbers = #tpu.dot_dimension_numbers<[1], [1], [0], [0], [0, 0, 1, 0], [], []>} : vector<8x32xbf16>, vector<64x32xbf16>, vector<8x64xf32> -> vector<8x64xf32>
    %37 = arith.index_cast %arg0 : i32 to index
    %38 = memref.load %arg2[%37] : memref<2xi32, #tpu.memory_space<smem>>
    %39 = tpu.iota {dimensions = array<i32: 1>} : vector<8x8xi32>
    %40 = vector.broadcast %38 : i32 to vector<8x8xi32>
    %41 = arith.cmpi slt, %39, %40 : vector<8x8xi32>
    %cst_24 = arith.constant 0.000000e+00 : f32
    %cst_25 = arith.constant -1.000000e+30 : f32
    %42 = vector.broadcast %cst_24 : f32 to vector<8x8xf32>
    %43 = vector.broadcast %cst_25 : f32 to vector<8x8xf32>
    %44 = arith.select %41, %42, %43 : vector<8x8xi1>, vector<8x8xf32>
    %45 = vector.extract_strided_slice %31 {offsets = [0, 0], sizes = [8, 16], strides = [1, 1]} : vector<8x32xf32> to vector<8x16xf32>
    %46 = vector.extract_strided_slice %31 {offsets = [0, 16], sizes = [8, 16], strides = [1, 1]} : vector<8x32xf32> to vector<8x16xf32>
    %47 = vector.shape_cast %45 : vector<8x16xf32> to vector<1x8x16xf32>
    %48 = vector.shape_cast %46 : vector<8x16xf32> to vector<1x8x16xf32>
    %49 = tpu.concatenate %47, %48 in 0 : vector<1x8x16xf32>, vector<1x8x16xf32> -> vector<2x8x16xf32>
    %50 = vector.extract_strided_slice %36 {offsets = [0, 0], sizes = [8, 32], strides = [1, 1]} : vector<8x64xf32> to vector<8x32xf32>
    %51 = vector.extract_strided_slice %50 {offsets = [0, 0], sizes = [8, 16], strides = [1, 1]} : vector<8x32xf32> to vector<8x16xf32>
    %52 = vector.extract_strided_slice %50 {offsets = [0, 16], sizes = [8, 16], strides = [1, 1]} : vector<8x32xf32> to vector<8x16xf32>
    %53 = vector.shape_cast %51 : vector<8x16xf32> to vector<1x8x16xf32>
    %54 = vector.shape_cast %52 : vector<8x16xf32> to vector<1x8x16xf32>
    %55 = tpu.concatenate %53, %54 in 0 : vector<1x8x16xf32>, vector<1x8x16xf32> -> vector<2x8x16xf32>
    %56 = vector.extract_strided_slice %36 {offsets = [0, 32], sizes = [8, 32], strides = [1, 1]} : vector<8x64xf32> to vector<8x32xf32>
    %57 = vector.extract_strided_slice %56 {offsets = [0, 0], sizes = [8, 16], strides = [1, 1]} : vector<8x32xf32> to vector<8x16xf32>
    %58 = vector.extract_strided_slice %56 {offsets = [0, 16], sizes = [8, 16], strides = [1, 1]} : vector<8x32xf32> to vector<8x16xf32>
    %59 = vector.shape_cast %57 : vector<8x16xf32> to vector<1x8x16xf32>
    %60 = vector.shape_cast %58 : vector<8x16xf32> to vector<1x8x16xf32>
    %61 = tpu.concatenate %59, %60 in 0 : vector<1x8x16xf32>, vector<1x8x16xf32> -> vector<2x8x16xf32>
    %62 = arith.truncf %49 : vector<2x8x16xf32> to vector<2x8x16xbf16>
    %63 = arith.truncf %55 : vector<2x8x16xf32> to vector<2x8x16xbf16>
    "tpu.trace_start"() <{level = 10 : i32, message = "htd,hsd->hts"}> : () -> ()
    %cst_26 = arith.constant dense<0.000000e+00> : vector<2x8x8xf32>
    %64 = tpu.matmul %62, %63, %cst_26 {dimension_numbers = #tpu.dot_dimension_numbers<[2], [2], [1], [1], [0, 0, 0, 1, 1, 1], [0], [0]>} : vector<2x8x16xbf16>, vector<2x8x16xbf16>, vector<2x8x8xf32> -> vector<2x8x8xf32>
    "tpu.trace_stop"() : () -> ()
    %65 = vector.shape_cast %44 : vector<8x8xf32> to vector<1x8x8xf32>
    %66 = vector.broadcast %65 : vector<1x8x8xf32> to vector<2x8x8xf32>
    %67 = arith.addf %64, %66 : vector<2x8x8xf32>
    %cst_27 = arith.constant dense<0xFF800000> : vector<2x8xf32>
    %68 = vector.multi_reduction <maximumf>, %67, %cst_27 [2] : vector<2x8x8xf32> to vector<2x8xf32>
    %69 = vector.shape_cast %68 : vector<2x8xf32> to vector<2x8x1xf32>
    %70 = vector.broadcast %69 : vector<2x8x1xf32> to vector<2x8x8xf32>
    %71 = arith.subf %67, %70 : vector<2x8x8xf32>
    %72 = math.exp %71 : vector<2x8x8xf32>
    %cst_28 = arith.constant dense<0.000000e+00> : vector<2x8xf32>
    %73 = vector.multi_reduction <add>, %72, %cst_28 [2] : vector<2x8x8xf32> to vector<2x8xf32>
    %74 = vector.shape_cast %73 : vector<2x8xf32> to vector<2x8x1xf32>
    %75 = tpu.reciprocal %74 {approx = true} : vector<2x8x1xf32> -> vector<2x8x1xf32>
    %76 = vector.broadcast %75 : vector<2x8x1xf32> to vector<2x8x8xf32>
    %77 = arith.mulf %72, %76 : vector<2x8x8xf32>
    %78 = arith.truncf %77 : vector<2x8x8xf32> to vector<2x8x8xbf16>
    %79 = arith.truncf %61 : vector<2x8x16xf32> to vector<2x8x16xbf16>
    "tpu.trace_start"() <{level = 10 : i32, message = "hts,hsd->htd"}> : () -> ()
    %cst_29 = arith.constant dense<0.000000e+00> : vector<2x8x16xf32>
    %80 = tpu.matmul %78, %79, %cst_29 {dimension_numbers = #tpu.dot_dimension_numbers<[2], [1], [1], [2], [0, 0, 0, 1, 1, 2], [0], [0]>} : vector<2x8x8xbf16>, vector<2x8x16xbf16>, vector<2x8x16xf32> -> vector<2x8x16xf32>
    "tpu.trace_stop"() : () -> ()
    %81 = vector.extract_strided_slice %80 {offsets = [0, 0, 0], sizes = [1, 8, 16], strides = [1, 1, 1]} : vector<2x8x16xf32> to vector<1x8x16xf32>
    %82 = vector.shape_cast %81 : vector<1x8x16xf32> to vector<8x16xf32>
    %83 = vector.extract_strided_slice %80 {offsets = [1, 0, 0], sizes = [1, 8, 16], strides = [1, 1, 1]} : vector<2x8x16xf32> to vector<1x8x16xf32>
    %84 = vector.shape_cast %83 : vector<1x8x16xf32> to vector<8x16xf32>
    %85 = tpu.concatenate %82, %84 in 1 : vector<8x16xf32>, vector<8x16xf32> -> vector<8x32xf32>
    %86 = arith.truncf %85 : vector<8x32xf32> to vector<8x32xbf16>
    %c0_30 = arith.constant 0 : index
    %c0_31 = arith.constant 0 : index
    %c0_32 = arith.constant 0 : index
    %87 = vector.load %arg10[%c0_30, %c0_31, %c0_32] : memref<1x32x32xbf16, #tpu.memory_space<vmem>>, vector<1x32x32xbf16>
    %88 = vector.shape_cast %87 : vector<1x32x32xbf16> to vector<32x32xbf16>
    %cst_33 = arith.constant dense<0.000000e+00> : vector<8x32xf32>
    %89 = tpu.matmul %86, %88, %cst_33 {dimension_numbers = #tpu.dot_dimension_numbers<[1], [1], [0], [0], [0, 0, 1, 0], [], []>} : vector<8x32xbf16>, vector<32x32xbf16>, vector<8x32xf32> -> vector<8x32xf32>
    %90 = arith.addf %3, %89 : vector<8x32xf32>
    %c0_34 = arith.constant 0 : index
    %c0_35 = arith.constant 0 : index
    %c0_36 = arith.constant 0 : index
    %91 = vector.load %arg11[%c0_34, %c0_35, %c0_36] : memref<1x96x32xbf16, #tpu.memory_space<vmem>>, vector<1x96x32xbf16>
    %92 = vector.shape_cast %91 : vector<1x96x32xbf16> to vector<96x32xbf16>
    %cst_37 = arith.constant dense<0.000000e+00> : vector<8x96xf32>
    %93 = tpu.matmul %26, %92, %cst_37 {dimension_numbers = #tpu.dot_dimension_numbers<[1], [1], [0], [0], [0, 0, 1, 0], [], []>} : vector<8x32xbf16>, vector<96x32xbf16>, vector<8x96xf32> -> vector<8x96xf32>
    %94 = tpu.iota {dimensions = array<i32: 0>} : vector<8x8xi32>
    %95 = tpu.iota {dimensions = array<i32: 1>} : vector<8x8xi32>
    %96 = arith.cmpi sle, %95, %94 : vector<8x8xi32>
    %cst_38 = arith.constant 0.000000e+00 : f32
    %cst_39 = arith.constant -1.000000e+30 : f32
    %97 = vector.broadcast %cst_38 : f32 to vector<8x8xf32>
    %98 = vector.broadcast %cst_39 : f32 to vector<8x8xf32>
    %99 = arith.select %96, %97, %98 : vector<8x8xi1>, vector<8x8xf32>
    %100 = vector.extract_strided_slice %93 {offsets = [0, 0], sizes = [8, 32], strides = [1, 1]} : vector<8x96xf32> to vector<8x32xf32>
    %101 = vector.extract_strided_slice %100 {offsets = [0, 0], sizes = [8, 16], strides = [1, 1]} : vector<8x32xf32> to vector<8x16xf32>
    %102 = vector.extract_strided_slice %101 {offsets = [0, 8], sizes = [8, 8], strides = [1, 1]} : vector<8x16xf32> to vector<8x8xf32>
    %103 = vector.extract_strided_slice %101 {offsets = [0, 0], sizes = [8, 8], strides = [1, 1]} : vector<8x16xf32> to vector<8x8xf32>
    %104 = tpu.concatenate %102, %103 in 1 : vector<8x8xf32>, vector<8x8xf32> -> vector<8x16xf32>
    %105 = arith.mulf %101, %27 : vector<8x16xf32>
    %106 = arith.mulf %104, %28 : vector<8x16xf32>
    %107 = arith.addf %105, %106 : vector<8x16xf32>
    %108 = vector.extract_strided_slice %100 {offsets = [0, 16], sizes = [8, 16], strides = [1, 1]} : vector<8x32xf32> to vector<8x16xf32>
    %109 = vector.extract_strided_slice %108 {offsets = [0, 8], sizes = [8, 8], strides = [1, 1]} : vector<8x16xf32> to vector<8x8xf32>
    %110 = vector.extract_strided_slice %108 {offsets = [0, 0], sizes = [8, 8], strides = [1, 1]} : vector<8x16xf32> to vector<8x8xf32>
    %111 = tpu.concatenate %109, %110 in 1 : vector<8x8xf32>, vector<8x8xf32> -> vector<8x16xf32>
    %112 = arith.mulf %108, %27 : vector<8x16xf32>
    %113 = arith.mulf %111, %28 : vector<8x16xf32>
    %114 = arith.addf %112, %113 : vector<8x16xf32>
    %115 = vector.shape_cast %107 : vector<8x16xf32> to vector<1x8x16xf32>
    %116 = vector.shape_cast %114 : vector<8x16xf32> to vector<1x8x16xf32>
    %117 = tpu.concatenate %115, %116 in 0 : vector<1x8x16xf32>, vector<1x8x16xf32> -> vector<2x8x16xf32>
    %118 = vector.extract_strided_slice %93 {offsets = [0, 32], sizes = [8, 32], strides = [1, 1]} : vector<8x96xf32> to vector<8x32xf32>
    %119 = vector.extract_strided_slice %118 {offsets = [0, 0], sizes = [8, 16], strides = [1, 1]} : vector<8x32xf32> to vector<8x16xf32>
    %120 = vector.extract_strided_slice %119 {offsets = [0, 8], sizes = [8, 8], strides = [1, 1]} : vector<8x16xf32> to vector<8x8xf32>
    %121 = vector.extract_strided_slice %119 {offsets = [0, 0], sizes = [8, 8], strides = [1, 1]} : vector<8x16xf32> to vector<8x8xf32>
    %122 = tpu.concatenate %120, %121 in 1 : vector<8x8xf32>, vector<8x8xf32> -> vector<8x16xf32>
    %123 = arith.mulf %119, %27 : vector<8x16xf32>
    %124 = arith.mulf %122, %28 : vector<8x16xf32>
    %125 = arith.addf %123, %124 : vector<8x16xf32>
    %126 = vector.extract_strided_slice %118 {offsets = [0, 16], sizes = [8, 16], strides = [1, 1]} : vector<8x32xf32> to vector<8x16xf32>
    %127 = vector.extract_strided_slice %126 {offsets = [0, 8], sizes = [8, 8], strides = [1, 1]} : vector<8x16xf32> to vector<8x8xf32>
    %128 = vector.extract_strided_slice %126 {offsets = [0, 0], sizes = [8, 8], strides = [1, 1]} : vector<8x16xf32> to vector<8x8xf32>
    %129 = tpu.concatenate %127, %128 in 1 : vector<8x8xf32>, vector<8x8xf32> -> vector<8x16xf32>
    %130 = arith.mulf %126, %27 : vector<8x16xf32>
    %131 = arith.mulf %129, %28 : vector<8x16xf32>
    %132 = arith.addf %130, %131 : vector<8x16xf32>
    %133 = vector.shape_cast %125 : vector<8x16xf32> to vector<1x8x16xf32>
    %134 = vector.shape_cast %132 : vector<8x16xf32> to vector<1x8x16xf32>
    %135 = tpu.concatenate %133, %134 in 0 : vector<1x8x16xf32>, vector<1x8x16xf32> -> vector<2x8x16xf32>
    %136 = vector.extract_strided_slice %93 {offsets = [0, 64], sizes = [8, 32], strides = [1, 1]} : vector<8x96xf32> to vector<8x32xf32>
    %137 = vector.extract_strided_slice %136 {offsets = [0, 0], sizes = [8, 16], strides = [1, 1]} : vector<8x32xf32> to vector<8x16xf32>
    %138 = vector.extract_strided_slice %136 {offsets = [0, 16], sizes = [8, 16], strides = [1, 1]} : vector<8x32xf32> to vector<8x16xf32>
    %139 = vector.shape_cast %137 : vector<8x16xf32> to vector<1x8x16xf32>
    %140 = vector.shape_cast %138 : vector<8x16xf32> to vector<1x8x16xf32>
    %141 = tpu.concatenate %139, %140 in 0 : vector<1x8x16xf32>, vector<1x8x16xf32> -> vector<2x8x16xf32>
    %142 = arith.truncf %117 : vector<2x8x16xf32> to vector<2x8x16xbf16>
    %143 = arith.truncf %135 : vector<2x8x16xf32> to vector<2x8x16xbf16>
    "tpu.trace_start"() <{level = 10 : i32, message = "htd,hsd->hts"}> : () -> ()
    %cst_40 = arith.constant dense<0.000000e+00> : vector<2x8x8xf32>
    %144 = tpu.matmul %142, %143, %cst_40 {dimension_numbers = #tpu.dot_dimension_numbers<[2], [2], [1], [1], [0, 0, 0, 1, 1, 1], [0], [0]>} : vector<2x8x16xbf16>, vector<2x8x16xbf16>, vector<2x8x8xf32> -> vector<2x8x8xf32>
    "tpu.trace_stop"() : () -> ()
    %145 = vector.shape_cast %99 : vector<8x8xf32> to vector<1x8x8xf32>
    %146 = vector.broadcast %145 : vector<1x8x8xf32> to vector<2x8x8xf32>
    %147 = arith.addf %144, %146 : vector<2x8x8xf32>
    %cst_41 = arith.constant dense<0xFF800000> : vector<2x8xf32>
    %148 = vector.multi_reduction <maximumf>, %147, %cst_41 [2] : vector<2x8x8xf32> to vector<2x8xf32>
    %149 = vector.shape_cast %148 : vector<2x8xf32> to vector<2x8x1xf32>
    %150 = vector.broadcast %149 : vector<2x8x1xf32> to vector<2x8x8xf32>
    %151 = arith.subf %147, %150 : vector<2x8x8xf32>
    %152 = math.exp %151 : vector<2x8x8xf32>
    %cst_42 = arith.constant dense<0.000000e+00> : vector<2x8xf32>
    %153 = vector.multi_reduction <add>, %152, %cst_42 [2] : vector<2x8x8xf32> to vector<2x8xf32>
    %154 = vector.shape_cast %153 : vector<2x8xf32> to vector<2x8x1xf32>
    %155 = tpu.reciprocal %154 {approx = true} : vector<2x8x1xf32> -> vector<2x8x1xf32>
    %156 = vector.broadcast %155 : vector<2x8x1xf32> to vector<2x8x8xf32>
    %157 = arith.mulf %152, %156 : vector<2x8x8xf32>
    %158 = arith.truncf %157 : vector<2x8x8xf32> to vector<2x8x8xbf16>
    %159 = arith.truncf %141 : vector<2x8x16xf32> to vector<2x8x16xbf16>
    "tpu.trace_start"() <{level = 10 : i32, message = "hts,hsd->htd"}> : () -> ()
    %cst_43 = arith.constant dense<0.000000e+00> : vector<2x8x16xf32>
    %160 = tpu.matmul %158, %159, %cst_43 {dimension_numbers = #tpu.dot_dimension_numbers<[2], [1], [1], [2], [0, 0, 0, 1, 1, 2], [0], [0]>} : vector<2x8x8xbf16>, vector<2x8x16xbf16>, vector<2x8x16xf32> -> vector<2x8x16xf32>
    "tpu.trace_stop"() : () -> ()
    %161 = vector.extract_strided_slice %160 {offsets = [0, 0, 0], sizes = [1, 8, 16], strides = [1, 1, 1]} : vector<2x8x16xf32> to vector<1x8x16xf32>
    %162 = vector.shape_cast %161 : vector<1x8x16xf32> to vector<8x16xf32>
    %163 = vector.extract_strided_slice %160 {offsets = [1, 0, 0], sizes = [1, 8, 16], strides = [1, 1, 1]} : vector<2x8x16xf32> to vector<1x8x16xf32>
    %164 = vector.shape_cast %163 : vector<1x8x16xf32> to vector<8x16xf32>
    %165 = tpu.concatenate %162, %164 in 1 : vector<8x16xf32>, vector<8x16xf32> -> vector<8x32xf32>
    %166 = arith.truncf %165 : vector<8x32xf32> to vector<8x32xbf16>
    %c0_44 = arith.constant 0 : index
    %c0_45 = arith.constant 0 : index
    %c0_46 = arith.constant 0 : index
    %167 = vector.load %arg12[%c0_44, %c0_45, %c0_46] : memref<1x32x32xbf16, #tpu.memory_space<vmem>>, vector<1x32x32xbf16>
    %168 = vector.shape_cast %167 : vector<1x32x32xbf16> to vector<32x32xbf16>
    %cst_47 = arith.constant dense<0.000000e+00> : vector<8x32xf32>
    %169 = tpu.matmul %166, %168, %cst_47 {dimension_numbers = #tpu.dot_dimension_numbers<[1], [1], [0], [0], [0, 0, 1, 0], [], []>} : vector<8x32xbf16>, vector<32x32xbf16>, vector<8x32xf32> -> vector<8x32xf32>
    %170 = arith.addf %90, %169 : vector<8x32xf32>
    %c0_48 = arith.constant 0 : index
    %c0_49 = arith.constant 0 : index
    %c0_50 = arith.constant 0 : index
    %171 = vector.load %arg13[%c0_48, %c0_49, %c0_50] : memref<1x1x32xf32, #tpu.memory_space<vmem>>, vector<1x1x32xf32>
    %172 = vector.shape_cast %171 : vector<1x1x32xf32> to vector<1x32xf32>
    %cst_51 = arith.constant dense<0.000000e+00> : vector<8xf32>
    %173 = vector.multi_reduction <add>, %170, %cst_51 [1] : vector<8x32xf32> to vector<8xf32>
    %174 = vector.shape_cast %173 : vector<8xf32> to vector<8x1xf32>
    %cst_52 = arith.constant 3.200000e+01 : f32
    %175 = vector.broadcast %cst_52 : f32 to vector<8x1xf32>
    %176 = arith.divf %174, %175 : vector<8x1xf32>
    %177 = vector.broadcast %176 : vector<8x1xf32> to vector<8x32xf32>
    %178 = arith.subf %170, %177 : vector<8x32xf32>
    %179 = arith.mulf %178, %178 : vector<8x32xf32>
    %cst_53 = arith.constant dense<0.000000e+00> : vector<8xf32>
    %180 = vector.multi_reduction <add>, %179, %cst_53 [1] : vector<8x32xf32> to vector<8xf32>
    %181 = vector.shape_cast %180 : vector<8xf32> to vector<8x1xf32>
    %cst_54 = arith.constant 3.200000e+01 : f32
    %182 = vector.broadcast %cst_54 : f32 to vector<8x1xf32>
    %183 = arith.divf %181, %182 : vector<8x1xf32>
    %184 = vector.broadcast %176 : vector<8x1xf32> to vector<8x32xf32>
    %185 = arith.subf %170, %184 : vector<8x32xf32>
    %cst_55 = arith.constant 9.99999974E-6 : f32
    %186 = vector.broadcast %cst_55 : f32 to vector<8x1xf32>
    %187 = arith.addf %183, %186 : vector<8x1xf32>
    %188 = math.rsqrt %187 : vector<8x1xf32>
    %189 = vector.broadcast %188 : vector<8x1xf32> to vector<8x32xf32>
    %190 = arith.mulf %185, %189 : vector<8x32xf32>
    %191 = vector.broadcast %172 : vector<1x32xf32> to vector<8x32xf32>
    %192 = arith.mulf %190, %191 : vector<8x32xf32>
    %193 = arith.truncf %192 : vector<8x32xf32> to vector<8x32xbf16>
    %c0_56 = arith.constant 0 : index
    %c0_57 = arith.constant 0 : index
    %c0_58 = arith.constant 0 : index
    %194 = vector.load %arg14[%c0_56, %c0_57, %c0_58] : memref<1x128x32xbf16, #tpu.memory_space<vmem>>, vector<1x128x32xbf16>
    %195 = vector.shape_cast %194 : vector<1x128x32xbf16> to vector<128x32xbf16>
    %cst_59 = arith.constant dense<0.000000e+00> : vector<8x128xf32>
    %196 = tpu.matmul %193, %195, %cst_59 {dimension_numbers = #tpu.dot_dimension_numbers<[1], [1], [0], [0], [0, 0, 1, 0], [], []>} : vector<8x32xbf16>, vector<128x32xbf16>, vector<8x128xf32> -> vector<8x128xf32>
    %cst_60 = arith.constant 5.000000e-01 : f32
    %197 = vector.broadcast %cst_60 : f32 to vector<8x128xf32>
    %198 = arith.mulf %197, %196 : vector<8x128xf32>
    %cst_61 = arith.constant 0.707106769 : f32
    %199 = vector.broadcast %cst_61 : f32 to vector<8x128xf32>
    %200 = arith.mulf %196, %199 : vector<8x128xf32>
    %201 = math.erf %200 : vector<8x128xf32>
    %cst_62 = arith.constant 1.000000e+00 : f32
    %202 = vector.broadcast %cst_62 : f32 to vector<8x128xf32>
    %203 = arith.addf %202, %201 : vector<8x128xf32>
    %204 = arith.mulf %198, %203 : vector<8x128xf32>
    %205 = arith.truncf %204 : vector<8x128xf32> to vector<8x128xbf16>
    %c0_63 = arith.constant 0 : index
    %c0_64 = arith.constant 0 : index
    %c0_65 = arith.constant 0 : index
    %206 = vector.load %arg15[%c0_63, %c0_64, %c0_65] : memref<1x32x128xbf16, #tpu.memory_space<vmem>>, vector<1x32x128xbf16>
    %207 = vector.shape_cast %206 : vector<1x32x128xbf16> to vector<32x128xbf16>
    %cst_66 = arith.constant dense<0.000000e+00> : vector<8x32xf32>
    %208 = tpu.matmul %205, %207, %cst_66 {dimension_numbers = #tpu.dot_dimension_numbers<[1], [1], [0], [0], [0, 0, 1, 0], [], []>} : vector<8x128xbf16>, vector<32x128xbf16>, vector<8x32xf32> -> vector<8x32xf32>
    %209 = arith.addf %170, %208 : vector<8x32xf32>
    %c0_67 = arith.constant 0 : index
    %c0_68 = arith.constant 0 : index
    %210 = vector.load %arg17[%c0_67, %c0_68] : memref<8x32xf32, #tpu.memory_space<vmem>>, vector<8x32xf32>
    tpu.vector_store %arg17[%c0_67, %c0_68], %209 {strides = array<i32>} : memref<8x32xf32, #tpu.memory_space<vmem>>, vector<8x32xf32>,
    %c1_i32 = arith.constant 1 : i32
    %211 = arith.cmpi eq, %arg1, %c1_i32 : i32
    %212 = arith.extui %211 : i1 to i32
    %c0_i32_69 = arith.constant 0 : i32
    %213 = arith.cmpi ne, %212, %c0_i32_69 : i32
    scf.if %213 {
      %c0_70 = arith.constant 0 : index
      %c0_71 = arith.constant 0 : index
      %c0_72 = arith.constant 0 : index
      %214 = vector.load %arg16[%c0_70, %c0_71, %c0_72] : memref<1x8x32xf32, #tpu.memory_space<vmem>>, vector<1x8x32xf32>
      %215 = vector.shape_cast %214 : vector<1x8x32xf32> to vector<8x32xf32>
      %216 = vector.shape_cast %209 : vector<8x32xf32> to vector<1x8x32xf32>
      tpu.vector_store %arg16[%c0_70, %c0_71, %c0_72], %216 {strides = array<i32>} : memref<1x8x32xf32, #tpu.memory_space<vmem>>, vector<1x8x32xf32>,
    } else {
    }
    return
  }
  func.func @transform_0(%arg0: i32, %arg1: i32, %arg2: memref<2xi32, #tpu.memory_space<smem>>) -> (i32, i32, i32) {
    %c0_i32 = arith.constant 0 : i32
    %c0_i32_0 = arith.constant 0 : i32
    %c0_i32_1 = arith.constant 0 : i32
    return %arg0, %c0_i32, %c0_i32_0 : i32, i32, i32
  }
  func.func @transform_1(%arg0: i32, %arg1: i32, %arg2: memref<2xi32, #tpu.memory_space<smem>>) -> (i32, i32, i32) {
    %c0_i32 = arith.constant 0 : i32
    %c0_i32_0 = arith.constant 0 : i32
    %c0_i32_1 = arith.constant 0 : i32
    return %arg0, %c0_i32, %c0_i32_0 : i32, i32, i32
  }
  func.func @transform_2(%arg0: i32, %arg1: i32, %arg2: memref<2xi32, #tpu.memory_space<smem>>) -> (i32, i32) {
    %c0_i32 = arith.constant 0 : i32
    %c0_i32_0 = arith.constant 0 : i32
    %c0_i32_1 = arith.constant 0 : i32
    return %c0_i32, %c0_i32_0 : i32, i32
  }
  func.func @transform_3(%arg0: i32, %arg1: i32, %arg2: memref<2xi32, #tpu.memory_space<smem>>) -> (i32, i32) {
    %c0_i32 = arith.constant 0 : i32
    %c0_i32_0 = arith.constant 0 : i32
    %c0_i32_1 = arith.constant 0 : i32
    return %c0_i32, %c0_i32_0 : i32, i32
  }
  func.func @transform_4(%arg0: i32, %arg1: i32, %arg2: memref<2xi32, #tpu.memory_space<smem>>) -> (i32, i32, i32) {
    %c0_i32 = arith.constant 0 : i32
    %c0_i32_0 = arith.constant 0 : i32
    %c0_i32_1 = arith.constant 0 : i32
    return %arg1, %c0_i32, %c0_i32_0 : i32, i32, i32
  }
  func.func @transform_5(%arg0: i32, %arg1: i32, %arg2: memref<2xi32, #tpu.memory_space<smem>>) -> (i32, i32, i32) {
    %c0_i32 = arith.constant 0 : i32
    %c0_i32_0 = arith.constant 0 : i32
    %c0_i32_1 = arith.constant 0 : i32
    return %arg1, %c0_i32, %c0_i32_0 : i32, i32, i32
  }
  func.func @transform_6(%arg0: i32, %arg1: i32, %arg2: memref<2xi32, #tpu.memory_space<smem>>) -> (i32, i32, i32) {
    %c0_i32 = arith.constant 0 : i32
    %c0_i32_0 = arith.constant 0 : i32
    %c0_i32_1 = arith.constant 0 : i32
    return %arg1, %c0_i32, %c0_i32_0 : i32, i32, i32
  }
  func.func @transform_7(%arg0: i32, %arg1: i32, %arg2: memref<2xi32, #tpu.memory_space<smem>>) -> (i32, i32, i32) {
    %c0_i32 = arith.constant 0 : i32
    %c0_i32_0 = arith.constant 0 : i32
    %c0_i32_1 = arith.constant 0 : i32
    return %arg1, %c0_i32, %c0_i32_0 : i32, i32, i32
  }
  func.func @transform_8(%arg0: i32, %arg1: i32, %arg2: memref<2xi32, #tpu.memory_space<smem>>) -> (i32, i32, i32) {
    %c0_i32 = arith.constant 0 : i32
    %c0_i32_0 = arith.constant 0 : i32
    %c0_i32_1 = arith.constant 0 : i32
    return %arg1, %c0_i32, %c0_i32_0 : i32, i32, i32
  }
  func.func @transform_9(%arg0: i32, %arg1: i32, %arg2: memref<2xi32, #tpu.memory_space<smem>>) -> (i32, i32, i32) {
    %c0_i32 = arith.constant 0 : i32
    %c0_i32_0 = arith.constant 0 : i32
    %c0_i32_1 = arith.constant 0 : i32
    return %arg1, %c0_i32, %c0_i32_0 : i32, i32, i32
  }
  func.func @transform_10(%arg0: i32, %arg1: i32, %arg2: memref<2xi32, #tpu.memory_space<smem>>) -> (i32, i32, i32) {
    %c0_i32 = arith.constant 0 : i32
    %c0_i32_0 = arith.constant 0 : i32
    %c0_i32_1 = arith.constant 0 : i32
    return %arg1, %c0_i32, %c0_i32_0 : i32, i32, i32
  }
  func.func @transform_11(%arg0: i32, %arg1: i32, %arg2: memref<2xi32, #tpu.memory_space<smem>>) -> (i32, i32, i32) {
    %c0_i32 = arith.constant 0 : i32
    %c0_i32_0 = arith.constant 0 : i32
    %c0_i32_1 = arith.constant 0 : i32
    return %arg1, %c0_i32, %c0_i32_0 : i32, i32, i32
  }
  func.func @transform_12(%arg0: i32, %arg1: i32, %arg2: memref<2xi32, #tpu.memory_space<smem>>) -> (i32, i32, i32) {
    %c0_i32 = arith.constant 0 : i32
    %c0_i32_0 = arith.constant 0 : i32
    %c0_i32_1 = arith.constant 0 : i32
    return %arg1, %c0_i32, %c0_i32_0 : i32, i32, i32
  }
  func.func @transform_13(%arg0: i32, %arg1: i32, %arg2: memref<2xi32, #tpu.memory_space<smem>>) -> (i32, i32, i32) {
    %c0_i32 = arith.constant 0 : i32
    %c0_i32_0 = arith.constant 0 : i32
    %c0_i32_1 = arith.constant 0 : i32
    return %arg0, %c0_i32, %c0_i32_0 : i32, i32, i32
  }
}

</mosaic_0001>

<llo_original>
// kernel: ctc_attention_decoder_forward.3
$region0: #{ctc_attention_decoder_forward.3}
  #allocation0 [shape = 'u32[]', space=smem, size = 0x4, offset = 0x4, fixed_abs, tag = 'smem constant byte address 0x4 - core index']
  #allocation1 [shape = 'u32[144,128]{1,0:T(1,128)}', space=vmem, size = 0x12000, scoped, tag = 'internal scratch']
  #allocation2 [shape = 'bf16[16,32]{1,0:T(16,128)(2,1)}', space=vmem, size = 0x1000, scoped, tag = 'scratch operand']
  #allocation3 [shape = 'f32[16,1]{1,0:T(8,128)}', space=vmem, size = 0x2000, scoped, tag = 'scratch operand']
  #allocation4 [shape = 'f32[16,1]{1,0:T(8,128)}', space=vmem, size = 0x2000, scoped, tag = 'scratch operand']
  #allocation5 [shape = 'f32[16,1]{1,0:T(8,128)}', space=vmem, size = 0x2000, scoped, tag = 'scratch operand']
  #allocation6 [shape = 'f32[2]{0:T(128)}', space=smem, size = 0x200, scoped, tag = 'scratch operand']
  %s0 = inlined_call_operand.vmem [shape: f32[16,32], index: 0, kind: input, shape index: {}]
  %s1 = inlined_call_operand.vmem [shape: f32[1,32], index: 1, kind: input, shape index: {}]
  %s2 = inlined_call_operand.vmem [shape: bf16[16,32], index: 2, kind: input, shape index: {}]
  %s3 = inlined_call_operand.vmem [shape: s32[16,1], index: 3, kind: input, shape index: {}]
  %s4 = inlined_call_operand.hbm [shape: f32[1], index: 4, kind: output, shape index: {}]
  %s5 = sld [smem:[#allocation0]]
  $region42: #{ctc_attention_decoder_forward.3} parent=0
    _
  %s7 = ssub.s32 1, %s5
  %s8 = scalar_select 0, %s7, %s5
  $region1: #{ctc_attention_decoder_forward.3} parent=0
    #allocation7 [shape = 'u8[512]{0}', space=smem, size = 0x200, scoped, tag = 'output window, operand 0, single buffered']
    #allocation8 [shape = 's32[1]{0}', space=sflag, size = 0x4, scoped, tag = 'scoped memory for ctc_attention_decoder_forward.3']
    %9 = vsyncpa [#allocation8], 0
    // Predicated region
    $region2: #{ctc_attention_decoder_forward.3} parent=1 // pred_check
      _
    $region3: #{ctc_attention_decoder_forward.3} parent=1 // pred_check_branch
      %11 = sbr.rel (0) target = $region5
    $region4: #{ctc_attention_decoder_forward.3} parent=1 // pred_region
      _
    $region5: #{ctc_attention_decoder_forward.3} parent=1 // pred_fallthru
      _
    // Predicated region
    $region6: #{ctc_attention_decoder_forward.3} parent=1 // pred_check
      _
    $region7: #{ctc_attention_decoder_forward.3} parent=1 // pred_check_branch
      %13 = sbr.rel (0) target = $region9
    $region8: #{ctc_attention_decoder_forward.3} parent=1 // pred_region
      _
    $region9: #{ctc_attention_decoder_forward.3} parent=1 // pred_fallthru
      _
    // Predicated region
    $region10: #{ctc_attention_decoder_forward.3} parent=1 // pred_check
      _
    $region11: #{ctc_attention_decoder_forward.3} parent=1 // pred_check_branch
      %15 = sbr.rel (0) target = $region13
    $region12: #{ctc_attention_decoder_forward.3} parent=1 // pred_region
      _
    $region13: #{ctc_attention_decoder_forward.3} parent=1 // pred_fallthru
      _
    // Predicated region
    $region14: #{ctc_attention_decoder_forward.3} parent=1 // pred_check
      _
    $region15: #{ctc_attention_decoder_forward.3} parent=1 // pred_check_branch
      %17 = sbr.rel (0) target = $region17
    $region16: #{ctc_attention_decoder_forward.3} parent=1 // pred_region
      _
    $region17: #{ctc_attention_decoder_forward.3} parent=1 // pred_fallthru
      _
    %p19 = scmp.eq.s32.totalorder 0, 0
    %p20 = scmp.eq.s32.totalorder 0, 0
    %p21 = pnand %p19, %p20
    %p22 = pneg %p21
    // Predicated region
    $region18: #{ctc_attention_decoder_forward.3} parent=1 // pred_check
      _
    $region19: #{ctc_attention_decoder_forward.3} parent=1 // pred_check_branch
      %24 = sbr.rel (%p21) target = $region21
    $region20: #{ctc_attention_decoder_forward.3} parent=1 // pred_region
      %s25 = scalar_lea.smem [#allocation6], 0
      %26 = sst [smem:[%s25]] 0.0
      %s27 = scalar_lea.smem [#allocation6], 1
      %28 = sst [smem:[%s27]] 0.0
    $region21: #{ctc_attention_decoder_forward.3} parent=1 // pred_fallthru
      _
    // Predicated region
    $region22: #{ctc_attention_decoder_forward.3} parent=1 // pred_check
      %p29 = pneg %p20
    $region23: #{ctc_attention_decoder_forward.3} parent=1 // pred_check_branch
      %31 = sbr.rel (%p29) target = $region25
    $region24: #{ctc_attention_decoder_forward.3} parent=1 // pred_region
      %v32 = vld [vmem:[%s0] sm:$0xff]
      %v33 = vld [vmem:[%s0 + $0x8] sm:$0xff]
      %v34 = vld [vmem:[%s1] sm:$0x1]
      %vm35 = vcmask 261120
      %v36 = vsel %vm35, %v32, 0.0
      %37 = vadd.xlane.f32.xlu0 %v36
      %v38 = vpop.xlane.xlu0 %37
      %v39 = vsel %vm35, %v33, 0.0
      %40 = vadd.xlane.f32.xlu0 %v39
      %v41 = vpop.xlane.xlu0 %40
      %v42 = vrcp.pop 32.0
      %v43 = vmul.f32 %v38, %v42
      %v44 = vmul.f32 %v41, %v42
      %v45 = vsub.f32 %v32, %v43
      %v46 = vsub.f32 %v33, %v44
      %v47 = vmul.f32 %v45, %v45
      %v48 = vmul.f32 %v46, %v46
      %v49 = vsel %vm35, %v47, 0.0
      %50 = vadd.xlane.f32.xlu0 %v49
      %v51 = vpop.xlane.xlu0 %50
      %v52 = vsel %vm35, %v48, 0.0
      %53 = vadd.xlane.f32.xlu0 %v52
      %v54 = vpop.xlane.xlu0 %53
      %v55 = vmul.f32 %v51, %v42
      %v56 = vmul.f32 %v54, %v42
      %v57 = vadd.f32 %v55, 1e-05
      %v58 = vadd.f32 %v56, 1e-05
      %v59 = vrsqrt.pop %v57
      %v60 = vrsqrt.pop %v58
      %v61 = vmul.f32 %v45, %v59
      %v62 = vmul.f32 %v46, %v60
      %v64 = vlaneseq
      %v65 = vshrl.u32 %v64, 7
      %v66 = vsub.s32 0, %v65
      %v67 = vrot.slane %v34, %v66
      %v69 = vmul.f32 %v61, %v67
      %v70 = vmul.f32 %v62, %v67
      %v71 = vpack.c.bf16 %v70, %v69
      %72 = vst.msk [vmem:[#allocation2] sm:$0xff] %vm35, %v71
      %vm73 = vcmask 7168
      %74 = vst.msk [vmem:[#allocation3] sm:$0xff] %vm73, -1e+30
      %75 = vst.msk [vmem:[#allocation3 + $0x8] sm:$0xff] %vm73, -1e+30
      %76 = vst.msk [vmem:[#allocation4] sm:$0xff] %vm73, 0.0
      %77 = vst.msk [vmem:[#allocation4 + $0x8] sm:$0xff] %vm73, 0.0
      %78 = vst.msk [vmem:[#allocation5] sm:$0xff] %vm73, 0.0
      %79 = vst.msk [vmem:[#allocation5 + $0x8] sm:$0xff] %vm73, 0.0
    $region25: #{ctc_attention_decoder_forward.3} parent=1 // pred_fallthru
      _
    %v80 = vld [vmem:[#allocation2] sm:$0xff]
    %v81 = vld [vmem:[%s2] sm:$0xf]
    %v82 = vld [vmem:[%s2 + $0x4] sm:$0xf]
    %v85 = vunpack.c.l.b16 %v81
    %v86 = vunpack.c.l.b16 %v82
    %v87 = vpack.c.b16 %v86, %v85
    %vm88 = vcmask 261120
    %v90 = vsel %vm88, %v80, 0
    %v93 = vsel %vm88, %v87, 0
    %95 = vmatprep.subr.bf16.mxu0 0
    %96 = vmatpush1.bf16.xpose.msra.mxu0 %v93
    %97 = vmatprep.subr.bf16.mxu0 0
    %98 = vmatpush1.bf16.xpose.msra.mxu0 0
    %99 = vmatprep.subr.bf16.mxu0 0
    %100 = vmatpush1.bf16.xpose.msra.mxu0 0
    %101 = vmatprep.subr.bf16.mxu0 0
    %102 = vmatpush1.bf16.xpose.msra.mxu0 0
    %103 = vmatprep.subr.bf16.mxu0 0
    %104 = vmatpush1.bf16.xpose.msra.mxu0 0
    %105 = vmatprep.subr.bf16.mxu0 0
    %106 = vmatpush1.bf16.xpose.msra.mxu0 0
    %107 = vmatprep.subr.bf16.mxu0 0
    %108 = vmatpush1.bf16.xpose.msra.mxu0 0
    %109 = vmatprep.subr.bf16.mxu0 0
    %110 = vmatpush1.bf16.xpose.msra.mxu0 0
    %111 = vmatprep.subr.bf16.mxu0 0
    %112 = vmatpush1.bf16.xpose.msra.mxu0 0
    %113 = vmatprep.subr.bf16.mxu0 0
    %114 = vmatpush1.bf16.xpose.msra.mxu0 0
    %115 = vmatprep.subr.bf16.mxu0 0
    %116 = vmatpush1.bf16.xpose.msra.mxu0 0
    %117 = vmatprep.subr.bf16.mxu0 0
    %118 = vmatpush1.bf16.xpose.msra.mxu0 0
    %119 = vmatprep.subr.bf16.mxu0 0
    %120 = vmatpush1.bf16.xpose.msra.mxu0 0
    %121 = vmatprep.subr.bf16.mxu0 0
    %122 = vmatpush1.bf16.xpose.msra.mxu0 0
    %123 = vmatprep.subr.bf16.mxu0 0
    %124 = vmatpush1.bf16.xpose.msra.mxu0 0
    %125 = vmatprep.subr.bf16.mxu0 0
    %126 = vmatpush1.bf16.xpose.msra.mxu0 0
    %127 = vmatprep.mubr.bf16.mxu0 0
    %128 = vmatmul.mubr.bf16.gmra.mrb[0].mxu0 %v90
    %v129 = vpop.f32.mrb[0].mxu0
    %v130 = vadd.f32 0.0, %v129
    %v131 = vpop.f32.mrb[0].mxu0
    %v132 = vpop.f32.mrb[0].mxu0
    %v133 = vadd.f32 0.0, %v132
    %v134 = vpop.f32.mrb[0].mxu0
    %135 = vdwg.mxu0
    %v136 = vlaneseq
    %v137 = vand.u32 %v136, 127
    %s138 = smul.u32 0, 16
    %v139 = vstv %s138
    %v140 = vadd.s32 %v137, %v139
    %v141 = vld [vmem:[%s3] sm:$0xff]
    %v142 = vld [vmem:[%s3 + $0x8] sm:$0xff]
    %v143 = vld [vmem:[#allocation3] sm:$0xff]
    %v144 = vld [vmem:[#allocation3 + $0x8] sm:$0xff]
    %vm145 = vcmask 130048
    %v146 = vsel %vm145, %v130, -inf
    %147 = vmax.xlane.f32.xlu0 %v146
    %v148 = vpop.xlane.xlu0 %147
    %v149 = vsel %vm145, %v133, -inf
    %150 = vmax.xlane.f32.xlu0 %v149
    %v151 = vpop.xlane.xlu0 %150
    %v152 = vmax.f32 %v143, %v148
    %v153 = vmax.f32 %v144, %v151
    %v154 = vld [vmem:[#allocation4] sm:$0xff]
    %v155 = vld [vmem:[#allocation4 + $0x8] sm:$0xff]
    %v156 = vsub.f32 %v143, %v152
    %v157 = vsub.f32 %v144, %v153
    %v158 = vmul.f32 %v156, 1.442695
    %v159 = vpow.pop %v158
    %v160 = vmul.f32 %v157, 1.442695
    %v161 = vpow.pop %v160
    %v162 = vmul.f32 %v154, %v159
    %v163 = vmul.f32 %v155, %v161
    %165 = vset.pattern.permute.xlu0 0
    %166 = vperm.xlu0 %165, %v152
    %v167 = vpop.permute.xlu0 %166
    %170 = vset.pattern.permute.xlu0 0
    %171 = vperm.xlu0 %170, %v153
    %v172 = vpop.permute.xlu0 %171
    %v174 = vsub.f32 %v130, %v167
    %v175 = vsub.f32 %v133, %v172
    %v176 = vmul.f32 %v174, 1.442695
    %v177 = vpow.pop %v176
    %v178 = vmul.f32 %v175, 1.442695
    %v179 = vpow.pop %v178
    %v180 = vsel %vm145, %v177, 0.0
    %181 = vadd.xlane.f32.xlu0 %v180
    %v182 = vpop.xlane.xlu0 %181
    %v183 = vsel %vm145, %v179, 0.0
    %184 = vadd.xlane.f32.xlu0 %v183
    %v185 = vpop.xlane.xlu0 %184
    %v186 = vadd.f32 %v162, %v182
    %v187 = vadd.f32 %v163, %v185
    %vm188 = vcmask 7168
    %189 = vst.msk [vmem:[#allocation4] sm:$0xff] %vm188, %v186
    %190 = vst.msk [vmem:[#allocation4 + $0x8] sm:$0xff] %vm188, %v187
    %191 = vst.msk [vmem:[#allocation3] sm:$0xff] %vm188, %v152
    %192 = vst.msk [vmem:[#allocation3 + $0x8] sm:$0xff] %vm188, %v153
    %v193 = vld [vmem:[#allocation5] sm:$0xff]
    %v194 = vld [vmem:[#allocation5 + $0x8] sm:$0xff]
    %195 = vset.pattern.permute.xlu0 0
    %196 = vperm.xlu0 %195, %v141
    %v197 = vpop.permute.xlu0 %196
    %198 = vset.pattern.permute.xlu0 0
    %199 = vperm.xlu0 %198, %v142
    %v200 = vpop.permute.xlu0 %199
    %vm201 = vcmp.eq.s32.totalorder %v140, %v197
    %vm202 = vcmp.eq.s32.totalorder %v140, %v200
    %v203 = vsel %vm201, %v130, 0.0
    %v204 = vsel %vm202, %v133, 0.0
    %v205 = vsel %vm145, %v203, 0.0
    %206 = vadd.xlane.f32.xlu0 %v205
    %v207 = vpop.xlane.xlu0 %206
    %v208 = vsel %vm145, %v204, 0.0
    %209 = vadd.xlane.f32.xlu0 %v208
    %v210 = vpop.xlane.xlu0 %209
    %v211 = vadd.f32 %v193, %v207
    %v212 = vadd.f32 %v194, %v210
    %213 = vst.msk [vmem:[#allocation5] sm:$0xff] %vm188, %v211
    %214 = vst.msk [vmem:[#allocation5 + $0x8] sm:$0xff] %vm188, %v212
    // Predicated region
    $region26: #{ctc_attention_decoder_forward.3} parent=1 // pred_check
      %p215 = pneg %p20
    $region27: #{ctc_attention_decoder_forward.3} parent=1 // pred_check_branch
      %217 = sbr.rel (%p215) target = $region29
    $region28: #{ctc_attention_decoder_forward.3} parent=1 // pred_region
      %v218 = vld [vmem:[#allocation4] sm:$0xff]
      %v219 = vld [vmem:[#allocation4 + $0x8] sm:$0xff]
      %v220 = vlog2.pop %v218
      %v221 = vmul.f32 %v220, 0.6931472
      %v222 = vlog2.pop %v219
      %v223 = vmul.f32 %v222, 0.6931472
      %v224 = vld [vmem:[#allocation3] sm:$0xff]
      %v225 = vld [vmem:[#allocation3 + $0x8] sm:$0xff]
      %v226 = vadd.f32 %v221, %v224
      %v227 = vadd.f32 %v223, %v225
      %vm228 = vcmp.ne.s32.totalorder %v141, 0
      %vm229 = vcmp.ne.s32.totalorder %v142, 0
      %v230 = vsel %vm228, 1, 0
      %v231 = vsel %vm229, 1, 0
      %v232 = vcvt.s32.f32 %v230
      %v233 = vcvt.s32.f32 %v231
      %s234 = sld [smem:[#allocation6]]
      %v235 = vld [vmem:[#allocation5] sm:$0xff]
      %v236 = vld [vmem:[#allocation5 + $0x8] sm:$0xff]
      %v237 = vsub.f32 %v226, %v235
      %v238 = vsub.f32 %v227, %v236
      %v239 = vmul.f32 %v237, %v232
      %v240 = vmul.f32 %v238, %v233
      %v241 = vsel %vm188, %v239, 0.0
      %v242 = vsel %vm188, %v240, 0.0
      %v243 = vadd.f32 %v241, %v242
      %244 = vadd.xlane.f32.xlu0 %v243
      %v245 = vpop.xlane.xlu0 %244
      %v246 = vrot.slane %v245, 4
      %v247 = vadd.f32 %v245, %v246
      %v248 = vrot.slane %v247, 2
      %v249 = vadd.f32 %v247, %v248
      %v250 = vrot.slane %v249, 1
      %v251 = vadd.f32 %v249, %v250
      %s252 = vtos %v251
      %s253 = sadd.f32 %s234, %s252
      %s254 = scalar_lea.smem [#allocation6], 0
      %255 = sst [smem:[%s254]] %s253
      %s256 = sld [smem:[#allocation6 + $0x1]]
      %v257 = vsel %vm188, %v232, 0.0
      %v258 = vsel %vm188, %v233, 0.0
      %v259 = vadd.f32 %v257, %v258
      %260 = vadd.xlane.f32.xlu0 %v259
      %v261 = vpop.xlane.xlu0 %260
      %v262 = vrot.slane %v261, 4
      %v263 = vadd.f32 %v261, %v262
      %v264 = vrot.slane %v263, 2
      %v265 = vadd.f32 %v263, %v264
      %v266 = vrot.slane %v265, 1
      %v267 = vadd.f32 %v265, %v266
      %s268 = vtos %v267
      %s269 = sadd.f32 %s256, %s268
      %s270 = scalar_lea.smem [#allocation6], 1
      %271 = sst [smem:[%s270]] %s269
    $region29: #{ctc_attention_decoder_forward.3} parent=1 // pred_fallthru
      _
    // Predicated region
    $region30: #{ctc_attention_decoder_forward.3} parent=1 // pred_check
      _
    $region31: #{ctc_attention_decoder_forward.3} parent=1 // pred_check_branch
      %273 = sbr.rel (%p21) target = $region33
    $region32: #{ctc_attention_decoder_forward.3} parent=1 // pred_region
      %s274 = sld [smem:[#allocation6]]
      %s275 = sld [smem:[#allocation6 + $0x1]]
      %s276 = smax.f32 %s275, 1.0
      %v277 = vstv %s276
      %v278 = vrcp.pop %v277
      %s279 = vtos %v278
      %s280 = smul.f32 %s274, %s279
      %s281 = scalar_lea.smem [#allocation7], 0
      %282 = sst [smem:[%s281]] %s280
    $region33: #{ctc_attention_decoder_forward.3} parent=1 // pred_fallthru
      _
    // Predicated region
    $region34: #{ctc_attention_decoder_forward.3} parent=1 // pred_check
      _
    $region35: #{ctc_attention_decoder_forward.3} parent=1 // pred_check_branch
      %284 = sbr.rel (0) target = $region37
    $region36: #{ctc_attention_decoder_forward.3} parent=1 // pred_region
      %s286 = ssub.s32 16, 16
      %287 = vsyncadd [#allocation8], %s286
      %290 = dma.smem_to_hbm [#allocation7], 16, %s4, [#allocation8]
    $region37: #{ctc_attention_decoder_forward.3} parent=1 // pred_fallthru
      _
    // Predicated region
    $region38: #{ctc_attention_decoder_forward.3} parent=1 // pred_check
      _
    $region39: #{ctc_attention_decoder_forward.3} parent=1 // pred_check_branch
      %292 = sbr.rel (0) target = $region41
    $region40: #{ctc_attention_decoder_forward.3} parent=1 // pred_region
      %293 = dma.done [#allocation8], 16
    $region41: #{ctc_attention_decoder_forward.3} parent=1 // pred_fallthru
      _
    %294 = sfence
    %295 = vsyncpa [#allocation8], 1

// kernel: ctc_attention_decoder_forward.2
$region0: #{ctc_attention_decoder_forward.2}
  #allocation0 [shape = 'u32[]', space=smem, size = 0x4, offset = 0x4, fixed_abs, tag = 'smem constant byte address 0x4 - core index']
  #allocation1 [shape = 'u32[144,128]{1,0:T(1,128)}', space=vmem, size = 0x12000, scoped, tag = 'internal scratch']
  #allocation2 [shape = 'f32[8,32]{1,0:T(8,128)}', space=vmem, size = 0x1000, scoped, tag = 'scratch operand']
  #allocation3 [shape = 's32[1]{0}', space=sflag, size = 0x4, scoped, tag = 'scoped memory for ctc_attention_decoder_forward.2']
  #allocation4 [shape = 'u8[512]{0}', space=smem, size = 0x200, scoped, tag = 'prefetched SMEM operand 0']
  %s0 = inlined_call_operand.vmem [shape: s32[2], index: 0, kind: input, shape index: {}]
  %s1 = inlined_call_operand.vmem [shape: f32[2,8,32], index: 1, kind: input, shape index: {}]
  %s2 = inlined_call_operand.vmem [shape: bf16[2,8,32], index: 2, kind: input, shape index: {}]
  %s3 = inlined_call_operand.vmem [shape: f32[8,16], index: 3, kind: input, shape index: {}]
  %s4 = inlined_call_operand.vmem [shape: f32[8,16], index: 4, kind: input, shape index: {}]
  %s5 = inlined_call_operand.vmem [shape: f32[2,1,32], index: 5, kind: input, shape index: {}]
  %s6 = inlined_call_operand.vmem [shape: bf16[2,32,32], index: 6, kind: input, shape index: {}]
  %s7 = inlined_call_operand.vmem [shape: bf16[2,64,32], index: 7, kind: input, shape index: {}]
  %s8 = inlined_call_operand.vmem [shape: bf16[2,32,32], index: 8, kind: input, shape index: {}]
  %s9 = inlined_call_operand.vmem [shape: bf16[2,96,32], index: 9, kind: input, shape index: {}]
  %s10 = inlined_call_operand.vmem [shape: bf16[2,32,32], index: 10, kind: input, shape index: {}]
  %s11 = inlined_call_operand.vmem [shape: f32[2,1,32], index: 11, kind: input, shape index: {}]
  %s12 = inlined_call_operand.vmem [shape: bf16[2,128,32], index: 12, kind: input, shape index: {}]
  %s13 = inlined_call_operand.vmem [shape: bf16[2,32,128], index: 13, kind: input, shape index: {}]
  %s14 = inlined_call_operand.vmem [shape: f32[2,8,32], index: 14, kind: output, shape index: {}]
  %s15 = sld [smem:[#allocation0]]
  $region93: #{ctc_attention_decoder_forward.2} parent=0
    _
  %s17 = ssub.s32 1, %s15
  %s18 = scalar_select 0, %s17, %s15
  %s19 = sshll.u32 %s0, 4
  %s20 = int_to_ptr.vmem [resolvable:$true] %s19
  %22 = dma.vmem_to_smem %s20, 16, [#allocation4], [#allocation3]
  %23 = dma.done [#allocation3], 16
  %24 = sfence
  loop: start=0, step=1, limit=6
  $region2: #{ctc_attention_decoder_forward.2} parent=0 // loop_pre_header
    _
  $region3: #{ctc_attention_decoder_forward.2} parent=0 // loop_header
    %s26 = sphi 0, %s30
    %p27 = scmp.ge.s32.totalorder %s26, 6
    %s33 = sphi 0, %s45
    %s34 = sphi 0, %s41
    %s35 = sphi 0, %s33
    %s36 = sphi 0, %s34
    %s37 = sphi 0, %s35
    %s38 = sphi 0, %s36
    %s48 = sphi 0, %s50
    %s51 = sphi 0, %s48
    %s52 = sphi 0, %s51
    %s68 = sphi 0, %s52
    %s74 = sphi 0, %s76
    %s77 = sphi 0, %s74
    %s78 = sphi 0, %s77
    %s94 = sphi 0, %s78
    %s98 = sphi 0, %s98
    %s100 = sphi 0, %s98
    %s101 = sphi 0, %s100
    %s115 = sphi 0, %s101
    %s119 = sphi 0, %s119
    %s121 = sphi 0, %s119
    %s122 = sphi 0, %s121
    %s136 = sphi 0, %s122
    %s142 = sphi 0, %s144
    %s145 = sphi 0, %s142
    %s146 = sphi 0, %s145
    %s162 = sphi 0, %s146
    %s168 = sphi 0, %s170
    %s171 = sphi 0, %s168
    %s172 = sphi 0, %s171
    %s188 = sphi 0, %s172
    %s194 = sphi 0, %s196
    %s197 = sphi 0, %s194
    %s198 = sphi 0, %s197
    %s214 = sphi 0, %s198
    %s220 = sphi 0, %s222
    %s223 = sphi 0, %s220
    %s224 = sphi 0, %s223
    %s240 = sphi 0, %s224
    %s246 = sphi 0, %s248
    %s249 = sphi 0, %s246
    %s250 = sphi 0, %s249
    %s266 = sphi 0, %s250
    %s272 = sphi 0, %s274
    %s275 = sphi 0, %s272
    %s276 = sphi 0, %s275
    %s292 = sphi 0, %s276
    %s298 = sphi 0, %s300
    %s301 = sphi 0, %s298
    %s302 = sphi 0, %s301
    %s318 = sphi 0, %s302
    %s324 = sphi 0, %s326
    %s327 = sphi 0, %s324
    %s328 = sphi 0, %s327
    %s344 = sphi 0, %s328
    %s350 = sphi 0, %s352
    %s353 = sphi 0, %s350
    %s354 = sphi 0, %s353
    %s370 = sphi 0, %s354
    %s376 = sphi 0, %s378
    %s379 = sphi 0, %s376
    %s380 = sphi 0, %s379
    %s396 = sphi 0, %s380
  $region4: #{ctc_attention_decoder_forward.2} parent=0 // loop_header_branch
    %29 = sbr.rel (%p27) target = $region8
  $region5: #{ctc_attention_decoder_forward.2} parent=0 // loop_body
    %s31 = ssub.s32 %s26, 1
    %s32 = ssub.s32 %s26, 2
    %s39 = sadd.s32 1, %s34
    %p40 = scmp.ge.s32.totalorder %s39, 2
    %s41 = scalar_select %p40, 0, %s39
    %s42 = sadd.s32 1, %s33
    %s43 = scalar_select %p40, %s42, %s33
    %p44 = scmp.ge.s32.totalorder %s43, 2
    %s45 = scalar_select %p44, 0, %s43
    %s46 = ssub.s32 %s33, %s45
    %p47 = scmp.eq.s32.totalorder %s46, 0
    %s49 = sadd.s32 %s48, 1
    %s50 = scalar_select %p47, %s48, %s49
    %p53 = pneg %p47
    %p54 = scmp.eq.s32.totalorder %s26, 3
    %p55 = por %p53, %p54
    %p56 = scmp.ne.s32.totalorder %s48, %s51
    %p57 = scmp.eq.s32.totalorder %s26, 0
    %p58 = por %p56, %p57
    %p59 = scmp.ne.s32.totalorder %s48, %s51
    %p60 = scmp.eq.s32.totalorder %s31, 3
    %p61 = por %p59, %p60
    %p62 = scmp.ne.s32.totalorder %s51, %s52
    %p63 = scmp.eq.s32.totalorder %s31, 0
    %p64 = por %p62, %p63
    %p65 = scmp.ne.s32.totalorder %s51, %s52
    %p66 = scmp.eq.s32.totalorder %s32, 3
    %p67 = por %p65, %p66
    %p69 = scmp.ne.s32.totalorder %s52, %s68
    %p70 = scmp.eq.s32.totalorder %s32, 0
    %p71 = por %p69, %p70
    %s72 = ssub.s32 %s33, %s45
    %p73 = scmp.eq.s32.totalorder %s72, 0
    %s75 = sadd.s32 %s74, 1
    %s76 = scalar_select %p73, %s74, %s75
    %p79 = pneg %p73
    %p80 = scmp.eq.s32.totalorder %s26, 3
    %p81 = por %p79, %p80
    %p82 = scmp.ne.s32.totalorder %s74, %s77
    %p83 = scmp.eq.s32.totalorder %s26, 0
    %p84 = por %p82, %p83
    %p85 = scmp.ne.s32.totalorder %s74, %s77
    %p86 = scmp.eq.s32.totalorder %s31, 3
    %p87 = por %p85, %p86
    %p88 = scmp.ne.s32.totalorder %s77, %s78
    %p89 = scmp.eq.s32.totalorder %s31, 0
    %p90 = por %p88, %p89
    %p91 = scmp.ne.s32.totalorder %s77, %s78
    %p92 = scmp.eq.s32.totalorder %s32, 3
    %p93 = por %p91, %p92
    %p95 = scmp.ne.s32.totalorder %s78, %s94
    %p96 = scmp.eq.s32.totalorder %s32, 0
    %p97 = por %p95, %p96
    %s99 = sadd.s32 %s98, 1
    %p102 = scmp.eq.s32.totalorder %s26, 3
    %p103 = scmp.ne.s32.totalorder %s98, %s100
    %p104 = scmp.eq.s32.totalorder %s26, 0
    %p105 = por %p103, %p104
    %p106 = scmp.ne.s32.totalorder %s98, %s100
    %p107 = scmp.eq.s32.totalorder %s31, 3
    %p108 = por %p106, %p107
    %p109 = scmp.ne.s32.totalorder %s100, %s101
    %p110 = scmp.eq.s32.totalorder %s31, 0
    %p111 = por %p109, %p110
    %p112 = scmp.ne.s32.totalorder %s100, %s101
    %p113 = scmp.eq.s32.totalorder %s32, 3
    %p114 = por %p112, %p113
    %p116 = scmp.ne.s32.totalorder %s101, %s115
    %p117 = scmp.eq.s32.totalorder %s32, 0
    %p118 = por %p116, %p117
    %s120 = sadd.s32 %s119, 1
    %p123 = scmp.eq.s32.totalorder %s26, 3
    %p124 = scmp.ne.s32.totalorder %s119, %s121
    %p125 = scmp.eq.s32.totalorder %s26, 0
    %p126 = por %p124, %p125
    %p127 = scmp.ne.s32.totalorder %s119, %s121
    %p128 = scmp.eq.s32.totalorder %s31, 3
    %p129 = por %p127, %p128
    %p130 = scmp.ne.s32.totalorder %s121, %s122
    %p131 = scmp.eq.s32.totalorder %s31, 0
    %p132 = por %p130, %p131
    %p133 = scmp.ne.s32.totalorder %s121, %s122
    %p134 = scmp.eq.s32.totalorder %s32, 3
    %p135 = por %p133, %p134
    %p137 = scmp.ne.s32.totalorder %s122, %s136
    %p138 = scmp.eq.s32.totalorder %s32, 0
    %p139 = por %p137, %p138
    %s140 = ssub.s32 %s34, %s41
    %p141 = scmp.eq.s32.totalorder %s140, 0
    %s143 = sadd.s32 %s142, 1
    %s144 = scalar_select %p141, %s142, %s143
    %p147 = pneg %p141
    %p148 = scmp.eq.s32.totalorder %s26, 3
    %p149 = por %p147, %p148
    %p150 = scmp.ne.s32.totalorder %s142, %s145
    %p151 = scmp.eq.s32.totalorder %s26, 0
    %p152 = por %p150, %p151
    %p153 = scmp.ne.s32.totalorder %s142, %s145
    %p154 = scmp.eq.s32.totalorder %s31, 3
    %p155 = por %p153, %p154
    %p156 = scmp.ne.s32.totalorder %s145, %s146
    %p157 = scmp.eq.s32.totalorder %s31, 0
    %p158 = por %p156, %p157
    %p159 = scmp.ne.s32.totalorder %s145, %s146
    %p160 = scmp.eq.s32.totalorder %s32, 3
    %p161 = por %p159, %p160
    %p163 = scmp.ne.s32.totalorder %s146, %s162
    %p164 = scmp.eq.s32.totalorder %s32, 0
    %p165 = por %p163, %p164
    %s166 = ssub.s32 %s34, %s41
    %p167 = scmp.eq.s32.totalorder %s166, 0
    %s169 = sadd.s32 %s168, 1
    %s170 = scalar_select %p167, %s168, %s169
    %p173 = pneg %p167
    %p174 = scmp.eq.s32.totalorder %s26, 3
    %p175 = por %p173, %p174
    %p176 = scmp.ne.s32.totalorder %s168, %s171
    %p177 = scmp.eq.s32.totalorder %s26, 0
    %p178 = por %p176, %p177
    %p179 = scmp.ne.s32.totalorder %s168, %s171
    %p180 = scmp.eq.s32.totalorder %s31, 3
    %p181 = por %p179, %p180
    %p182 = scmp.ne.s32.totalorder %s171, %s172
    %p183 = scmp.eq.s32.totalorder %s31, 0
    %p184 = por %p182, %p183
    %p185 = scmp.ne.s32.totalorder %s171, %s172
    %p186 = scmp.eq.s32.totalorder %s32, 3
    %p187 = por %p185, %p186
    %p189 = scmp.ne.s32.totalorder %s172, %s188
    %p190 = scmp.eq.s32.totalorder %s32, 0
    %p191 = por %p189, %p190
    %s192 = ssub.s32 %s34, %s41
    %p193 = scmp.eq.s32.totalorder %s192, 0
    %s195 = sadd.s32 %s194, 1
    %s196 = scalar_select %p193, %s194, %s195
    %p199 = pneg %p193
    %p200 = scmp.eq.s32.totalorder %s26, 3
    %p201 = por %p199, %p200
    %p202 = scmp.ne.s32.totalorder %s194, %s197
    %p203 = scmp.eq.s32.totalorder %s26, 0
    %p204 = por %p202, %p203
    %p205 = scmp.ne.s32.totalorder %s194, %s197
    %p206 = scmp.eq.s32.totalorder %s31, 3
    %p207 = por %p205, %p206
    %p208 = scmp.ne.s32.totalorder %s197, %s198
    %p209 = scmp.eq.s32.totalorder %s31, 0
    %p210 = por %p208, %p209
    %p211 = scmp.ne.s32.totalorder %s197, %s198
    %p212 = scmp.eq.s32.totalorder %s32, 3
    %p213 = por %p211, %p212
    %p215 = scmp.ne.s32.totalorder %s198, %s214
    %p216 = scmp.eq.s32.totalorder %s32, 0
    %p217 = por %p215, %p216
    %s218 = ssub.s32 %s34, %s41
    %p219 = scmp.eq.s32.totalorder %s218, 0
    %s221 = sadd.s32 %s220, 1
    %s222 = scalar_select %p219, %s220, %s221
    %p225 = pneg %p219
    %p226 = scmp.eq.s32.totalorder %s26, 3
    %p227 = por %p225, %p226
    %p228 = scmp.ne.s32.totalorder %s220, %s223
    %p229 = scmp.eq.s32.totalorder %s26, 0
    %p230 = por %p228, %p229
    %p231 = scmp.ne.s32.totalorder %s220, %s223
    %p232 = scmp.eq.s32.totalorder %s31, 3
    %p233 = por %p231, %p232
    %p234 = scmp.ne.s32.totalorder %s223, %s224
    %p235 = scmp.eq.s32.totalorder %s31, 0
    %p236 = por %p234, %p235
    %p237 = scmp.ne.s32.totalorder %s223, %s224
    %p238 = scmp.eq.s32.totalorder %s32, 3
    %p239 = por %p237, %p238
    %p241 = scmp.ne.s32.totalorder %s224, %s240
    %p242 = scmp.eq.s32.totalorder %s32, 0
    %p243 = por %p241, %p242
    %s244 = ssub.s32 %s34, %s41
    %p245 = scmp.eq.s32.totalorder %s244, 0
    %s247 = sadd.s32 %s246, 1
    %s248 = scalar_select %p245, %s246, %s247
    %p251 = pneg %p245
    %p252 = scmp.eq.s32.totalorder %s26, 3
    %p253 = por %p251, %p252
    %p254 = scmp.ne.s32.totalorder %s246, %s249
    %p255 = scmp.eq.s32.totalorder %s26, 0
    %p256 = por %p254, %p255
    %p257 = scmp.ne.s32.totalorder %s246, %s249
    %p258 = scmp.eq.s32.totalorder %s31, 3
    %p259 = por %p257, %p258
    %p260 = scmp.ne.s32.totalorder %s249, %s250
    %p261 = scmp.eq.s32.totalorder %s31, 0
    %p262 = por %p260, %p261
    %p263 = scmp.ne.s32.totalorder %s249, %s250
    %p264 = scmp.eq.s32.totalorder %s32, 3
    %p265 = por %p263, %p264
    %p267 = scmp.ne.s32.totalorder %s250, %s266
    %p268 = scmp.eq.s32.totalorder %s32, 0
    %p269 = por %p267, %p268
    %s270 = ssub.s32 %s34, %s41
    %p271 = scmp.eq.s32.totalorder %s270, 0
    %s273 = sadd.s32 %s272, 1
    %s274 = scalar_select %p271, %s272, %s273
    %p277 = pneg %p271
    %p278 = scmp.eq.s32.totalorder %s26, 3
    %p279 = por %p277, %p278
    %p280 = scmp.ne.s32.totalorder %s272, %s275
    %p281 = scmp.eq.s32.totalorder %s26, 0
    %p282 = por %p280, %p281
    %p283 = scmp.ne.s32.totalorder %s272, %s275
    %p284 = scmp.eq.s32.totalorder %s31, 3
    %p285 = por %p283, %p284
    %p286 = scmp.ne.s32.totalorder %s275, %s276
    %p287 = scmp.eq.s32.totalorder %s31, 0
    %p288 = por %p286, %p287
    %p289 = scmp.ne.s32.totalorder %s275, %s276
    %p290 = scmp.eq.s32.totalorder %s32, 3
    %p291 = por %p289, %p290
    %p293 = scmp.ne.s32.totalorder %s276, %s292
    %p294 = scmp.eq.s32.totalorder %s32, 0
    %p295 = por %p293, %p294
    %s296 = ssub.s32 %s34, %s41
    %p297 = scmp.eq.s32.totalorder %s296, 0
    %s299 = sadd.s32 %s298, 1
    %s300 = scalar_select %p297, %s298, %s299
    %p303 = pneg %p297
    %p304 = scmp.eq.s32.totalorder %s26, 3
    %p305 = por %p303, %p304
    %p306 = scmp.ne.s32.totalorder %s298, %s301
    %p307 = scmp.eq.s32.totalorder %s26, 0
    %p308 = por %p306, %p307
    %p309 = scmp.ne.s32.totalorder %s298, %s301
    %p310 = scmp.eq.s32.totalorder %s31, 3
    %p311 = por %p309, %p310
    %p312 = scmp.ne.s32.totalorder %s301, %s302
    %p313 = scmp.eq.s32.totalorder %s31, 0
    %p314 = por %p312, %p313
    %p315 = scmp.ne.s32.totalorder %s301, %s302
    %p316 = scmp.eq.s32.totalorder %s32, 3
    %p317 = por %p315, %p316
    %p319 = scmp.ne.s32.totalorder %s302, %s318
    %p320 = scmp.eq.s32.totalorder %s32, 0
    %p321 = por %p319, %p320
    %s322 = ssub.s32 %s34, %s41
    %p323 = scmp.eq.s32.totalorder %s322, 0
    %s325 = sadd.s32 %s324, 1
    %s326 = scalar_select %p323, %s324, %s325
    %p329 = pneg %p323
    %p330 = scmp.eq.s32.totalorder %s26, 3
    %p331 = por %p329, %p330
    %p332 = scmp.ne.s32.totalorder %s324, %s327
    %p333 = scmp.eq.s32.totalorder %s26, 0
    %p334 = por %p332, %p333
    %p335 = scmp.ne.s32.totalorder %s324, %s327
    %p336 = scmp.eq.s32.totalorder %s31, 3
    %p337 = por %p335, %p336
    %p338 = scmp.ne.s32.totalorder %s327, %s328
    %p339 = scmp.eq.s32.totalorder %s31, 0
    %p340 = por %p338, %p339
    %p341 = scmp.ne.s32.totalorder %s327, %s328
    %p342 = scmp.eq.s32.totalorder %s32, 3
    %p343 = por %p341, %p342
    %p345 = scmp.ne.s32.totalorder %s328, %s344
    %p346 = scmp.eq.s32.totalorder %s32, 0
    %p347 = por %p345, %p346
    %s348 = ssub.s32 %s34, %s41
    %p349 = scmp.eq.s32.totalorder %s348, 0
    %s351 = sadd.s32 %s350, 1
    %s352 = scalar_select %p349, %s350, %s351
    %p355 = pneg %p349
    %p356 = scmp.eq.s32.totalorder %s26, 3
    %p357 = por %p355, %p356
    %p358 = scmp.ne.s32.totalorder %s350, %s353
    %p359 = scmp.eq.s32.totalorder %s26, 0
    %p360 = por %p358, %p359
    %p361 = scmp.ne.s32.totalorder %s350, %s353
    %p362 = scmp.eq.s32.totalorder %s31, 3
    %p363 = por %p361, %p362
    %p364 = scmp.ne.s32.totalorder %s353, %s354
    %p365 = scmp.eq.s32.totalorder %s31, 0
    %p366 = por %p364, %p365
    %p367 = scmp.ne.s32.totalorder %s353, %s354
    %p368 = scmp.eq.s32.totalorder %s32, 3
    %p369 = por %p367, %p368
    %p371 = scmp.ne.s32.totalorder %s354, %s370
    %p372 = scmp.eq.s32.totalorder %s32, 0
    %p373 = por %p371, %p372
    %s374 = ssub.s32 %s33, %s45
    %p375 = scmp.eq.s32.totalorder %s374, 0
    %s377 = sadd.s32 %s376, 1
    %s378 = scalar_select %p375, %s376, %s377
    %p381 = pneg %p375
    %p382 = scmp.eq.s32.totalorder %s26, 3
    %p383 = por %p381, %p382
    %p384 = scmp.ne.s32.totalorder %s376, %s379
    %p385 = scmp.eq.s32.totalorder %s26, 0
    %p386 = por %p384, %p385
    %p387 = scmp.ne.s32.totalorder %s376, %s379
    %p388 = scmp.eq.s32.totalorder %s31, 3
    %p389 = por %p387, %p388
    %p390 = scmp.ne.s32.totalorder %s379, %s380
    %p391 = scmp.eq.s32.totalorder %s31, 0
    %p392 = por %p390, %p391
    %p393 = scmp.ne.s32.totalorder %s379, %s380
    %p394 = scmp.eq.s32.totalorder %s32, 3
    %p395 = por %p393, %p394
    %p397 = scmp.ne.s32.totalorder %s380, %s396
    %p398 = scmp.eq.s32.totalorder %s32, 0
    %p399 = por %p397, %p398
    %p400 = scmp.le.s32.totalorder 1, %s26
    %p401 = scmp.lt.s32.totalorder %s26, 5
    %p402 = pnand %p400, %p401
    %p403 = pneg %p402
    // Predicated region
    $region9: #{ctc_attention_decoder_forward.2} parent=5 // pred_check
      _
    $region10: #{ctc_attention_decoder_forward.2} parent=5 // pred_check_branch
      %405 = sbr.rel (%p402) target = $region12
    $region11: #{ctc_attention_decoder_forward.2} parent=5 // pred_region
      %s406 = ssub.s32 %s26, 1
      // Predicated region
      $region13: #{ctc_attention_decoder_forward.2} parent=11 // pred_check
        %p407 = pneg %p111
      $region14: #{ctc_attention_decoder_forward.2} parent=11 // pred_check_branch
        %409 = sbr.rel (%p407) target = $region16
      $region15: #{ctc_attention_decoder_forward.2} parent=11 // pred_region
        _
      $region16: #{ctc_attention_decoder_forward.2} parent=11 // pred_fallthru
        _
      // Predicated region
      $region17: #{ctc_attention_decoder_forward.2} parent=11 // pred_check
        %p410 = pneg %p132
      $region18: #{ctc_attention_decoder_forward.2} parent=11 // pred_check_branch
        %412 = sbr.rel (%p410) target = $region20
      $region19: #{ctc_attention_decoder_forward.2} parent=11 // pred_region
        _
      $region20: #{ctc_attention_decoder_forward.2} parent=11 // pred_fallthru
        _
    $region12: #{ctc_attention_decoder_forward.2} parent=5 // pred_fallthru
      _
    %p413 = scmp.lt.s32.totalorder %s26, 4
    // Predicated region
    $region21: #{ctc_attention_decoder_forward.2} parent=5 // pred_check
      %p414 = pneg %p413
    $region22: #{ctc_attention_decoder_forward.2} parent=5 // pred_check_branch
      %416 = sbr.rel (%p414) target = $region24
    $region23: #{ctc_attention_decoder_forward.2} parent=5 // pred_region
      // Predicated region
      $region25: #{ctc_attention_decoder_forward.2} parent=23 // pred_check
        %p417 = pneg %p58
      $region26: #{ctc_attention_decoder_forward.2} parent=23 // pred_check_branch
        %419 = sbr.rel (%p417) target = $region28
      $region27: #{ctc_attention_decoder_forward.2} parent=23 // pred_region
        %p420 = scmp.lt.s32.totalorder %s33, 1
        %s421 = scalar_select %p420, %s33, 1
        %s422 = smul.addr %s421, 8
        %s423 = scalar_lea.vmem %s1, %s422
      $region28: #{ctc_attention_decoder_forward.2} parent=23 // pred_fallthru
        _
      // Predicated region
      $region29: #{ctc_attention_decoder_forward.2} parent=23 // pred_check
        %p424 = pneg %p84
      $region30: #{ctc_attention_decoder_forward.2} parent=23 // pred_check_branch
        %426 = sbr.rel (%p424) target = $region32
      $region31: #{ctc_attention_decoder_forward.2} parent=23 // pred_region
        %p427 = scmp.lt.s32.totalorder %s33, 1
        %s428 = scalar_select %p427, %s33, 1
        %s429 = smul.addr %s428, 4
        %s430 = scalar_lea.vmem %s2, %s429
      $region32: #{ctc_attention_decoder_forward.2} parent=23 // pred_fallthru
        _
      // Predicated region
      $region33: #{ctc_attention_decoder_forward.2} parent=23 // pred_check
        %p431 = pneg %p152
      $region34: #{ctc_attention_decoder_forward.2} parent=23 // pred_check_branch
        %433 = sbr.rel (%p431) target = $region36
      $region35: #{ctc_attention_decoder_forward.2} parent=23 // pred_region
        %p434 = scmp.lt.s32.totalorder %s34, 1
        %s435 = scalar_select %p434, %s34, 1
        %s436 = scalar_lea.vmem %s5, %s435
      $region36: #{ctc_attention_decoder_forward.2} parent=23 // pred_fallthru
        _
      // Predicated region
      $region37: #{ctc_attention_decoder_forward.2} parent=23 // pred_check
        %p437 = pneg %p178
      $region38: #{ctc_attention_decoder_forward.2} parent=23 // pred_check_branch
        %439 = sbr.rel (%p437) target = $region40
      $region39: #{ctc_attention_decoder_forward.2} parent=23 // pred_region
        %p440 = scmp.lt.s32.totalorder %s34, 1
        %s441 = scalar_select %p440, %s34, 1
        %s442 = smul.addr %s441, 4
        %s443 = smul.addr %s442, 4
        %s444 = scalar_lea.vmem %s6, %s443
      $region40: #{ctc_attention_decoder_forward.2} parent=23 // pred_fallthru
        _
      // Predicated region
      $region41: #{ctc_attention_decoder_forward.2} parent=23 // pred_check
        %p445 = pneg %p204
      $region42: #{ctc_attention_decoder_forward.2} parent=23 // pred_check_branch
        %447 = sbr.rel (%p445) target = $region44
      $region43: #{ctc_attention_decoder_forward.2} parent=23 // pred_region
        %p448 = scmp.lt.s32.totalorder %s34, 1
        %s449 = scalar_select %p448, %s34, 1
        %s450 = smul.addr %s449, 8
        %s451 = smul.addr %s450, 4
        %s452 = scalar_lea.vmem %s7, %s451
      $region44: #{ctc_attention_decoder_forward.2} parent=23 // pred_fallthru
        _
      // Predicated region
      $region45: #{ctc_attention_decoder_forward.2} parent=23 // pred_check
        %p453 = pneg %p230
      $region46: #{ctc_attention_decoder_forward.2} parent=23 // pred_check_branch
        %455 = sbr.rel (%p453) target = $region48
      $region47: #{ctc_attention_decoder_forward.2} parent=23 // pred_region
        %p456 = scmp.lt.s32.totalorder %s34, 1
        %s457 = scalar_select %p456, %s34, 1
        %s458 = smul.addr %s457, 4
        %s459 = smul.addr %s458, 4
        %s460 = scalar_lea.vmem %s8, %s459
      $region48: #{ctc_attention_decoder_forward.2} parent=23 // pred_fallthru
        _
      // Predicated region
      $region49: #{ctc_attention_decoder_forward.2} parent=23 // pred_check
        %p461 = pneg %p256
      $region50: #{ctc_attention_decoder_forward.2} parent=23 // pred_check_branch
        %463 = sbr.rel (%p461) target = $region52
      $region51: #{ctc_attention_decoder_forward.2} parent=23 // pred_region
        %p464 = scmp.lt.s32.totalorder %s34, 1
        %s465 = scalar_select %p464, %s34, 1
        %s466 = smul.addr %s465, 12
        %s467 = smul.addr %s466, 4
        %s468 = scalar_lea.vmem %s9, %s467
      $region52: #{ctc_attention_decoder_forward.2} parent=23 // pred_fallthru
        _
      // Predicated region
      $region53: #{ctc_attention_decoder_forward.2} parent=23 // pred_check
        %p469 = pneg %p282
      $region54: #{ctc_attention_decoder_forward.2} parent=23 // pred_check_branch
        %471 = sbr.rel (%p469) target = $region56
      $region55: #{ctc_attention_decoder_forward.2} parent=23 // pred_region
        %p472 = scmp.lt.s32.totalorder %s34, 1
        %s473 = scalar_select %p472, %s34, 1
        %s474 = smul.addr %s473, 4
        %s475 = smul.addr %s474, 4
        %s476 = scalar_lea.vmem %s10, %s475
      $region56: #{ctc_attention_decoder_forward.2} parent=23 // pred_fallthru
        _
      // Predicated region
      $region57: #{ctc_attention_decoder_forward.2} parent=23 // pred_check
        %p477 = pneg %p308
      $region58: #{ctc_attention_decoder_forward.2} parent=23 // pred_check_branch
        %479 = sbr.rel (%p477) target = $region60
      $region59: #{ctc_attention_decoder_forward.2} parent=23 // pred_region
        %p480 = scmp.lt.s32.totalorder %s34, 1
        %s481 = scalar_select %p480, %s34, 1
        %s482 = scalar_lea.vmem %s11, %s481
      $region60: #{ctc_attention_decoder_forward.2} parent=23 // pred_fallthru
        _
      // Predicated region
      $region61: #{ctc_attention_decoder_forward.2} parent=23 // pred_check
        %p483 = pneg %p334
      $region62: #{ctc_attention_decoder_forward.2} parent=23 // pred_check_branch
        %485 = sbr.rel (%p483) target = $region64
      $region63: #{ctc_attention_decoder_forward.2} parent=23 // pred_region
        %p486 = scmp.lt.s32.totalorder %s34, 1
        %s487 = scalar_select %p486, %s34, 1
        %s488 = smul.addr %s487, 16
        %s489 = smul.addr %s488, 4
        %s490 = scalar_lea.vmem %s12, %s489
      $region64: #{ctc_attention_decoder_forward.2} parent=23 // pred_fallthru
        _
      // Predicated region
      $region65: #{ctc_attention_decoder_forward.2} parent=23 // pred_check
        %p491 = pneg %p360
      $region66: #{ctc_attention_decoder_forward.2} parent=23 // pred_check_branch
        %493 = sbr.rel (%p491) target = $region68
      $region67: #{ctc_attention_decoder_forward.2} parent=23 // pred_region
        %p494 = scmp.lt.s32.totalorder %s34, 1
        %s495 = scalar_select %p494, %s34, 1
        %s496 = smul.addr %s495, 4
        %s497 = smul.addr %s496, 4
        %s498 = scalar_lea.vmem %s13, %s497
      $region68: #{ctc_attention_decoder_forward.2} parent=23 // pred_fallthru
        _
    $region24: #{ctc_attention_decoder_forward.2} parent=5 // pred_fallthru
      _
    %p499 = scmp.le.s32.totalorder 1, %s26
    %p500 = scmp.lt.s32.totalorder %s26, 5
    %p501 = pnand %p499, %p500
    %p502 = pneg %p501
    // Predicated region
    $region69: #{ctc_attention_decoder_forward.2} parent=5 // pred_check
      _
    $region70: #{ctc_attention_decoder_forward.2} parent=5 // pred_check_branch
      %504 = sbr.rel (%p501) target = $region72
    $region71: #{ctc_attention_decoder_forward.2} parent=5 // pred_region
      %s505 = ssub.s32 %s26, 1
      %p506 = scmp.lt.s32.totalorder %s35, 1
      %s507 = scalar_select %p506, %s35, 1
      %s508 = smul.addr %s507, 8
      %s509 = scalar_lea.vmem %s1, %s508
      %p510 = pneg %p64
      %p511 = pneg %p61
      %p512 = scmp.lt.s32.totalorder %s35, 1
      %s513 = scalar_select %p512, %s35, 1
      %s514 = smul.addr %s513, 4
      %s515 = scalar_lea.vmem %s2, %s514
      %p516 = pneg %p90
      %p517 = pneg %p87
      %p518 = pneg %p111
      %p519 = pneg %p108
      %p520 = pneg %p132
      %p521 = pneg %p129
      %p522 = scmp.lt.s32.totalorder %s36, 1
      %s523 = scalar_select %p522, %s36, 1
      %s524 = scalar_lea.vmem %s5, %s523
      %p525 = pneg %p158
      %p526 = pneg %p155
      %p527 = scmp.lt.s32.totalorder %s36, 1
      %s528 = scalar_select %p527, %s36, 1
      %s529 = smul.addr %s528, 4
      %s530 = smul.addr %s529, 4
      %s531 = scalar_lea.vmem %s6, %s530
      %p532 = pneg %p184
      %p533 = pneg %p181
      %p534 = scmp.lt.s32.totalorder %s36, 1
      %s535 = scalar_select %p534, %s36, 1
      %s536 = smul.addr %s535, 8
      %s537 = smul.addr %s536, 4
      %s538 = scalar_lea.vmem %s7, %s537
      %p539 = pneg %p210
      %p540 = pneg %p207
      %p541 = scmp.lt.s32.totalorder %s36, 1
      %s542 = scalar_select %p541, %s36, 1
      %s543 = smul.addr %s542, 4
      %s544 = smul.addr %s543, 4
      %s545 = scalar_lea.vmem %s8, %s544
      %p546 = pneg %p236
      %p547 = pneg %p233
      %p548 = scmp.lt.s32.totalorder %s36, 1
      %s549 = scalar_select %p548, %s36, 1
      %s550 = smul.addr %s549, 12
      %s551 = smul.addr %s550, 4
      %s552 = scalar_lea.vmem %s9, %s551
      %p553 = pneg %p262
      %p554 = pneg %p259
      %p555 = scmp.lt.s32.totalorder %s36, 1
      %s556 = scalar_select %p555, %s36, 1
      %s557 = smul.addr %s556, 4
      %s558 = smul.addr %s557, 4
      %s559 = scalar_lea.vmem %s10, %s558
      %p560 = pneg %p288
      %p561 = pneg %p285
      %p562 = scmp.lt.s32.totalorder %s36, 1
      %s563 = scalar_select %p562, %s36, 1
      %s564 = scalar_lea.vmem %s11, %s563
      %p565 = pneg %p314
      %p566 = pneg %p311
      %p567 = scmp.lt.s32.totalorder %s36, 1
      %s568 = scalar_select %p567, %s36, 1
      %s569 = smul.addr %s568, 16
      %s570 = smul.addr %s569, 4
      %s571 = scalar_lea.vmem %s12, %s570
      %p572 = pneg %p340
      %p573 = pneg %p337
      %p574 = scmp.lt.s32.totalorder %s36, 1
      %s575 = scalar_select %p574, %s36, 1
      %s576 = smul.addr %s575, 4
      %s577 = smul.addr %s576, 4
      %s578 = scalar_lea.vmem %s13, %s577
      %p579 = pneg %p366
      %p580 = pneg %p363
      %p581 = pneg %p392
      %p582 = pneg %p389
      %p583 = scmp.lt.s32.totalorder %s35, 1
      %s584 = scalar_select %p583, %s35, 1
      %s585 = smul.addr %s584, 8
      %s586 = scalar_lea.vmem %s14, %s585
      %p587 = scmp.lt.s32.totalorder %s35, 1
      %s588 = scalar_select %p587, %s35, 1
      %s589 = smul.addr %s588, 8
      %s590 = scalar_lea.vmem %s1, %s589
      %p591 = scmp.lt.s32.totalorder %s35, 1
      %s592 = scalar_select %p591, %s35, 1
      %s593 = smul.addr %s592, 4
      %s594 = scalar_lea.vmem %s2, %s593
      %p595 = scmp.lt.s32.totalorder %s36, 1
      %s596 = scalar_select %p595, %s36, 1
      %s597 = scalar_lea.vmem %s5, %s596
      %p598 = scmp.lt.s32.totalorder %s36, 1
      %s599 = scalar_select %p598, %s36, 1
      %s600 = smul.addr %s599, 4
      %s601 = smul.addr %s600, 4
      %s602 = scalar_lea.vmem %s6, %s601
      %p603 = scmp.lt.s32.totalorder %s36, 1
      %s604 = scalar_select %p603, %s36, 1
      %s605 = smul.addr %s604, 8
      %s606 = smul.addr %s605, 4
      %s607 = scalar_lea.vmem %s7, %s606
      %p608 = scmp.lt.s32.totalorder %s36, 1
      %s609 = scalar_select %p608, %s36, 1
      %s610 = smul.addr %s609, 4
      %s611 = smul.addr %s610, 4
      %s612 = scalar_lea.vmem %s8, %s611
      %p613 = scmp.lt.s32.totalorder %s36, 1
      %s614 = scalar_select %p613, %s36, 1
      %s615 = smul.addr %s614, 12
      %s616 = smul.addr %s615, 4
      %s617 = scalar_lea.vmem %s9, %s616
      %p618 = scmp.lt.s32.totalorder %s36, 1
      %s619 = scalar_select %p618, %s36, 1
      %s620 = smul.addr %s619, 4
      %s621 = smul.addr %s620, 4
      %s622 = scalar_lea.vmem %s10, %s621
      %p623 = scmp.lt.s32.totalorder %s36, 1
      %s624 = scalar_select %p623, %s36, 1
      %s625 = scalar_lea.vmem %s11, %s624
      %p626 = scmp.lt.s32.totalorder %s36, 1
      %s627 = scalar_select %p626, %s36, 1
      %s628 = smul.addr %s627, 16
      %s629 = smul.addr %s628, 4
      %s630 = scalar_lea.vmem %s12, %s629
      %p631 = scmp.lt.s32.totalorder %s36, 1
      %s632 = scalar_select %p631, %s36, 1
      %s633 = smul.addr %s632, 4
      %s634 = smul.addr %s633, 4
      %s635 = scalar_lea.vmem %s13, %s634
      %p636 = scmp.lt.s32.totalorder %s35, 1
      %s637 = scalar_select %p636, %s35, 1
      %s638 = smul.addr %s637, 8
      %s639 = scalar_lea.vmem %s14, %s638
      %p641 = scmp.eq.s32.totalorder %s36, 0
      // Predicated region
      $region73: #{ctc_attention_decoder_forward.2} parent=71 // pred_check
        %p642 = pneg %p641
      $region74: #{ctc_attention_decoder_forward.2} parent=71 // pred_check_branch
        %644 = sbr.rel (%p642) target = $region76
      $region75: #{ctc_attention_decoder_forward.2} parent=71 // pred_region
        %v645 = vld [vmem:[%s590] sm:$0xff]
        %vm646 = vcmask 261120
        %647 = vst.msk [vmem:[#allocation2] sm:$0xff] %vm646, %v645
      $region76: #{ctc_attention_decoder_forward.2} parent=71 // pred_fallthru
        _
      %v648 = vld [vmem:[#allocation2] sm:$0xff]
      %v649 = vld [vmem:[%s597] sm:$0x1]
      %vm650 = vcmask 261120
      %v651 = vsel %vm650, %v648, 0.0
      %652 = vadd.xlane.f32.xlu0 %v651
      %v653 = vpop.xlane.xlu0 %652
      %v654 = vrcp.pop 32.0
      %v655 = vmul.f32 %v653, %v654
      %v656 = vsub.f32 %v648, %v655
      %v657 = vmul.f32 %v656, %v656
      %v658 = vsel %vm650, %v657, 0.0
      %659 = vadd.xlane.f32.xlu0 %v658
      %v660 = vpop.xlane.xlu0 %659
      %v661 = vmul.f32 %v660, %v654
      %v662 = vadd.f32 %v661, 1e-05
      %v663 = vrsqrt.pop %v662
      %v664 = vmul.f32 %v656, %v663
      %v666 = vlaneseq
      %v667 = vshrl.u32 %v666, 7
      %v668 = vsub.s32 0, %v667
      %v669 = vrot.slane %v649, %v668
      %v671 = vmul.f32 %v664, %v669
      %v672 = vpack.c.bf16 %v671, %v671
      %v673 = vld [vmem:[%s3] sm:$0xff]
      %v674 = vld [vmem:[%s4] sm:$0xff]
      %v675 = vld [vmem:[%s602] sm:$0xf]
      %v676 = vld [vmem:[%s602 + $0x4] sm:$0xf]
      %v677 = vld [vmem:[%s602 + $0x8] sm:$0xf]
      %v678 = vld [vmem:[%s602 + $0xc] sm:$0xf]
      %v683 = vunpack.c.l.b16 %v675
      %v684 = vunpack.c.l.b16 %v676
      %v685 = vunpack.c.l.b16 %v677
      %v686 = vunpack.c.l.b16 %v678
      %v687 = vpack.c.b16 %v684, %v683
      %v688 = vpack.c.b16 %v686, %v685
      %v690 = vsel %vm650, %v672, 0
      %v693 = vsel %vm650, %v687, 0
      %v696 = vsel %vm650, %v688, 0
      %698 = vmatprep.subr.bf16.mxu0 0
      %699 = vmatpush1.bf16.xpose.msra.mxu0 %v693
      %700 = vmatprep.subr.bf16.mxu0 0
      %701 = vmatpush1.bf16.xpose.msra.mxu0 %v696
      %702 = vmatprep.subr.bf16.mxu0 0
      %703 = vmatpush1.bf16.xpose.msra.mxu0 0
      %704 = vmatprep.subr.bf16.mxu0 0
      %705 = vmatpush1.bf16.xpose.msra.mxu0 0
      %706 = vmatprep.subr.bf16.mxu0 0
      %707 = vmatpush1.bf16.xpose.msra.mxu0 0
      %708 = vmatprep.subr.bf16.mxu0 0
      %709 = vmatpush1.bf16.xpose.msra.mxu0 0
      %710 = vmatprep.subr.bf16.mxu0 0
      %711 = vmatpush1.bf16.xpose.msra.mxu0 0
      %712 = vmatprep.subr.bf16.mxu0 0
      %713 = vmatpush1.bf16.xpose.msra.mxu0 0
      %714 = vmatprep.subr.bf16.mxu0 0
      %715 = vmatpush1.bf16.xpose.msra.mxu0 0
      %716 = vmatprep.subr.bf16.mxu0 0
      %717 = vmatpush1.bf16.xpose.msra.mxu0 0
      %718 = vmatprep.subr.bf16.mxu0 0
      %719 = vmatpush1.bf16.xpose.msra.mxu0 0
      %720 = vmatprep.subr.bf16.mxu0 0
      %721 = vmatpush1.bf16.xpose.msra.mxu0 0
      %722 = vmatprep.subr.bf16.mxu0 0
      %723 = vmatpush1.bf16.xpose.msra.mxu0 0
      %724 = vmatprep.subr.bf16.mxu0 0
      %725 = vmatpush1.bf16.xpose.msra.mxu0 0
      %726 = vmatprep.subr.bf16.mxu0 0
      %727 = vmatpush1.bf16.xpose.msra.mxu0 0
      %728 = vmatprep.subr.bf16.mxu0 0
      %729 = vmatpush1.bf16.xpose.msra.mxu0 0
      %730 = vmatprep.mubr.bf16.mxu0 0
      %731 = vmatmul.mubr.bf16.gmra.mrb[0].mxu0 %v690
      %v732 = vpop.f32.mrb[0].mxu0
      %v733 = vadd.f32 0.0, %v732
      %v734 = vpop.f32.mrb[0].mxu0
      %v735 = vpop.f32.mrb[0].mxu0
      %v736 = vpop.f32.mrb[0].mxu0
      %737 = vdwg.mxu0
      %v738 = vld [vmem:[%s594] sm:$0xf]
      %v739 = vld [vmem:[%s607] sm:$0xf]
      %v740 = vld [vmem:[%s607 + $0x4] sm:$0xf]
      %v741 = vld [vmem:[%s607 + $0x8] sm:$0xf]
      %v742 = vld [vmem:[%s607 + $0xc] sm:$0xf]
      %v743 = vld [vmem:[%s607 + $0x10] sm:$0xf]
      %v744 = vld [vmem:[%s607 + $0x14] sm:$0xf]
      %v745 = vld [vmem:[%s607 + $0x18] sm:$0xf]
      %v746 = vld [vmem:[%s607 + $0x1c] sm:$0xf]
      %v755 = vunpack.c.l.b16 %v739
      %v756 = vunpack.c.l.b16 %v740
      %v757 = vunpack.c.l.b16 %v741
      %v758 = vunpack.c.l.b16 %v742
      %v759 = vunpack.c.l.b16 %v743
      %v760 = vunpack.c.l.b16 %v744
      %v761 = vunpack.c.l.b16 %v745
      %v762 = vunpack.c.l.b16 %v746
      %v763 = vpack.c.b16 %v756, %v755
      %v764 = vpack.c.b16 %v758, %v757
      %v765 = vpack.c.b16 %v760, %v759
      %v766 = vpack.c.b16 %v762, %v761
      %v768 = vsel %vm650, %v738, 0
      %v771 = vsel %vm650, %v763, 0
      %v774 = vsel %vm650, %v764, 0
      %v777 = vsel %vm650, %v765, 0
      %v780 = vsel %vm650, %v766, 0
      %782 = vmatprep.subr.bf16.mxu0 0
      %783 = vmatpush1.bf16.xpose.msra.mxu0 %v771
      %784 = vmatprep.subr.bf16.mxu0 0
      %785 = vmatpush1.bf16.xpose.msra.mxu0 %v774
      %786 = vmatprep.subr.bf16.mxu0 0
      %787 = vmatpush1.bf16.xpose.msra.mxu0 %v777
      %788 = vmatprep.subr.bf16.mxu0 0
      %789 = vmatpush1.bf16.xpose.msra.mxu0 %v780
      %790 = vmatprep.subr.bf16.mxu0 0
      %791 = vmatpush1.bf16.xpose.msra.mxu0 0
      %792 = vmatprep.subr.bf16.mxu0 0
      %793 = vmatpush1.bf16.xpose.msra.mxu0 0
      %794 = vmatprep.subr.bf16.mxu0 0
      %795 = vmatpush1.bf16.xpose.msra.mxu0 0
      %796 = vmatprep.subr.bf16.mxu0 0
      %797 = vmatpush1.bf16.xpose.msra.mxu0 0
      %798 = vmatprep.subr.bf16.mxu0 0
      %799 = vmatpush1.bf16.xpose.msra.mxu0 0
      %800 = vmatprep.subr.bf16.mxu0 0
      %801 = vmatpush1.bf16.xpose.msra.mxu0 0
      %802 = vmatprep.subr.bf16.mxu0 0
      %803 = vmatpush1.bf16.xpose.msra.mxu0 0
      %804 = vmatprep.subr.bf16.mxu0 0
      %805 = vmatpush1.bf16.xpose.msra.mxu0 0
      %806 = vmatprep.subr.bf16.mxu0 0
      %807 = vmatpush1.bf16.xpose.msra.mxu0 0
      %808 = vmatprep.subr.bf16.mxu0 0
      %809 = vmatpush1.bf16.xpose.msra.mxu0 0
      %810 = vmatprep.subr.bf16.mxu0 0
      %811 = vmatpush1.bf16.xpose.msra.mxu0 0
      %812 = vmatprep.subr.bf16.mxu0 0
      %813 = vmatpush1.bf16.xpose.msra.mxu0 0
      %814 = vmatprep.mubr.bf16.mxu0 0
      %815 = vmatmul.mubr.bf16.gmra.mrb[0].mxu0 %v768
      %v816 = vpop.f32.mrb[0].mxu0
      %v817 = vadd.f32 0.0, %v816
      %v818 = vpop.f32.mrb[0].mxu0
      %v819 = vpop.f32.mrb[0].mxu0
      %v820 = vpop.f32.mrb[0].mxu0
      %821 = vdwg.mxu0
      %s822 = sld [smem:[#allocation4 + %s35]]
      %v823 = vlaneseq
      %v824 = vand.u32 %v823, 127
      %v825 = vstv %s822
      %vm826 = vcmp.lt.s32.totalorder %v824, %v825
      %v827 = vsel %vm826, 0.0, -1e+30
      %829 = vrot.lane.b32.xlu0 %v733, 112
      %v830 = vpop.permute.xlu0 %829
      %833 = vrot.lane.b32.xlu0 %v817, 112
      %v834 = vpop.permute.xlu0 %833
      %v836 = vpack.c.bf16 %v733, %v733
      %v837 = vpack.c.bf16 %v830, %v830
      %v838 = vpack.c.bf16 %v817, %v817
      %v839 = vpack.c.bf16 %v834, %v834
      %vm840 = vcmask 130048
      %v842 = vsel %vm840, %v836, 0
      %v845 = vsel %vm840, %v838, 0
      %847 = vmatprep.subr.bf16.mxu0 0
      %848 = vmatpush1.bf16.xpose.msra.mxu0 %v845
      %849 = vmatprep.subr.bf16.mxu0 0
      %850 = vmatpush1.bf16.xpose.msra.mxu0 0
      %851 = vmatprep.subr.bf16.mxu0 0
      %852 = vmatpush1.bf16.xpose.msra.mxu0 0
      %853 = vmatprep.subr.bf16.mxu0 0
      %854 = vmatpush1.bf16.xpose.msra.mxu0 0
      %855 = vmatprep.subr.bf16.mxu0 0
      %856 = vmatpush1.bf16.xpose.msra.mxu0 0
      %857 = vmatprep.subr.bf16.mxu0 0
      %858 = vmatpush1.bf16.xpose.msra.mxu0 0
      %859 = vmatprep.subr.bf16.mxu0 0
      %860 = vmatpush1.bf16.xpose.msra.mxu0 0
      %861 = vmatprep.subr.bf16.mxu0 0
      %862 = vmatpush1.bf16.xpose.msra.mxu0 0
      %863 = vmatprep.subr.bf16.mxu0 0
      %864 = vmatpush1.bf16.xpose.msra.mxu0 0
      %865 = vmatprep.subr.bf16.mxu0 0
      %866 = vmatpush1.bf16.xpose.msra.mxu0 0
      %867 = vmatprep.subr.bf16.mxu0 0
      %868 = vmatpush1.bf16.xpose.msra.mxu0 0
      %869 = vmatprep.subr.bf16.mxu0 0
      %870 = vmatpush1.bf16.xpose.msra.mxu0 0
      %871 = vmatprep.subr.bf16.mxu0 0
      %872 = vmatpush1.bf16.xpose.msra.mxu0 0
      %873 = vmatprep.subr.bf16.mxu0 0
      %874 = vmatpush1.bf16.xpose.msra.mxu0 0
      %875 = vmatprep.subr.bf16.mxu0 0
      %876 = vmatpush1.bf16.xpose.msra.mxu0 0
      %877 = vmatprep.subr.bf16.mxu0 0
      %878 = vmatpush1.bf16.xpose.msra.mxu0 0
      %879 = vmatprep.mubr.bf16.mxu0 0
      %880 = vmatmul.mubr.bf16.gmra.mrb[0].mxu0 %v842
      %v881 = vpop.f32.mrb[0].mxu0
      %v882 = vadd.f32 %v827, %v881
      %v883 = vpop.f32.mrb[0].mxu0
      %v884 = vpop.f32.mrb[0].mxu0
      %v885 = vpop.f32.mrb[0].mxu0
      %886 = vdwg.mxu0
      %v888 = vsel %vm840, %v837, 0
      %v891 = vsel %vm840, %v839, 0
      %893 = vmatprep.subr.bf16.mxu0 0
      %894 = vmatpush1.bf16.xpose.msra.mxu0 %v891
      %895 = vmatprep.subr.bf16.mxu0 0
      %896 = vmatpush1.bf16.xpose.msra.mxu0 0
      %897 = vmatprep.subr.bf16.mxu0 0
      %898 = vmatpush1.bf16.xpose.msra.mxu0 0
      %899 = vmatprep.subr.bf16.mxu0 0
      %900 = vmatpush1.bf16.xpose.msra.mxu0 0
      %901 = vmatprep.subr.bf16.mxu0 0
      %902 = vmatpush1.bf16.xpose.msra.mxu0 0
      %903 = vmatprep.subr.bf16.mxu0 0
      %904 = vmatpush1.bf16.xpose.msra.mxu0 0
      %905 = vmatprep.subr.bf16.mxu0 0
      %906 = vmatpush1.bf16.xpose.msra.mxu0 0
      %907 = vmatprep.subr.bf16.mxu0 0
      %908 = vmatpush1.bf16.xpose.msra.mxu0 0
      %909 = vmatprep.subr.bf16.mxu0 0
      %910 = vmatpush1.bf16.xpose.msra.mxu0 0
      %911 = vmatprep.subr.bf16.mxu0 0
      %912 = vmatpush1.bf16.xpose.msra.mxu0 0
      %913 = vmatprep.subr.bf16.mxu0 0
      %914 = vmatpush1.bf16.xpose.msra.mxu0 0
      %915 = vmatprep.subr.bf16.mxu0 0
      %916 = vmatpush1.bf16.xpose.msra.mxu0 0
      %917 = vmatprep.subr.bf16.mxu0 0
      %918 = vmatpush1.bf16.xpose.msra.mxu0 0
      %919 = vmatprep.subr.bf16.mxu0 0
      %920 = vmatpush1.bf16.xpose.msra.mxu0 0
      %921 = vmatprep.subr.bf16.mxu0 0
      %922 = vmatpush1.bf16.xpose.msra.mxu0 0
      %923 = vmatprep.subr.bf16.mxu0 0
      %924 = vmatpush1.bf16.xpose.msra.mxu0 0
      %925 = vmatprep.mubr.bf16.mxu0 0
      %926 = vmatmul.mubr.bf16.gmra.mrb[0].mxu0 %v888
      %v927 = vpop.f32.mrb[0].mxu0
      %v928 = vadd.f32 %v827, %v927
      %v929 = vpop.f32.mrb[0].mxu0
      %v930 = vpop.f32.mrb[0].mxu0
      %v931 = vpop.f32.mrb[0].mxu0
      %932 = vdwg.mxu0
      %vm933 = vcmask 64512
      %v934 = vsel %vm933, %v882, -inf
      %935 = vmax.xlane.f32.xlu0 %v934
      %v936 = vpop.xlane.xlu0 %935
      %v937 = vsel %vm933, %v928, -inf
      %938 = vmax.xlane.f32.xlu0 %v937
      %v939 = vpop.xlane.xlu0 %938
      %v940 = vsub.f32 %v882, %v936
      %v941 = vsub.f32 %v928, %v939
      %v942 = vmul.f32 %v940, 1.442695
      %v943 = vpow.pop %v942
      %v944 = vmul.f32 %v941, 1.442695
      %v945 = vpow.pop %v944
      %v946 = vsel %vm933, %v943, 0.0
      %947 = vadd.xlane.f32.xlu0 %v946
      %v948 = vpop.xlane.xlu0 %947
      %v949 = vsel %vm933, %v945, 0.0
      %950 = vadd.xlane.f32.xlu0 %v949
      %v951 = vpop.xlane.xlu0 %950
      %v952 = vrcp.pop %v948
      %v953 = vrcp.pop %v951
      %v954 = vmul.f32 %v943, %v952
      %v955 = vmul.f32 %v945, %v953
      %v956 = vpack.c.bf16 %v954, %v954
      %v957 = vpack.c.bf16 %v955, %v955
      %959 = vrot.lane.b32.xlu0 %v838, 96
      %v960 = vpop.permute.xlu0 %959
      %v962 = vsel %vm933, %v956, 0
      %vm964 = vcmask 1043456
      %v966 = vsel %vm964, %v960, 0
      %968 = vmatprep.subr.bf16.mxu0 0
      %969 = vmatpush1.bf16.msra.mxu0 %v966
      %970 = vmatprep.subr.bf16.mxu0 0
      %971 = vmatpush1.bf16.msra.mxu0 0
      %972 = vmatprep.subr.bf16.mxu0 0
      %973 = vmatpush1.bf16.msra.mxu0 0
      %974 = vmatprep.subr.bf16.mxu0 0
      %975 = vmatpush1.bf16.msra.mxu0 0
      %976 = vmatprep.subr.bf16.mxu0 0
      %977 = vmatpush1.bf16.msra.mxu0 0
      %978 = vmatprep.subr.bf16.mxu0 0
      %979 = vmatpush1.bf16.msra.mxu0 0
      %980 = vmatprep.subr.bf16.mxu0 0
      %981 = vmatpush1.bf16.msra.mxu0 0
      %982 = vmatprep.subr.bf16.mxu0 0
      %983 = vmatpush1.bf16.msra.mxu0 0
      %984 = vmatprep.subr.bf16.mxu0 0
      %985 = vmatpush1.bf16.msra.mxu0 0
      %986 = vmatprep.subr.bf16.mxu0 0
      %987 = vmatpush1.bf16.msra.mxu0 0
      %988 = vmatprep.subr.bf16.mxu0 0
      %989 = vmatpush1.bf16.msra.mxu0 0
      %990 = vmatprep.subr.bf16.mxu0 0
      %991 = vmatpush1.bf16.msra.mxu0 0
      %992 = vmatprep.subr.bf16.mxu0 0
      %993 = vmatpush1.bf16.msra.mxu0 0
      %994 = vmatprep.subr.bf16.mxu0 0
      %995 = vmatpush1.bf16.msra.mxu0 0
      %996 = vmatprep.subr.bf16.mxu0 0
      %997 = vmatpush1.bf16.msra.mxu0 0
      %998 = vmatprep.subr.bf16.mxu0 0
      %999 = vmatpush1.bf16.msra.mxu0 0
      %1000 = vmatprep.mubr.bf16.mxu0 0
      %1001 = vmatmul.mubr.bf16.gmra.mrb[0].mxu0 %v962
      %v1002 = vpop.f32.mrb[0].mxu0
      %v1003 = vadd.f32 0.0, %v1002
      %v1004 = vpop.f32.mrb[0].mxu0
      %v1005 = vpop.f32.mrb[0].mxu0
      %v1006 = vpop.f32.mrb[0].mxu0
      %1007 = vdwg.mxu0
      %1009 = vrot.lane.b32.xlu0 %v839, 96
      %v1010 = vpop.permute.xlu0 %1009
      %v1012 = vsel %vm933, %v957, 0
      %v1015 = vsel %vm964, %v1010, 0
      %1017 = vmatprep.subr.bf16.mxu0 0
      %1018 = vmatpush1.bf16.msra.mxu0 %v1015
      %1019 = vmatprep.subr.bf16.mxu0 0
      %1020 = vmatpush1.bf16.msra.mxu0 0
      %1021 = vmatprep.subr.bf16.mxu0 0
      %1022 = vmatpush1.bf16.msra.mxu0 0
      %1023 = vmatprep.subr.bf16.mxu0 0
      %1024 = vmatpush1.bf16.msra.mxu0 0
      %1025 = vmatprep.subr.bf16.mxu0 0
      %1026 = vmatpush1.bf16.msra.mxu0 0
      %1027 = vmatprep.subr.bf16.mxu0 0
      %1028 = vmatpush1.bf16.msra.mxu0 0
      %1029 = vmatprep.subr.bf16.mxu0 0
      %1030 = vmatpush1.bf16.msra.mxu0 0
      %1031 = vmatprep.subr.bf16.mxu0 0
      %1032 = vmatpush1.bf16.msra.mxu0 0
      %1033 = vmatprep.subr.bf16.mxu0 0
      %1034 = vmatpush1.bf16.msra.mxu0 0
      %1035 = vmatprep.subr.bf16.mxu0 0
      %1036 = vmatpush1.bf16.msra.mxu0 0
      %1037 = vmatprep.subr.bf16.mxu0 0
      %1038 = vmatpush1.bf16.msra.mxu0 0
      %1039 = vmatprep.subr.bf16.mxu0 0
      %1040 = vmatpush1.bf16.msra.mxu0 0
      %1041 = vmatprep.subr.bf16.mxu0 0
      %1042 = vmatpush1.bf16.msra.mxu0 0
      %1043 = vmatprep.subr.bf16.mxu0 0
      %1044 = vmatpush1.bf16.msra.mxu0 0
      %1045 = vmatprep.subr.bf16.mxu0 0
      %1046 = vmatpush1.bf16.msra.mxu0 0
      %1047 = vmatprep.subr.bf16.mxu0 0
      %1048 = vmatpush1.bf16.msra.mxu0 0
      %1049 = vmatprep.mubr.bf16.mxu0 0
      %1050 = vmatmul.mubr.bf16.gmra.mrb[0].mxu0 %v1012
      %v1051 = vpop.f32.mrb[0].mxu0
      %v1052 = vadd.f32 0.0, %v1051
      %v1053 = vpop.f32.mrb[0].mxu0
      %v1054 = vpop.f32.mrb[0].mxu0
      %v1055 = vpop.f32.mrb[0].mxu0
      %1056 = vdwg.mxu0
      %1058 = vrot.lane.b32.xlu0 %v1052, 16
      %v1059 = vpop.permute.xlu0 %1058
      %v1061 = vsel %vm840, %v1003, %v1059
      %v1062 = vpack.c.bf16 %v1061, %v1061
      %v1063 = vld [vmem:[%s612] sm:$0xf]
      %v1064 = vld [vmem:[%s612 + $0x4] sm:$0xf]
      %v1065 = vld [vmem:[%s612 + $0x8] sm:$0xf]
      %v1066 = vld [vmem:[%s612 + $0xc] sm:$0xf]
      %v1071 = vunpack.c.l.b16 %v1063
      %v1072 = vunpack.c.l.b16 %v1064
      %v1073 = vunpack.c.l.b16 %v1065
      %v1074 = vunpack.c.l.b16 %v1066
      %v1075 = vpack.c.b16 %v1072, %v1071
      %v1076 = vpack.c.b16 %v1074, %v1073
      %v1078 = vsel %vm650, %v1062, 0
      %v1081 = vsel %vm650, %v1075, 0
      %v1084 = vsel %vm650, %v1076, 0
      %1086 = vmatprep.subr.bf16.mxu0 0
      %1087 = vmatpush1.bf16.xpose.msra.mxu0 %v1081
      %1088 = vmatprep.subr.bf16.mxu0 0
      %1089 = vmatpush1.bf16.xpose.msra.mxu0 %v1084
      %1090 = vmatprep.subr.bf16.mxu0 0
      %1091 = vmatpush1.bf16.xpose.msra.mxu0 0
      %1092 = vmatprep.subr.bf16.mxu0 0
      %1093 = vmatpush1.bf16.xpose.msra.mxu0 0
      %1094 = vmatprep.subr.bf16.mxu0 0
      %1095 = vmatpush1.bf16.xpose.msra.mxu0 0
      %1096 = vmatprep.subr.bf16.mxu0 0
      %1097 = vmatpush1.bf16.xpose.msra.mxu0 0
      %1098 = vmatprep.subr.bf16.mxu0 0
      %1099 = vmatpush1.bf16.xpose.msra.mxu0 0
      %1100 = vmatprep.subr.bf16.mxu0 0
      %1101 = vmatpush1.bf16.xpose.msra.mxu0 0
      %1102 = vmatprep.subr.bf16.mxu0 0
      %1103 = vmatpush1.bf16.xpose.msra.mxu0 0
      %1104 = vmatprep.subr.bf16.mxu0 0
      %1105 = vmatpush1.bf16.xpose.msra.mxu0 0
      %1106 = vmatprep.subr.bf16.mxu0 0
      %1107 = vmatpush1.bf16.xpose.msra.mxu0 0
      %1108 = vmatprep.subr.bf16.mxu0 0
      %1109 = vmatpush1.bf16.xpose.msra.mxu0 0
      %1110 = vmatprep.subr.bf16.mxu0 0
      %1111 = vmatpush1.bf16.xpose.msra.mxu0 0
      %1112 = vmatprep.subr.bf16.mxu0 0
      %1113 = vmatpush1.bf16.xpose.msra.mxu0 0
      %1114 = vmatprep.subr.bf16.mxu0 0
      %1115 = vmatpush1.bf16.xpose.msra.mxu0 0
      %1116 = vmatprep.subr.bf16.mxu0 0
      %1117 = vmatpush1.bf16.xpose.msra.mxu0 0
      %1118 = vmatprep.mubr.bf16.mxu0 0
      %1119 = vmatmul.mubr.bf16.gmra.mrb[0].mxu0 %v1078
      %v1120 = vpop.f32.mrb[0].mxu0
      %v1121 = vadd.f32 0.0, %v1120
      %v1122 = vpop.f32.mrb[0].mxu0
      %v1123 = vpop.f32.mrb[0].mxu0
      %v1124 = vpop.f32.mrb[0].mxu0
      %1125 = vdwg.mxu0
      %v1126 = vadd.f32 %v648, %v1121
      %v1127 = vld [vmem:[%s617] sm:$0xf]
      %v1128 = vld [vmem:[%s617 + $0x4] sm:$0xf]
      %v1129 = vld [vmem:[%s617 + $0x8] sm:$0xf]
      %v1130 = vld [vmem:[%s617 + $0xc] sm:$0xf]
      %v1131 = vld [vmem:[%s617 + $0x10] sm:$0xf]
      %v1132 = vld [vmem:[%s617 + $0x14] sm:$0xf]
      %v1133 = vld [vmem:[%s617 + $0x18] sm:$0xf]
      %v1134 = vld [vmem:[%s617 + $0x1c] sm:$0xf]
      %v1135 = vld [vmem:[%s617 + $0x20] sm:$0xf]
      %v1136 = vld [vmem:[%s617 + $0x24] sm:$0xf]
      %v1137 = vld [vmem:[%s617 + $0x28] sm:$0xf]
      %v1138 = vld [vmem:[%s617 + $0x2c] sm:$0xf]
      %v1151 = vunpack.c.l.b16 %v1127
      %v1152 = vunpack.c.l.b16 %v1128
      %v1153 = vunpack.c.l.b16 %v1129
      %v1154 = vunpack.c.l.b16 %v1130
      %v1155 = vunpack.c.l.b16 %v1131
      %v1156 = vunpack.c.l.b16 %v1132
      %v1157 = vunpack.c.l.b16 %v1133
      %v1158 = vunpack.c.l.b16 %v1134
      %v1159 = vunpack.c.l.b16 %v1135
      %v1160 = vunpack.c.l.b16 %v1136
      %v1161 = vunpack.c.l.b16 %v1137
      %v1162 = vunpack.c.l.b16 %v1138
      %v1163 = vpack.c.b16 %v1152, %v1151
      %v1164 = vpack.c.b16 %v1154, %v1153
      %v1165 = vpack.c.b16 %v1156, %v1155
      %v1166 = vpack.c.b16 %v1158, %v1157
      %v1167 = vpack.c.b16 %v1160, %v1159
      %v1168 = vpack.c.b16 %v1162, %v1161
      %v1170 = vsel %vm650, %v1163, 0
      %v1173 = vsel %vm650, %v1164, 0
      %v1176 = vsel %vm650, %v1165, 0
      %v1179 = vsel %vm650, %v1166, 0
      %v1182 = vsel %vm650, %v1167, 0
      %v1185 = vsel %vm650, %v1168, 0
      %1187 = vmatprep.subr.bf16.mxu0 0
      %1188 = vmatpush1.bf16.xpose.msra.mxu0 %v1170
      %1189 = vmatprep.subr.bf16.mxu0 0
      %1190 = vmatpush1.bf16.xpose.msra.mxu0 %v1173
      %1191 = vmatprep.subr.bf16.mxu0 0
      %1192 = vmatpush1.bf16.xpose.msra.mxu0 %v1176
      %1193 = vmatprep.subr.bf16.mxu0 0
      %1194 = vmatpush1.bf16.xpose.msra.mxu0 %v1179
      %1195 = vmatprep.subr.bf16.mxu0 0
      %1196 = vmatpush1.bf16.xpose.msra.mxu0 %v1182
      %1197 = vmatprep.subr.bf16.mxu0 0
      %1198 = vmatpush1.bf16.xpose.msra.mxu0 %v1185
      %1199 = vmatprep.subr.bf16.mxu0 0
      %1200 = vmatpush1.bf16.xpose.msra.mxu0 0
      %1201 = vmatprep.subr.bf16.mxu0 0
      %1202 = vmatpush1.bf16.xpose.msra.mxu0 0
      %1203 = vmatprep.subr.bf16.mxu0 0
      %1204 = vmatpush1.bf16.xpose.msra.mxu0 0
      %1205 = vmatprep.subr.bf16.mxu0 0
      %1206 = vmatpush1.bf16.xpose.msra.mxu0 0
      %1207 = vmatprep.subr.bf16.mxu0 0
      %1208 = vmatpush1.bf16.xpose.msra.mxu0 0
      %1209 = vmatprep.subr.bf16.mxu0 0
      %1210 = vmatpush1.bf16.xpose.msra.mxu0 0
      %1211 = vmatprep.subr.bf16.mxu0 0
      %1212 = vmatpush1.bf16.xpose.msra.mxu0 0
      %1213 = vmatprep.subr.bf16.mxu0 0
      %1214 = vmatpush1.bf16.xpose.msra.mxu0 0
      %1215 = vmatprep.subr.bf16.mxu0 0
      %1216 = vmatpush1.bf16.xpose.msra.mxu0 0
      %1217 = vmatprep.subr.bf16.mxu0 0
      %1218 = vmatpush1.bf16.xpose.msra.mxu0 0
      %1219 = vmatprep.mubr.bf16.mxu0 0
      %1220 = vmatmul.mubr.bf16.gmra.mrb[0].mxu0 %v690
      %v1221 = vpop.f32.mrb[0].mxu0
      %v1222 = vadd.f32 0.0, %v1221
      %v1223 = vpop.f32.mrb[0].mxu0
      %v1224 = vpop.f32.mrb[0].mxu0
      %v1225 = vpop.f32.mrb[0].mxu0
      %1226 = vdwg.mxu0
      %v1227 = vlaneseq
      %v1228 = vshrl.u32 %v1227, 7
      %vm1229 = vcmp.le.s32.totalorder %v824, %v1228
      %v1230 = vsel %vm1229, 0.0, -1e+30
      %1232 = vrot.lane.b32.xlu0 %v1222, 120
      %v1233 = vpop.permute.xlu0 %1232
      %1235 = vrot.lane.b32.xlu0 %v1222, 8
      %v1236 = vpop.permute.xlu0 %1235
      %v1238 = vsel %vm933, %v1233, %v1236
      %v1239 = vmul.f32 %v1222, %v673
      %v1240 = vmul.f32 %v1238, %v674
      %v1241 = vadd.f32 %v1239, %v1240
      %1242 = vrot.lane.b32.xlu0 %v1222, 104
      %v1243 = vpop.permute.xlu0 %1242
      %v1245 = vsel %vm933, %v1243, %v1233
      %1247 = vrot.lane.b32.xlu0 %v673, 16
      %v1248 = vpop.permute.xlu0 %1247
      %v1250 = vmul.f32 %v1222, %v1248
      %v1251 = vmul.f32 %v1245, %v674
      %1253 = vrot.lane.b32.xlu0 %v1251, 16
      %v1254 = vpop.permute.xlu0 %1253
      %v1256 = vadd.f32 %v1250, %v1254
      %1258 = vrot.lane.b32.xlu0 %v1256, 112
      %v1259 = vpop.permute.xlu0 %1258
      %1261 = vrot.lane.b32.xlu0 %v1222, 88
      %v1262 = vpop.permute.xlu0 %1261
      %v1264 = vsel %vm933, %v1262, %v1243
      %1265 = vrot.lane.b32.xlu0 %v673, 32
      %v1266 = vpop.permute.xlu0 %1265
      %v1268 = vmul.f32 %v1222, %v1266
      %v1269 = vmul.f32 %v1264, %v674
      %1271 = vrot.lane.b32.xlu0 %v1269, 32
      %v1272 = vpop.permute.xlu0 %1271
      %v1274 = vadd.f32 %v1268, %v1272
      %1275 = vrot.lane.b32.xlu0 %v1222, 72
      %v1276 = vpop.permute.xlu0 %1275
      %v1278 = vsel %vm933, %v1276, %v1262
      %1279 = vrot.lane.b32.xlu0 %v673, 48
      %v1280 = vpop.permute.xlu0 %1279
      %v1282 = vmul.f32 %v1222, %v1280
      %v1283 = vmul.f32 %v1278, %v674
      %1285 = vrot.lane.b32.xlu0 %v1283, 48
      %v1286 = vpop.permute.xlu0 %1285
      %v1288 = vadd.f32 %v1282, %v1286
      %1290 = vrot.lane.b32.xlu0 %v1288, 112
      %v1291 = vpop.permute.xlu0 %1290
      %1293 = vrot.lane.b32.xlu0 %v1222, 112
      %v1294 = vpop.permute.xlu0 %1293
      %v1296 = vpack.c.bf16 %v1241, %v1241
      %v1297 = vpack.c.bf16 %v1259, %v1259
      %v1298 = vpack.c.bf16 %v1274, %v1274
      %v1299 = vpack.c.bf16 %v1291, %v1291
      %1301 = vrot.lane.b32.xlu0 %v1298, 96
      %v1302 = vpop.permute.xlu0 %1301
      %v1304 = vsel %vm840, %v1296, 0
      %v1307 = vsel %vm840, %v1302, 0
      %1309 = vmatprep.subr.bf16.mxu0 0
      %1310 = vmatpush1.bf16.xpose.msra.mxu0 %v1307
      %1311 = vmatprep.subr.bf16.mxu0 0
      %1312 = vmatpush1.bf16.xpose.msra.mxu0 0
      %1313 = vmatprep.subr.bf16.mxu0 0
      %1314 = vmatpush1.bf16.xpose.msra.mxu0 0
      %1315 = vmatprep.subr.bf16.mxu0 0
      %1316 = vmatpush1.bf16.xpose.msra.mxu0 0
      %1317 = vmatprep.subr.bf16.mxu0 0
      %1318 = vmatpush1.bf16.xpose.msra.mxu0 0
      %1319 = vmatprep.subr.bf16.mxu0 0
      %1320 = vmatpush1.bf16.xpose.msra.mxu0 0
      %1321 = vmatprep.subr.bf16.mxu0 0
      %1322 = vmatpush1.bf16.xpose.msra.mxu0 0
      %1323 = vmatprep.subr.bf16.mxu0 0
      %1324 = vmatpush1.bf16.xpose.msra.mxu0 0
      %1325 = vmatprep.subr.bf16.mxu0 0
      %1326 = vmatpush1.bf16.xpose.msra.mxu0 0
      %1327 = vmatprep.subr.bf16.mxu0 0
      %1328 = vmatpush1.bf16.xpose.msra.mxu0 0
      %1329 = vmatprep.subr.bf16.mxu0 0
      %1330 = vmatpush1.bf16.xpose.msra.mxu0 0
      %1331 = vmatprep.subr.bf16.mxu0 0
      %1332 = vmatpush1.bf16.xpose.msra.mxu0 0
      %1333 = vmatprep.subr.bf16.mxu0 0
      %1334 = vmatpush1.bf16.xpose.msra.mxu0 0
      %1335 = vmatprep.subr.bf16.mxu0 0
      %1336 = vmatpush1.bf16.xpose.msra.mxu0 0
      %1337 = vmatprep.subr.bf16.mxu0 0
      %1338 = vmatpush1.bf16.xpose.msra.mxu0 0
      %1339 = vmatprep.subr.bf16.mxu0 0
      %1340 = vmatpush1.bf16.xpose.msra.mxu0 0
      %1341 = vmatprep.mubr.bf16.mxu0 0
      %1342 = vmatmul.mubr.bf16.gmra.mrb[0].mxu0 %v1304
      %v1343 = vpop.f32.mrb[0].mxu0
      %v1344 = vadd.f32 %v1230, %v1343
      %v1345 = vpop.f32.mrb[0].mxu0
      %v1346 = vpop.f32.mrb[0].mxu0
      %v1347 = vpop.f32.mrb[0].mxu0
      %1348 = vdwg.mxu0
      %1350 = vrot.lane.b32.xlu0 %v1299, 96
      %v1351 = vpop.permute.xlu0 %1350
      %v1353 = vsel %vm840, %v1297, 0
      %v1356 = vsel %vm840, %v1351, 0
      %1358 = vmatprep.subr.bf16.mxu0 0
      %1359 = vmatpush1.bf16.xpose.msra.mxu0 %v1356
      %1360 = vmatprep.subr.bf16.mxu0 0
      %1361 = vmatpush1.bf16.xpose.msra.mxu0 0
      %1362 = vmatprep.subr.bf16.mxu0 0
      %1363 = vmatpush1.bf16.xpose.msra.mxu0 0
      %1364 = vmatprep.subr.bf16.mxu0 0
      %1365 = vmatpush1.bf16.xpose.msra.mxu0 0
      %1366 = vmatprep.subr.bf16.mxu0 0
      %1367 = vmatpush1.bf16.xpose.msra.mxu0 0
      %1368 = vmatprep.subr.bf16.mxu0 0
      %1369 = vmatpush1.bf16.xpose.msra.mxu0 0
      %1370 = vmatprep.subr.bf16.mxu0 0
      %1371 = vmatpush1.bf16.xpose.msra.mxu0 0
      %1372 = vmatprep.subr.bf16.mxu0 0
      %1373 = vmatpush1.bf16.xpose.msra.mxu0 0
      %1374 = vmatprep.subr.bf16.mxu0 0
      %1375 = vmatpush1.bf16.xpose.msra.mxu0 0
      %1376 = vmatprep.subr.bf16.mxu0 0
      %1377 = vmatpush1.bf16.xpose.msra.mxu0 0
      %1378 = vmatprep.subr.bf16.mxu0 0
      %1379 = vmatpush1.bf16.xpose.msra.mxu0 0
      %1380 = vmatprep.subr.bf16.mxu0 0
      %1381 = vmatpush1.bf16.xpose.msra.mxu0 0
      %1382 = vmatprep.subr.bf16.mxu0 0
      %1383 = vmatpush1.bf16.xpose.msra.mxu0 0
      %1384 = vmatprep.subr.bf16.mxu0 0
      %1385 = vmatpush1.bf16.xpose.msra.mxu0 0
      %1386 = vmatprep.subr.bf16.mxu0 0
      %1387 = vmatpush1.bf16.xpose.msra.mxu0 0
      %1388 = vmatprep.subr.bf16.mxu0 0
      %1389 = vmatpush1.bf16.xpose.msra.mxu0 0
      %1390 = vmatprep.mubr.bf16.mxu0 0
      %1391 = vmatmul.mubr.bf16.gmra.mrb[0].mxu0 %v1353
      %v1392 = vpop.f32.mrb[0].mxu0
      %v1393 = vadd.f32 %v1230, %v1392
      %v1394 = vpop.f32.mrb[0].mxu0
      %v1395 = vpop.f32.mrb[0].mxu0
      %v1396 = vpop.f32.mrb[0].mxu0
      %1397 = vdwg.mxu0
      %v1398 = vsel %vm933, %v1344, -inf
      %1399 = vmax.xlane.f32.xlu0 %v1398
      %v1400 = vpop.xlane.xlu0 %1399
      %v1401 = vsel %vm933, %v1393, -inf
      %1402 = vmax.xlane.f32.xlu0 %v1401
      %v1403 = vpop.xlane.xlu0 %1402
      %v1404 = vsub.f32 %v1344, %v1400
      %v1405 = vsub.f32 %v1393, %v1403
      %v1406 = vmul.f32 %v1404, 1.442695
      %v1407 = vpow.pop %v1406
      %v1408 = vmul.f32 %v1405, 1.442695
      %v1409 = vpow.pop %v1408
      %v1410 = vsel %vm933, %v1407, 0.0
      %1411 = vadd.xlane.f32.xlu0 %v1410
      %v1412 = vpop.xlane.xlu0 %1411
      %v1413 = vsel %vm933, %v1409, 0.0
      %1414 = vadd.xlane.f32.xlu0 %v1413
      %v1415 = vpop.xlane.xlu0 %1414
      %v1416 = vrcp.pop %v1412
      %v1417 = vrcp.pop %v1415
      %v1418 = vmul.f32 %v1407, %v1416
      %v1419 = vmul.f32 %v1409, %v1417
      %v1420 = vpack.c.bf16 %v1418, %v1418
      %v1421 = vpack.c.bf16 %v1419, %v1419
      %v1422 = vpack.c.bf16 %v1222, %v1222
      %v1423 = vpack.c.bf16 %v1294, %v1294
      %1425 = vrot.lane.b32.xlu0 %v1422, 64
      %v1426 = vpop.permute.xlu0 %1425
      %v1428 = vsel %vm933, %v1420, 0
      %v1431 = vsel %vm964, %v1426, 0
      %1433 = vmatprep.subr.bf16.mxu0 0
      %1434 = vmatpush1.bf16.msra.mxu0 %v1431
      %1435 = vmatprep.subr.bf16.mxu0 0
      %1436 = vmatpush1.bf16.msra.mxu0 0
      %1437 = vmatprep.subr.bf16.mxu0 0
      %1438 = vmatpush1.bf16.msra.mxu0 0
      %1439 = vmatprep.subr.bf16.mxu0 0
      %1440 = vmatpush1.bf16.msra.mxu0 0
      %1441 = vmatprep.subr.bf16.mxu0 0
      %1442 = vmatpush1.bf16.msra.mxu0 0
      %1443 = vmatprep.subr.bf16.mxu0 0
      %1444 = vmatpush1.bf16.msra.mxu0 0
      %1445 = vmatprep.subr.bf16.mxu0 0
      %1446 = vmatpush1.bf16.msra.mxu0 0
      %1447 = vmatprep.subr.bf16.mxu0 0
      %1448 = vmatpush1.bf16.msra.mxu0 0
      %1449 = vmatprep.subr.bf16.mxu0 0
      %1450 = vmatpush1.bf16.msra.mxu0 0
      %1451 = vmatprep.subr.bf16.mxu0 0
      %1452 = vmatpush1.bf16.msra.mxu0 0
      %1453 = vmatprep.subr.bf16.mxu0 0
      %1454 = vmatpush1.bf16.msra.mxu0 0
      %1455 = vmatprep.subr.bf16.mxu0 0
      %1456 = vmatpush1.bf16.msra.mxu0 0
      %1457 = vmatprep.subr.bf16.mxu0 0
      %1458 = vmatpush1.bf16.msra.mxu0 0
      %1459 = vmatprep.subr.bf16.mxu0 0
      %1460 = vmatpush1.bf16.msra.mxu0 0
      %1461 = vmatprep.subr.bf16.mxu0 0
      %1462 = vmatpush1.bf16.msra.mxu0 0
      %1463 = vmatprep.subr.bf16.mxu0 0
      %1464 = vmatpush1.bf16.msra.mxu0 0
      %1465 = vmatprep.mubr.bf16.mxu0 0
      %1466 = vmatmul.mubr.bf16.gmra.mrb[0].mxu0 %v1428
      %v1467 = vpop.f32.mrb[0].mxu0
      %v1468 = vadd.f32 0.0, %v1467
      %v1469 = vpop.f32.mrb[0].mxu0
      %v1470 = vpop.f32.mrb[0].mxu0
      %v1471 = vpop.f32.mrb[0].mxu0
      %1472 = vdwg.mxu0
      %1474 = vrot.lane.b32.xlu0 %v1423, 64
      %v1475 = vpop.permute.xlu0 %1474
      %v1477 = vsel %vm933, %v1421, 0
      %v1480 = vsel %vm964, %v1475, 0
      %1482 = vmatprep.subr.bf16.mxu0 0
      %1483 = vmatpush1.bf16.msra.mxu0 %v1480
      %1484 = vmatprep.subr.bf16.mxu0 0
      %1485 = vmatpush1.bf16.msra.mxu0 0
      %1486 = vmatprep.subr.bf16.mxu0 0
      %1487 = vmatpush1.bf16.msra.mxu0 0
      %1488 = vmatprep.subr.bf16.mxu0 0
      %1489 = vmatpush1.bf16.msra.mxu0 0
      %1490 = vmatprep.subr.bf16.mxu0 0
      %1491 = vmatpush1.bf16.msra.mxu0 0
      %1492 = vmatprep.subr.bf16.mxu0 0
      %1493 = vmatpush1.bf16.msra.mxu0 0
      %1494 = vmatprep.subr.bf16.mxu0 0
      %1495 = vmatpush1.bf16.msra.mxu0 0
      %1496 = vmatprep.subr.bf16.mxu0 0
      %1497 = vmatpush1.bf16.msra.mxu0 0
      %1498 = vmatprep.subr.bf16.mxu0 0
      %1499 = vmatpush1.bf16.msra.mxu0 0
      %1500 = vmatprep.subr.bf16.mxu0 0
      %1501 = vmatpush1.bf16.msra.mxu0 0
      %1502 = vmatprep.subr.bf16.mxu0 0
      %1503 = vmatpush1.bf16.msra.mxu0 0
      %1504 = vmatprep.subr.bf16.mxu0 0
      %1505 = vmatpush1.bf16.msra.mxu0 0
      %1506 = vmatprep.subr.bf16.mxu0 0
      %1507 = vmatpush1.bf16.msra.mxu0 0
      %1508 = vmatprep.subr.bf16.mxu0 0
      %1509 = vmatpush1.bf16.msra.mxu0 0
      %1510 = vmatprep.subr.bf16.mxu0 0
      %1511 = vmatpush1.bf16.msra.mxu0 0
      %1512 = vmatprep.subr.bf16.mxu0 0
      %1513 = vmatpush1.bf16.msra.mxu0 0
      %1514 = vmatprep.mubr.bf16.mxu0 0
      %1515 = vmatmul.mubr.bf16.gmra.mrb[0].mxu0 %v1477
      %v1516 = vpop.f32.mrb[0].mxu0
      %v1517 = vadd.f32 0.0, %v1516
      %v1518 = vpop.f32.mrb[0].mxu0
      %v1519 = vpop.f32.mrb[0].mxu0
      %v1520 = vpop.f32.mrb[0].mxu0
      %1521 = vdwg.mxu0
      %1523 = vrot.lane.b32.xlu0 %v1517, 16
      %v1524 = vpop.permute.xlu0 %1523
      %v1526 = vsel %vm840, %v1468, %v1524
      %v1527 = vpack.c.bf16 %v1526, %v1526
      %v1528 = vld [vmem:[%s622] sm:$0xf]
      %v1529 = vld [vmem:[%s622 + $0x4] sm:$0xf]
      %v1530 = vld [vmem:[%s622 + $0x8] sm:$0xf]
      %v1531 = vld [vmem:[%s622 + $0xc] sm:$0xf]
      %v1536 = vunpack.c.l.b16 %v1528
      %v1537 = vunpack.c.l.b16 %v1529
      %v1538 = vunpack.c.l.b16 %v1530
      %v1539 = vunpack.c.l.b16 %v1531
      %v1540 = vpack.c.b16 %v1537, %v1536
      %v1541 = vpack.c.b16 %v1539, %v1538
      %v1543 = vsel %vm650, %v1527, 0
      %v1546 = vsel %vm650, %v1540, 0
      %v1549 = vsel %vm650, %v1541, 0
      %1551 = vmatprep.subr.bf16.mxu0 0
      %1552 = vmatpush1.bf16.xpose.msra.mxu0 %v1546
      %1553 = vmatprep.subr.bf16.mxu0 0
      %1554 = vmatpush1.bf16.xpose.msra.mxu0 %v1549
      %1555 = vmatprep.subr.bf16.mxu0 0
      %1556 = vmatpush1.bf16.xpose.msra.mxu0 0
      %1557 = vmatprep.subr.bf16.mxu0 0
      %1558 = vmatpush1.bf16.xpose.msra.mxu0 0
      %1559 = vmatprep.subr.bf16.mxu0 0
      %1560 = vmatpush1.bf16.xpose.msra.mxu0 0
      %1561 = vmatprep.subr.bf16.mxu0 0
      %1562 = vmatpush1.bf16.xpose.msra.mxu0 0
      %1563 = vmatprep.subr.bf16.mxu0 0
      %1564 = vmatpush1.bf16.xpose.msra.mxu0 0
      %1565 = vmatprep.subr.bf16.mxu0 0
      %1566 = vmatpush1.bf16.xpose.msra.mxu0 0
      %1567 = vmatprep.subr.bf16.mxu0 0
      %1568 = vmatpush1.bf16.xpose.msra.mxu0 0
      %1569 = vmatprep.subr.bf16.mxu0 0
      %1570 = vmatpush1.bf16.xpose.msra.mxu0 0
      %1571 = vmatprep.subr.bf16.mxu0 0
      %1572 = vmatpush1.bf16.xpose.msra.mxu0 0
      %1573 = vmatprep.subr.bf16.mxu0 0
      %1574 = vmatpush1.bf16.xpose.msra.mxu0 0
      %1575 = vmatprep.subr.bf16.mxu0 0
      %1576 = vmatpush1.bf16.xpose.msra.mxu0 0
      %1577 = vmatprep.subr.bf16.mxu0 0
      %1578 = vmatpush1.bf16.xpose.msra.mxu0 0
      %1579 = vmatprep.subr.bf16.mxu0 0
      %1580 = vmatpush1.bf16.xpose.msra.mxu0 0
      %1581 = vmatprep.subr.bf16.mxu0 0
      %1582 = vmatpush1.bf16.xpose.msra.mxu0 0
      %1583 = vmatprep.mubr.bf16.mxu0 0
      %1584 = vmatmul.mubr.bf16.gmra.mrb[0].mxu0 %v1543
      %v1585 = vpop.f32.mrb[0].mxu0
      %v1586 = vadd.f32 0.0, %v1585
      %v1587 = vpop.f32.mrb[0].mxu0
      %v1588 = vpop.f32.mrb[0].mxu0
      %v1589 = vpop.f32.mrb[0].mxu0
      %1590 = vdwg.mxu0
      %v1591 = vadd.f32 %v1126, %v1586
      %v1592 = vld [vmem:[%s625] sm:$0x1]
      %v1593 = vsel %vm650, %v1591, 0.0
      %1594 = vadd.xlane.f32.xlu0 %v1593
      %v1595 = vpop.xlane.xlu0 %1594
      %v1596 = vmul.f32 %v1595, %v654
      %v1597 = vsub.f32 %v1591, %v1596
      %v1598 = vmul.f32 %v1597, %v1597
      %v1599 = vsel %vm650, %v1598, 0.0
      %1600 = vadd.xlane.f32.xlu0 %v1599
      %v1601 = vpop.xlane.xlu0 %1600
      %v1602 = vmul.f32 %v1601, %v654
      %v1603 = vadd.f32 %v1602, 1e-05
      %v1604 = vrsqrt.pop %v1603
      %v1605 = vmul.f32 %v1597, %v1604
      %v1607 = vlaneseq
      %v1608 = vshrl.u32 %v1607, 7
      %v1609 = vsub.s32 0, %v1608
      %v1610 = vrot.slane %v1592, %v1609
      %v1612 = vmul.f32 %v1605, %v1610
      %v1613 = vpack.c.bf16 %v1612, %v1612
      %v1614 = vld [vmem:[%s630] sm:$0xf]
      %v1615 = vld [vmem:[%s630 + $0x4] sm:$0xf]
      %v1616 = vld [vmem:[%s630 + $0x8] sm:$0xf]
      %v1617 = vld [vmem:[%s630 + $0xc] sm:$0xf]
      %v1618 = vld [vmem:[%s630 + $0x10] sm:$0xf]
      %v1619 = vld [vmem:[%s630 + $0x14] sm:$0xf]
      %v1620 = vld [vmem:[%s630 + $0x18] sm:$0xf]
      %v1621 = vld [vmem:[%s630 + $0x1c] sm:$0xf]
      %v1622 = vld [vmem:[%s630 + $0x20] sm:$0xf]
      %v1623 = vld [vmem:[%s630 + $0x24] sm:$0xf]
      %v1624 = vld [vmem:[%s630 + $0x28] sm:$0xf]
      %v1625 = vld [vmem:[%s630 + $0x2c] sm:$0xf]
      %v1626 = vld [vmem:[%s630 + $0x30] sm:$0xf]
      %v1627 = vld [vmem:[%s630 + $0x34] sm:$0xf]
      %v1628 = vld [vmem:[%s630 + $0x38] sm:$0xf]
      %v1629 = vld [vmem:[%s630 + $0x3c] sm:$0xf]
      %v1646 = vunpack.c.l.b16 %v1614
      %v1647 = vunpack.c.l.b16 %v1615
      %v1648 = vunpack.c.l.b16 %v1616
      %v1649 = vunpack.c.l.b16 %v1617
      %v1650 = vunpack.c.l.b16 %v1618
      %v1651 = vunpack.c.l.b16 %v1619
      %v1652 = vunpack.c.l.b16 %v1620
      %v1653 = vunpack.c.l.b16 %v1621
      %v1654 = vunpack.c.l.b16 %v1622
      %v1655 = vunpack.c.l.b16 %v1623
      %v1656 = vunpack.c.l.b16 %v1624
      %v1657 = vunpack.c.l.b16 %v1625
      %v1658 = vunpack.c.l.b16 %v1626
      %v1659 = vunpack.c.l.b16 %v1627
      %v1660 = vunpack.c.l.b16 %v1628
      %v1661 = vunpack.c.l.b16 %v1629
      %v1662 = vpack.c.b16 %v1647, %v1646
      %v1663 = vpack.c.b16 %v1649, %v1648
      %v1664 = vpack.c.b16 %v1651, %v1650
      %v1665 = vpack.c.b16 %v1653, %v1652
      %v1666 = vpack.c.b16 %v1655, %v1654
      %v1667 = vpack.c.b16 %v1657, %v1656
      %v1668 = vpack.c.b16 %v1659, %v1658
      %v1669 = vpack.c.b16 %v1661, %v1660
      %v1671 = vsel %vm650, %v1613, 0
      %v1674 = vsel %vm650, %v1662, 0
      %v1677 = vsel %vm650, %v1663, 0
      %v1680 = vsel %vm650, %v1664, 0
      %v1683 = vsel %vm650, %v1665, 0
      %v1686 = vsel %vm650, %v1666, 0
      %v1689 = vsel %vm650, %v1667, 0
      %v1692 = vsel %vm650, %v1668, 0
      %v1695 = vsel %vm650, %v1669, 0
      %1697 = vmatprep.subr.bf16.mxu0 0
      %1698 = vmatpush1.bf16.xpose.msra.mxu0 %v1674
      %1699 = vmatprep.subr.bf16.mxu0 0
      %1700 = vmatpush1.bf16.xpose.msra.mxu0 %v1677
      %1701 = vmatprep.subr.bf16.mxu0 0
      %1702 = vmatpush1.bf16.xpose.msra.mxu0 %v1680
      %1703 = vmatprep.subr.bf16.mxu0 0
      %1704 = vmatpush1.bf16.xpose.msra.mxu0 %v1683
      %1705 = vmatprep.subr.bf16.mxu0 0
      %1706 = vmatpush1.bf16.xpose.msra.mxu0 %v1686
      %1707 = vmatprep.subr.bf16.mxu0 0
      %1708 = vmatpush1.bf16.xpose.msra.mxu0 %v1689
      %1709 = vmatprep.subr.bf16.mxu0 0
      %1710 = vmatpush1.bf16.xpose.msra.mxu0 %v1692
      %1711 = vmatprep.subr.bf16.mxu0 0
      %1712 = vmatpush1.bf16.xpose.msra.mxu0 %v1695
      %1713 = vmatprep.subr.bf16.mxu0 0
      %1714 = vmatpush1.bf16.xpose.msra.mxu0 0
      %1715 = vmatprep.subr.bf16.mxu0 0
      %1716 = vmatpush1.bf16.xpose.msra.mxu0 0
      %1717 = vmatprep.subr.bf16.mxu0 0
      %1718 = vmatpush1.bf16.xpose.msra.mxu0 0
      %1719 = vmatprep.subr.bf16.mxu0 0
      %1720 = vmatpush1.bf16.xpose.msra.mxu0 0
      %1721 = vmatprep.subr.bf16.mxu0 0
      %1722 = vmatpush1.bf16.xpose.msra.mxu0 0
      %1723 = vmatprep.subr.bf16.mxu0 0
      %1724 = vmatpush1.bf16.xpose.msra.mxu0 0
      %1725 = vmatprep.subr.bf16.mxu0 0
      %1726 = vmatpush1.bf16.xpose.msra.mxu0 0
      %1727 = vmatprep.subr.bf16.mxu0 0
      %1728 = vmatpush1.bf16.xpose.msra.mxu0 0
      %1729 = vmatprep.mubr.bf16.mxu0 0
      %1730 = vmatmul.mubr.bf16.gmra.mrb[0].mxu0 %v1671
      %v1731 = vpop.f32.mrb[0].mxu0
      %v1732 = vadd.f32 0.0, %v1731
      %v1733 = vpop.f32.mrb[0].mxu0
      %v1734 = vpop.f32.mrb[0].mxu0
      %v1735 = vpop.f32.mrb[0].mxu0
      %1736 = vdwg.mxu0
      %v1737 = vmul.f32 %v1732, 0.5
      %v1738 = vmul.f32 %v1732, 0.70710677
      %v1739 = verf.f32.pop %v1738
      %v1740 = vadd.f32 %v1739, 1.0
      %v1741 = vmul.f32 %v1737, %v1740
      %v1742 = vpack.c.bf16 %v1741, %v1741
      %v1743 = vld [vmem:[%s635] sm:$0xf]
      %v1744 = vld [vmem:[%s635 + $0x4] sm:$0xf]
      %v1745 = vld [vmem:[%s635 + $0x8] sm:$0xf]
      %v1746 = vld [vmem:[%s635 + $0xc] sm:$0xf]
      %v1751 = vunpack.c.l.b16 %v1743
      %v1752 = vunpack.c.l.b16 %v1744
      %v1753 = vunpack.c.l.b16 %v1745
      %v1754 = vunpack.c.l.b16 %v1746
      %v1755 = vpack.c.b16 %v1752, %v1751
      %v1756 = vpack.c.b16 %v1754, %v1753
      %1759 = vmatprep.subr.bf16.mxu0 0
      %1760 = vmatpush1.bf16.xpose.msra.mxu0 %v1755
      %1761 = vmatprep.subr.bf16.mxu0 0
      %1762 = vmatpush1.bf16.xpose.msra.mxu0 %v1756
      %1763 = vmatprep.subr.bf16.mxu0 0
      %1764 = vmatpush1.bf16.xpose.msra.mxu0 0
      %1765 = vmatprep.subr.bf16.mxu0 0
      %1766 = vmatpush1.bf16.xpose.msra.mxu0 0
      %1767 = vmatprep.subr.bf16.mxu0 0
      %1768 = vmatpush1.bf16.xpose.msra.mxu0 0
      %1769 = vmatprep.subr.bf16.mxu0 0
      %1770 = vmatpush1.bf16.xpose.msra.mxu0 0
      %1771 = vmatprep.subr.bf16.mxu0 0
      %1772 = vmatpush1.bf16.xpose.msra.mxu0 0
      %1773 = vmatprep.subr.bf16.mxu0 0
      %1774 = vmatpush1.bf16.xpose.msra.mxu0 0
      %1775 = vmatprep.subr.bf16.mxu0 0
      %1776 = vmatpush1.bf16.xpose.msra.mxu0 0
      %1777 = vmatprep.subr.bf16.mxu0 0
      %1778 = vmatpush1.bf16.xpose.msra.mxu0 0
      %1779 = vmatprep.subr.bf16.mxu0 0
      %1780 = vmatpush1.bf16.xpose.msra.mxu0 0
      %1781 = vmatprep.subr.bf16.mxu0 0
      %1782 = vmatpush1.bf16.xpose.msra.mxu0 0
      %1783 = vmatprep.subr.bf16.mxu0 0
      %1784 = vmatpush1.bf16.xpose.msra.mxu0 0
      %1785 = vmatprep.subr.bf16.mxu0 0
      %1786 = vmatpush1.bf16.xpose.msra.mxu0 0
      %1787 = vmatprep.subr.bf16.mxu0 0
      %1788 = vmatpush1.bf16.xpose.msra.mxu0 0
      %1789 = vmatprep.subr.bf16.mxu0 0
      %1790 = vmatpush1.bf16.xpose.msra.mxu0 0
      %1791 = vmatprep.mubr.bf16.mxu0 0
      %1792 = vmatmul.mubr.bf16.gmra.mrb[0].mxu0 %v1742
      %v1793 = vpop.f32.mrb[0].mxu0
      %v1794 = vadd.f32 0.0, %v1793
      %v1795 = vpop.f32.mrb[0].mxu0
      %v1796 = vpop.f32.mrb[0].mxu0
      %v1797 = vpop.f32.mrb[0].mxu0
      %1798 = vdwg.mxu0
      %v1799 = vadd.f32 %v1591, %v1794
      %1800 = vst.msk [vmem:[#allocation2] sm:$0xff] %vm650, %v1799
      %p1801 = scmp.eq.s32.totalorder %s36, 1
      // Predicated region
      $region77: #{ctc_attention_decoder_forward.2} parent=71 // pred_check
        %p1802 = pneg %p1801
      $region78: #{ctc_attention_decoder_forward.2} parent=71 // pred_check_branch
        %1804 = sbr.rel (%p1802) target = $region80
      $region79: #{ctc_attention_decoder_forward.2} parent=71 // pred_region
        %1805 = vst.msk [vmem:[%s639] sm:$0xff] %vm650, %v1799
      $region80: #{ctc_attention_decoder_forward.2} parent=71 // pred_fallthru
        _
      %p1806 = scmp.lt.s32.totalorder %s35, 1
      %s1807 = scalar_select %p1806, %s35, 1
      %s1808 = smul.addr %s1807, 8
      %s1809 = scalar_lea.vmem %s14, %s1808
      // Predicated region
      $region81: #{ctc_attention_decoder_forward.2} parent=71 // pred_check
        %p1810 = pneg %p389
      $region82: #{ctc_attention_decoder_forward.2} parent=71 // pred_check_branch
        %1812 = sbr.rel (%p1810) target = $region84
      $region83: #{ctc_attention_decoder_forward.2} parent=71 // pred_region
        _
      $region84: #{ctc_attention_decoder_forward.2} parent=71 // pred_fallthru
        _
    $region72: #{ctc_attention_decoder_forward.2} parent=5 // pred_fallthru
      _
    %p1813 = scmp.le.s32.totalorder 2, %s26
    // Predicated region
    $region85: #{ctc_attention_decoder_forward.2} parent=5 // pred_check
      %p1814 = pneg %p1813
    $region86: #{ctc_attention_decoder_forward.2} parent=5 // pred_check_branch
      %1816 = sbr.rel (%p1814) target = $region88
    $region87: #{ctc_attention_decoder_forward.2} parent=5 // pred_region
      %s1817 = ssub.s32 %s26, 2
      // Predicated region
      $region89: #{ctc_attention_decoder_forward.2} parent=87 // pred_check
        %p1818 = pneg %p395
      $region90: #{ctc_attention_decoder_forward.2} parent=87 // pred_check_branch
        %1820 = sbr.rel (%p1818) target = $region92
      $region91: #{ctc_attention_decoder_forward.2} parent=87 // pred_region
        %p1821 = scmp.lt.s32.totalorder %s37, 1
        %s1822 = scalar_select %p1821, %s37, 1
        %s1823 = smul.addr %s1822, 8
        %s1824 = scalar_lea.vmem %s14, %s1823
      $region92: #{ctc_attention_decoder_forward.2} parent=87 // pred_fallthru
        _
    $region88: #{ctc_attention_decoder_forward.2} parent=5 // pred_fallthru
      _
  $region6: #{ctc_attention_decoder_forward.2} parent=0 // loop_footer
    %s30 = sadd.s32 1, %s26
  $region7: #{ctc_attention_decoder_forward.2} parent=0 // loop_footer_branch
    %25 = sbr.rel target = $region3
  $region8: #{ctc_attention_decoder_forward.2} parent=0 // loop_exit
    _

</llo_original>
